<compile_context>
chip_gen: v7x
topology: tpu7x:2x2x1
jax: 0.10.0
libtpu: 0.0.40
codegen_flags: <defaults>
</compile_context>

<pallas_src>
import jax
import jax.numpy as jnp
from jax import lax
from jax.experimental import pallas as pl
from jax.experimental.pallas import tpu as pltpu


def dcma_kernel(x_ref, y_ref,
                wk1_ref, bk1_ref, wk2_ref, bk2_ref,
                wv1a_ref, bv1a_ref, wv2a_ref, bv2a_ref,
                wl1t_ref, bl1c_ref, wl2t_ref, bl2c_ref,
                gamma_ref,
                out_x_ref, out_y_ref):
    f32 = jnp.float32
    bf16 = jnp.bfloat16
    C = x_ref.shape[1]

    x32 = x_ref[0]                        # (C, N) f32 -- kept f32 for the residual
    y32 = y_ref[0]
    xb = x32.astype(bf16)
    yb = y32.astype(bf16)

    # Fused key convs (shared conv pre-folded in the wrapper): (Ck, N)
    k1 = jnp.dot(wk1_ref[...], xb, preferred_element_type=f32) + bk1_ref[...]
    k2 = jnp.dot(wk2_ref[...], yb, preferred_element_type=f32) + bk2_ref[...]
    k1b = k1.astype(bf16)
    k2b = k2.astype(bf16)

    g1 = gamma_ref[0]
    g2 = gamma_ref[1]
    tn_dims = (((0,), (0,)), ((), ()))    # contract the leading (channel) axes

    # ---------------- branch 1: attention of y on x  ->  out_x ----------------
    # Transposed energy: e1T[j, i] = sum_c k1[c, i] * (k2 @ Wl1^T)[c, j] + bl1[j]
    t1 = jnp.dot(k2b, wl1t_ref[...], preferred_element_type=f32)           # (Ck, N)
    e1t = lax.dot_general(t1.astype(bf16), k1b, tn_dims,
                          preferred_element_type=f32) + bl1c_ref[...]      # (N, N)
    # Unnormalized softmax numerators; cast to bf16 in the same expression so
    # no separate f32 probability tile is materialized.
    p1 = jnp.exp(e1t - jnp.max(e1t, axis=0, keepdims=True)).astype(bf16)
    # Value conv carries a built-in ones row (wrapper augmentation), so the
    # softmax denominator rides along as the last row of u1.
    v1 = jnp.dot(wv2a_ref[...], yb, preferred_element_type=f32) + bv2a_ref[...]
    u1 = jnp.dot(v1.astype(bf16), p1, preferred_element_type=f32)          # (C+1, N)
    scale1 = g1 * pl.reciprocal(u1[C:C + 1, :], approx=True)               # (1, N)
    out_x_ref[0] = u1[:C, :] * scale1 + x32

    # ---------------- branch 2: attention of x on y  ->  out_y ----------------
    t2 = jnp.dot(k1b, wl2t_ref[...], preferred_element_type=f32)           # (Ck, N)
    e2t = lax.dot_general(t2.astype(bf16), k2b, tn_dims,
                          preferred_element_type=f32) + bl2c_ref[...]      # (N, N)
    p2 = jnp.exp(e2t - jnp.max(e2t, axis=0, keepdims=True)).astype(bf16)
    v2 = jnp.dot(wv1a_ref[...], xb, preferred_element_type=f32) + bv1a_ref[...]
    u2 = jnp.dot(v2.astype(bf16), p2, preferred_element_type=f32)          # (C+1, N)
    scale2 = g2 * pl.reciprocal(u2[C:C + 1, :], approx=True)               # (1, N)
    out_y_ref[0] = u2[:C, :] * scale2 + y32


def dcma_forward(x, y, params):
    B, C, H, W = x.shape
    N = H * W
    Ck = params["wk1"].shape[0]
    f32 = jnp.float32
    bf16 = jnp.bfloat16

    x_f = x.reshape(B, C, N).astype(f32)
    y_f = y.reshape(B, C, N).astype(f32)

    # Fold the shared key conv into the per-modality key convs (trace-time
    # algebra): Wks(Wk a + bk) + bks = (Wks Wk) a + (Wks bk + bks)
    wks = params["wks"].astype(f32)
    bks = params["bks"].astype(f32)
    wk1f = (wks @ params["wk1"].astype(f32)).astype(bf16)                  # (Ck, C)
    wk2f = (wks @ params["wk2"].astype(f32)).astype(bf16)
    bk1f = (wks @ params["bk1"].astype(f32) + bks).reshape(Ck, 1)          # (Ck, 1)
    bk2f = (wks @ params["bk2"].astype(f32) + bks).reshape(Ck, 1)

    # Augment the value convs with a ones output row so the last row of the
    # value matmul is the softmax denominator (drops the M=1 row-sum matmul).
    zrow = jnp.zeros((1, C), f32)
    one = jnp.ones((1,), f32)
    wv1a = jnp.concatenate([params["wv1"].astype(f32), zrow], 0).astype(bf16)  # (C+1, C)
    wv2a = jnp.concatenate([params["wv2"].astype(f32), zrow], 0).astype(bf16)
    bv1a = jnp.concatenate([params["bv1"].astype(f32), one]).reshape(C + 1, 1)
    bv2a = jnp.concatenate([params["bv2"].astype(f32), one]).reshape(C + 1, 1)

    # nn.Linear computes e @ W^T + b -> pre-transpose the weight once; the
    # bias enters the transposed-energy tile as an (N, 1) column.
    wl1t = params["wl1"].T.astype(bf16)                                    # (N, N)
    wl2t = params["wl2"].T.astype(bf16)
    bl1c = params["bl1"].astype(f32).reshape(N, 1)
    bl2c = params["bl2"].astype(f32).reshape(N, 1)
    gamma = jnp.stack([params["gamma1"], params["gamma2"]]).astype(f32)    # (2,) -> SMEM

    def full_spec(shape):
        return pl.BlockSpec(shape, lambda b: (0,) * len(shape))

    io_spec = pl.BlockSpec((1, C, N), lambda b: (b, 0, 0))

    in_specs = [
        io_spec, io_spec,
        full_spec((Ck, C)), full_spec((Ck, 1)),
        full_spec((Ck, C)), full_spec((Ck, 1)),
        full_spec((C + 1, C)), full_spec((C + 1, 1)),
        full_spec((C + 1, C)), full_spec((C + 1, 1)),
        full_spec((N, N)), full_spec((N, 1)),
        full_spec((N, N)), full_spec((N, 1)),
        pl.BlockSpec(memory_space=pltpu.MemorySpace.SMEM),
    ]
    out_specs = [io_spec, io_spec]
    out_shape = [jax.ShapeDtypeStruct((B, C, N), f32),
                 jax.ShapeDtypeStruct((B, C, N), f32)]

    # Explicit VMEM budget: double-buffered io blocks + (N, N) linear weights
    # + in-kernel (N, N) energy / probability intermediates, with 2x headroom.
    est = (4 * 2 * C * N * 4           # x, y, out_x, out_y blocks (2 bufs each)
           + 2 * 2 * N * N * 2         # wl1t, wl2t (2 bufs each, bf16)
           + N * N * 4 + N * N * 2     # energy (f32) + probabilities (bf16)
           + 4 * (C + 1) * N * 4)      # values / u / keys etc.
    vmem_limit = int(max(32 * 1024 * 1024, 2 * est))
    # TODO(synk): for N >= ~1024, single-buffer the (N, N) weights
    # (pipeline_mode=pl.Buffered(1)) and tile the energy rows (extra grid axis)
    # instead of holding the full (N, N) tile resident; unnecessary here.

    out_x, out_y = pl.pallas_call(
        dcma_kernel,
        grid=(B,),
        in_specs=in_specs,
        out_specs=out_specs,
        out_shape=out_shape,
        compiler_params=pltpu.CompilerParams(
            dimension_semantics=("parallel",),
            vmem_limit_bytes=vmem_limit),
    )(x_f, y_f,
      wk1f, bk1f, wk2f, bk2f,
      wv1a, bv1a, wv2a, bv2a,
      wl1t, bl1c, wl2t, bl2c, gamma)

    return out_x.reshape(B, C, H, W), out_y.reshape(B, C, H, W)


def dcma_reference(x, y, params):
    """Pure-JAX f32 reference mirroring the PyTorch forward."""
    B, C, H, W = x.shape
    N = H * W
    xf = x.reshape(B, C, N)
    yf = y.reshape(B, C, N)

    def conv1x1(w, b, a):
        return jnp.einsum("oi,bin->bon", w, a) + b[None, :, None]

    k1 = conv1x1(params["wks"], params["bks"],
                 conv1x1(params["wk1"], params["bk1"], xf))
    k2 = conv1x1(params["wks"], params["bks"],
                 conv1x1(params["wk2"], params["bk2"], yf))
    energy = jnp.einsum("bci,bcj->bij", k1, k2)                            # (B, N, N)
    e1 = jnp.einsum("bij,kj->bik", energy, params["wl1"]) + params["bl1"]
    att1 = jax.nn.softmax(e1, axis=-1)
    e2 = jnp.einsum("bij,kj->bik", jnp.swapaxes(energy, 1, 2), params["wl2"]) + params["bl2"]
    att2 = jax.nn.softmax(e2, axis=-1)

    v_y = conv1x1(params["wv2"], params["bv2"], yf)
    out_x = params["gamma1"] * jnp.einsum("bcj,bij->bci", v_y, att1) + xf
    v_x = conv1x1(params["wv1"], params["bv1"], xf)
    out_y = params["gamma2"] * jnp.einsum("bcj,bij->bci", v_x, att2) + yf
    return out_x.reshape(B, C, H, W), out_y.reshape(B, C, H, W)


def init_params(key, in_dim, size, ratio):
    """Deterministic synthetic init.

    Gains are larger than the module's xavier_normal_(gain=0.02) / gamma=0
    init so the softmax and attention paths are numerically exercised.
    """
    C = in_dim
    Ck = in_dim // ratio
    N = size * size
    ks = jax.random.split(key, 16)

    def xavier(k, shape, gain):
        fan_in, fan_out = shape[1], shape[0]
        std = gain * (2.0 / (fan_in + fan_out)) ** 0.5
        return std * jax.random.normal(k, shape, dtype=jnp.float32)

    return {
        "wk1": xavier(ks[0], (Ck, C), 0.5),
        "bk1": 0.1 * jax.random.normal(ks[1], (Ck,), dtype=jnp.float32),
        "wk2": xavier(ks[2], (Ck, C), 0.5),
        "bk2": 0.1 * jax.random.normal(ks[3], (Ck,), dtype=jnp.float32),
        "wks": xavier(ks[4], (Ck, Ck), 0.5),
        "bks": 0.1 * jax.random.normal(ks[5], (Ck,), dtype=jnp.float32),
        "wv1": xavier(ks[6], (C, C), 0.5),
        "bv1": 0.1 * jax.random.normal(ks[7], (C,), dtype=jnp.float32),
        "wv2": xavier(ks[8], (C, C), 0.5),
        "bv2": 0.1 * jax.random.normal(ks[9], (C,), dtype=jnp.float32),
        "wl1": xavier(ks[10], (N, N), 1.0),
        "bl1": 0.1 * jax.random.normal(ks[11], (N,), dtype=jnp.float32),
        "wl2": xavier(ks[12], (N, N), 1.0),
        "bl2": 0.1 * jax.random.normal(ks[13], (N,), dtype=jnp.float32),
        "gamma1": jnp.float32(0.7),
        "gamma2": jnp.float32(-1.1),
    }


if __name__ == "__main__":
    B, C, H, W = 2, 64, 16, 16        # in_dim=64, size=16, ratio=8 -> Ck=8, N=256
    ratio = 8

    key = jax.random.PRNGKey(0)
    kx, ky, kp = jax.random.split(key, 3)
    x = jax.random.normal(kx, (B, C, H, W), dtype=jnp.float32)
    y = jax.random.normal(ky, (B, C, H, W), dtype=jnp.float32)
    params = init_params(kp, C, H, ratio)

    out_x, out_y = jax.block_until_ready(dcma_forward(x, y, params))
    ref_x, ref_y = dcma_reference(x, y, params)

    assert out_x.shape == (B, C, H, W) and out_y.shape == (B, C, H, W)
    # Tolerance accounts for bf16 matmul operands, the bf16 probability tile,
    # and the approximate EUP reciprocal in the softmax normalization.
    assert jnp.allclose(out_x, ref_x, rtol=1e-2, atol=1e-2)
    assert jnp.allclose(out_y, ref_y, rtol=1e-2, atol=1e-2)
    print("KERNEL_OK")
</pallas_src>

<mosaic_0001>
module attributes {stable_mosaic.version = 11 : i64} {
  func.func @dcma_kernel(%arg0: i32, %arg1: memref<1x64x256xf32, #tpu.memory_space<vmem>>, %arg2: memref<1x64x256xf32, #tpu.memory_space<vmem>>, %arg3: memref<8x64xbf16, #tpu.memory_space<vmem>>, %arg4: memref<8x1xf32, #tpu.memory_space<vmem>>, %arg5: memref<8x64xbf16, #tpu.memory_space<vmem>>, %arg6: memref<8x1xf32, #tpu.memory_space<vmem>>, %arg7: memref<65x64xbf16, #tpu.memory_space<vmem>>, %arg8: memref<65x1xf32, #tpu.memory_space<vmem>>, %arg9: memref<65x64xbf16, #tpu.memory_space<vmem>>, %arg10: memref<65x1xf32, #tpu.memory_space<vmem>>, %arg11: memref<256x256xbf16, #tpu.memory_space<vmem>>, %arg12: memref<256x1xf32, #tpu.memory_space<vmem>>, %arg13: memref<256x256xbf16, #tpu.memory_space<vmem>>, %arg14: memref<256x1xf32, #tpu.memory_space<vmem>>, %arg15: memref<2xf32, #tpu.memory_space<smem>>, %arg16: memref<1x64x256xf32, #tpu.memory_space<vmem>>, %arg17: memref<1x64x256xf32, #tpu.memory_space<vmem>>) attributes {dimension_semantics = [#tpu.dimension_semantics<parallel>], iteration_bounds = array<i64: 2>, scalar_prefetch = 0 : i64, scratch_operands = 0 : i64, tpu.core_type = #tpu.core_type<tc>, window_params = [{transform_indices = @transform_0, window_bounds = array<i64: 1, 64, 256>}, {transform_indices = @transform_1, window_bounds = array<i64: 1, 64, 256>}, {pipeline_mode = #tpu.pipeline_mode<synchronous>, transform_indices = @transform_2, window_bounds = array<i64: 8, 64>}, {pipeline_mode = #tpu.pipeline_mode<synchronous>, transform_indices = @transform_3, window_bounds = array<i64: 8, 1>}, {pipeline_mode = #tpu.pipeline_mode<synchronous>, transform_indices = @transform_4, window_bounds = array<i64: 8, 64>}, {pipeline_mode = #tpu.pipeline_mode<synchronous>, transform_indices = @transform_5, window_bounds = array<i64: 8, 1>}, {pipeline_mode = #tpu.pipeline_mode<synchronous>, transform_indices = @transform_6, window_bounds = array<i64: 65, 64>}, {pipeline_mode = #tpu.pipeline_mode<synchronous>, transform_indices = @transform_7, window_bounds = array<i64: 65, 1>}, {pipeline_mode = #tpu.pipeline_mode<synchronous>, transform_indices = @transform_8, window_bounds = array<i64: 65, 64>}, {pipeline_mode = #tpu.pipeline_mode<synchronous>, transform_indices = @transform_9, window_bounds = array<i64: 65, 1>}, {pipeline_mode = #tpu.pipeline_mode<synchronous>, transform_indices = @transform_10, window_bounds = array<i64: 256, 256>}, {pipeline_mode = #tpu.pipeline_mode<synchronous>, transform_indices = @transform_11, window_bounds = array<i64: 256, 1>}, {pipeline_mode = #tpu.pipeline_mode<synchronous>, transform_indices = @transform_12, window_bounds = array<i64: 256, 256>}, {pipeline_mode = #tpu.pipeline_mode<synchronous>, transform_indices = @transform_13, window_bounds = array<i64: 256, 1>}, {transform_indices = @transform_14, window_bounds = array<i64: 2>}, {transform_indices = @transform_15, window_bounds = array<i64: 1, 64, 256>}, {transform_indices = @transform_16, window_bounds = array<i64: 1, 64, 256>}]} {
    %c0 = arith.constant 0 : index
    %c0_0 = arith.constant 0 : index
    %c0_1 = arith.constant 0 : index
    %0 = vector.load %arg1[%c0, %c0_0, %c0_1] : memref<1x64x256xf32, #tpu.memory_space<vmem>>, vector<1x64x256xf32>
    %1 = vector.shape_cast %0 : vector<1x64x256xf32> to vector<64x256xf32>
    %c0_2 = arith.constant 0 : index
    %c0_3 = arith.constant 0 : index
    %c0_4 = arith.constant 0 : index
    %2 = vector.load %arg2[%c0_2, %c0_3, %c0_4] : memref<1x64x256xf32, #tpu.memory_space<vmem>>, vector<1x64x256xf32>
    %3 = vector.shape_cast %2 : vector<1x64x256xf32> to vector<64x256xf32>
    %4 = arith.truncf %1 : vector<64x256xf32> to vector<64x256xbf16>
    %5 = arith.truncf %3 : vector<64x256xf32> to vector<64x256xbf16>
    %c0_5 = arith.constant 0 : index
    %c0_6 = arith.constant 0 : index
    %6 = vector.load %arg3[%c0_5, %c0_6] : memref<8x64xbf16, #tpu.memory_space<vmem>>, vector<8x64xbf16>
    %cst = arith.constant dense<0.000000e+00> : vector<8x256xf32>
    %7 = tpu.matmul %6, %4, %cst {dimension_numbers = #tpu.dot_dimension_numbers<[1], [0], [0], [1], [0, 0, 1, 1], [], []>} : vector<8x64xbf16>, vector<64x256xbf16>, vector<8x256xf32> -> vector<8x256xf32>
    %c0_7 = arith.constant 0 : index
    %c0_8 = arith.constant 0 : index
    %8 = vector.load %arg4[%c0_7, %c0_8] : memref<8x1xf32, #tpu.memory_space<vmem>>, vector<8x1xf32>
    %9 = vector.broadcast %8 : vector<8x1xf32> to vector<8x256xf32>
    %10 = arith.addf %7, %9 : vector<8x256xf32>
    %c0_9 = arith.constant 0 : index
    %c0_10 = arith.constant 0 : index
    %11 = vector.load %arg5[%c0_9, %c0_10] : memref<8x64xbf16, #tpu.memory_space<vmem>>, vector<8x64xbf16>
    %cst_11 = arith.constant dense<0.000000e+00> : vector<8x256xf32>
    %12 = tpu.matmul %11, %5, %cst_11 {dimension_numbers = #tpu.dot_dimension_numbers<[1], [0], [0], [1], [0, 0, 1, 1], [], []>} : vector<8x64xbf16>, vector<64x256xbf16>, vector<8x256xf32> -> vector<8x256xf32>
    %c0_12 = arith.constant 0 : index
    %c0_13 = arith.constant 0 : index
    %13 = vector.load %arg6[%c0_12, %c0_13] : memref<8x1xf32, #tpu.memory_space<vmem>>, vector<8x1xf32>
    %14 = vector.broadcast %13 : vector<8x1xf32> to vector<8x256xf32>
    %15 = arith.addf %12, %14 : vector<8x256xf32>
    %16 = arith.truncf %10 : vector<8x256xf32> to vector<8x256xbf16>
    %17 = arith.truncf %15 : vector<8x256xf32> to vector<8x256xbf16>
    %c0_14 = arith.constant 0 : index
    %18 = memref.load %arg15[%c0_14] : memref<2xf32, #tpu.memory_space<smem>>
    %c1 = arith.constant 1 : index
    %19 = memref.load %arg15[%c1] : memref<2xf32, #tpu.memory_space<smem>>
    %c0_15 = arith.constant 0 : index
    %c0_16 = arith.constant 0 : index
    %20 = vector.load %arg11[%c0_15, %c0_16] : memref<256x256xbf16, #tpu.memory_space<vmem>>, vector<256x256xbf16>
    %cst_17 = arith.constant dense<0.000000e+00> : vector<8x256xf32>
    %21 = tpu.matmul %17, %20, %cst_17 {dimension_numbers = #tpu.dot_dimension_numbers<[1], [0], [0], [1], [0, 0, 1, 1], [], []>} : vector<8x256xbf16>, vector<256x256xbf16>, vector<8x256xf32> -> vector<8x256xf32>
    %22 = arith.truncf %21 : vector<8x256xf32> to vector<8x256xbf16>
    %cst_18 = arith.constant dense<0.000000e+00> : vector<256x256xf32>
    %23 = tpu.matmul %22, %16, %cst_18 {dimension_numbers = #tpu.dot_dimension_numbers<[0], [0], [1], [1], [0, 1, 1, 1], [], []>} : vector<8x256xbf16>, vector<8x256xbf16>, vector<256x256xf32> -> vector<256x256xf32>
    %c0_19 = arith.constant 0 : index
    %c0_20 = arith.constant 0 : index
    %24 = vector.load %arg12[%c0_19, %c0_20] : memref<256x1xf32, #tpu.memory_space<vmem>>, vector<256x1xf32>
    %25 = vector.broadcast %24 : vector<256x1xf32> to vector<256x256xf32>
    %26 = arith.addf %23, %25 : vector<256x256xf32>
    %cst_21 = arith.constant dense<0xFF800000> : vector<256xf32>
    %27 = vector.multi_reduction <maximumf>, %26, %cst_21 [0] : vector<256x256xf32> to vector<256xf32>
    %28 = vector.shape_cast %27 : vector<256xf32> to vector<1x256xf32>
    %29 = vector.broadcast %28 : vector<1x256xf32> to vector<256x256xf32>
    %30 = arith.subf %26, %29 : vector<256x256xf32>
    %31 = math.exp %30 : vector<256x256xf32>
    %32 = arith.truncf %31 : vector<256x256xf32> to vector<256x256xbf16>
    %c0_22 = arith.constant 0 : index
    %c0_23 = arith.constant 0 : index
    %33 = vector.load %arg9[%c0_22, %c0_23] : memref<65x64xbf16, #tpu.memory_space<vmem>>, vector<65x64xbf16>
    %cst_24 = arith.constant dense<0.000000e+00> : vector<65x256xf32>
    %34 = tpu.matmul %33, %5, %cst_24 {dimension_numbers = #tpu.dot_dimension_numbers<[1], [0], [0], [1], [0, 0, 1, 1], [], []>} : vector<65x64xbf16>, vector<64x256xbf16>, vector<65x256xf32> -> vector<65x256xf32>
    %c0_25 = arith.constant 0 : index
    %c0_26 = arith.constant 0 : index
    %35 = vector.load %arg10[%c0_25, %c0_26] : memref<65x1xf32, #tpu.memory_space<vmem>>, vector<65x1xf32>
    %36 = vector.broadcast %35 : vector<65x1xf32> to vector<65x256xf32>
    %37 = arith.addf %34, %36 : vector<65x256xf32>
    %38 = arith.truncf %37 : vector<65x256xf32> to vector<65x256xbf16>
    %cst_27 = arith.constant dense<0.000000e+00> : vector<65x256xf32>
    %39 = tpu.matmul %38, %32, %cst_27 {dimension_numbers = #tpu.dot_dimension_numbers<[1], [0], [0], [1], [0, 0, 1, 1], [], []>} : vector<65x256xbf16>, vector<256x256xbf16>, vector<65x256xf32> -> vector<65x256xf32>
    %40 = vector.extract_strided_slice %39 {offsets = [64, 0], sizes = [1, 256], strides = [1, 1]} : vector<65x256xf32> to vector<1x256xf32>
    %41 = tpu.reciprocal %40 {approx = true} : vector<1x256xf32> -> vector<1x256xf32>
    %42 = vector.broadcast %18 : f32 to vector<1x256xf32>
    %43 = arith.mulf %42, %41 : vector<1x256xf32>
    %44 = vector.extract_strided_slice %39 {offsets = [0, 0], sizes = [64, 256], strides = [1, 1]} : vector<65x256xf32> to vector<64x256xf32>
    %45 = vector.broadcast %43 : vector<1x256xf32> to vector<64x256xf32>
    %46 = arith.mulf %44, %45 : vector<64x256xf32>
    %47 = arith.addf %46, %1 : vector<64x256xf32>
    %c0_28 = arith.constant 0 : index
    %c0_29 = arith.constant 0 : index
    %c0_30 = arith.constant 0 : index
    %48 = vector.load %arg16[%c0_28, %c0_29, %c0_30] : memref<1x64x256xf32, #tpu.memory_space<vmem>>, vector<1x64x256xf32>
    %49 = vector.shape_cast %48 : vector<1x64x256xf32> to vector<64x256xf32>
    %50 = vector.shape_cast %47 : vector<64x256xf32> to vector<1x64x256xf32>
    tpu.vector_store %arg16[%c0_28, %c0_29, %c0_30], %50 {strides = array<i32>} : memref<1x64x256xf32, #tpu.memory_space<vmem>>, vector<1x64x256xf32>,
    %c0_31 = arith.constant 0 : index
    %c0_32 = arith.constant 0 : index
    %51 = vector.load %arg13[%c0_31, %c0_32] : memref<256x256xbf16, #tpu.memory_space<vmem>>, vector<256x256xbf16>
    %cst_33 = arith.constant dense<0.000000e+00> : vector<8x256xf32>
    %52 = tpu.matmul %16, %51, %cst_33 {dimension_numbers = #tpu.dot_dimension_numbers<[1], [0], [0], [1], [0, 0, 1, 1], [], []>} : vector<8x256xbf16>, vector<256x256xbf16>, vector<8x256xf32> -> vector<8x256xf32>
    %53 = arith.truncf %52 : vector<8x256xf32> to vector<8x256xbf16>
    %cst_34 = arith.constant dense<0.000000e+00> : vector<256x256xf32>
    %54 = tpu.matmul %53, %17, %cst_34 {dimension_numbers = #tpu.dot_dimension_numbers<[0], [0], [1], [1], [0, 1, 1, 1], [], []>} : vector<8x256xbf16>, vector<8x256xbf16>, vector<256x256xf32> -> vector<256x256xf32>
    %c0_35 = arith.constant 0 : index
    %c0_36 = arith.constant 0 : index
    %55 = vector.load %arg14[%c0_35, %c0_36] : memref<256x1xf32, #tpu.memory_space<vmem>>, vector<256x1xf32>
    %56 = vector.broadcast %55 : vector<256x1xf32> to vector<256x256xf32>
    %57 = arith.addf %54, %56 : vector<256x256xf32>
    %cst_37 = arith.constant dense<0xFF800000> : vector<256xf32>
    %58 = vector.multi_reduction <maximumf>, %57, %cst_37 [0] : vector<256x256xf32> to vector<256xf32>
    %59 = vector.shape_cast %58 : vector<256xf32> to vector<1x256xf32>
    %60 = vector.broadcast %59 : vector<1x256xf32> to vector<256x256xf32>
    %61 = arith.subf %57, %60 : vector<256x256xf32>
    %62 = math.exp %61 : vector<256x256xf32>
    %63 = arith.truncf %62 : vector<256x256xf32> to vector<256x256xbf16>
    %c0_38 = arith.constant 0 : index
    %c0_39 = arith.constant 0 : index
    %64 = vector.load %arg7[%c0_38, %c0_39] : memref<65x64xbf16, #tpu.memory_space<vmem>>, vector<65x64xbf16>
    %cst_40 = arith.constant dense<0.000000e+00> : vector<65x256xf32>
    %65 = tpu.matmul %64, %4, %cst_40 {dimension_numbers = #tpu.dot_dimension_numbers<[1], [0], [0], [1], [0, 0, 1, 1], [], []>} : vector<65x64xbf16>, vector<64x256xbf16>, vector<65x256xf32> -> vector<65x256xf32>
    %c0_41 = arith.constant 0 : index
    %c0_42 = arith.constant 0 : index
    %66 = vector.load %arg8[%c0_41, %c0_42] : memref<65x1xf32, #tpu.memory_space<vmem>>, vector<65x1xf32>
    %67 = vector.broadcast %66 : vector<65x1xf32> to vector<65x256xf32>
    %68 = arith.addf %65, %67 : vector<65x256xf32>
    %69 = arith.truncf %68 : vector<65x256xf32> to vector<65x256xbf16>
    %cst_43 = arith.constant dense<0.000000e+00> : vector<65x256xf32>
    %70 = tpu.matmul %69, %63, %cst_43 {dimension_numbers = #tpu.dot_dimension_numbers<[1], [0], [0], [1], [0, 0, 1, 1], [], []>} : vector<65x256xbf16>, vector<256x256xbf16>, vector<65x256xf32> -> vector<65x256xf32>
    %71 = vector.extract_strided_slice %70 {offsets = [64, 0], sizes = [1, 256], strides = [1, 1]} : vector<65x256xf32> to vector<1x256xf32>
    %72 = tpu.reciprocal %71 {approx = true} : vector<1x256xf32> -> vector<1x256xf32>
    %73 = vector.broadcast %19 : f32 to vector<1x256xf32>
    %74 = arith.mulf %73, %72 : vector<1x256xf32>
    %75 = vector.extract_strided_slice %70 {offsets = [0, 0], sizes = [64, 256], strides = [1, 1]} : vector<65x256xf32> to vector<64x256xf32>
    %76 = vector.broadcast %74 : vector<1x256xf32> to vector<64x256xf32>
    %77 = arith.mulf %75, %76 : vector<64x256xf32>
    %78 = arith.addf %77, %3 : vector<64x256xf32>
    %c0_44 = arith.constant 0 : index
    %c0_45 = arith.constant 0 : index
    %c0_46 = arith.constant 0 : index
    %79 = vector.load %arg17[%c0_44, %c0_45, %c0_46] : memref<1x64x256xf32, #tpu.memory_space<vmem>>, vector<1x64x256xf32>
    %80 = vector.shape_cast %79 : vector<1x64x256xf32> to vector<64x256xf32>
    %81 = vector.shape_cast %78 : vector<64x256xf32> to vector<1x64x256xf32>
    tpu.vector_store %arg17[%c0_44, %c0_45, %c0_46], %81 {strides = array<i32>} : memref<1x64x256xf32, #tpu.memory_space<vmem>>, vector<1x64x256xf32>,
    return
  }
  func.func @transform_0(%arg0: i32) -> (i32, i32, i32) {
    %c0_i32 = arith.constant 0 : i32
    %c0_i32_0 = arith.constant 0 : i32
    %c0_i32_1 = arith.constant 0 : i32
    return %arg0, %c0_i32, %c0_i32_0 : i32, i32, i32
  }
  func.func @transform_1(%arg0: i32) -> (i32, i32, i32) {
    %c0_i32 = arith.constant 0 : i32
    %c0_i32_0 = arith.constant 0 : i32
    %c0_i32_1 = arith.constant 0 : i32
    return %arg0, %c0_i32, %c0_i32_0 : i32, i32, i32
  }
  func.func @transform_2(%arg0: i32) -> (i32, i32) {
    %c0_i32 = arith.constant 0 : i32
    %c0_i32_0 = arith.constant 0 : i32
    %c0_i32_1 = arith.constant 0 : i32
    return %c0_i32, %c0_i32_0 : i32, i32
  }
  func.func @transform_3(%arg0: i32) -> (i32, i32) {
    %c0_i32 = arith.constant 0 : i32
    %c0_i32_0 = arith.constant 0 : i32
    %c0_i32_1 = arith.constant 0 : i32
    return %c0_i32, %c0_i32_0 : i32, i32
  }
  func.func @transform_4(%arg0: i32) -> (i32, i32) {
    %c0_i32 = arith.constant 0 : i32
    %c0_i32_0 = arith.constant 0 : i32
    %c0_i32_1 = arith.constant 0 : i32
    return %c0_i32, %c0_i32_0 : i32, i32
  }
  func.func @transform_5(%arg0: i32) -> (i32, i32) {
    %c0_i32 = arith.constant 0 : i32
    %c0_i32_0 = arith.constant 0 : i32
    %c0_i32_1 = arith.constant 0 : i32
    return %c0_i32, %c0_i32_0 : i32, i32
  }
  func.func @transform_6(%arg0: i32) -> (i32, i32) {
    %c0_i32 = arith.constant 0 : i32
    %c0_i32_0 = arith.constant 0 : i32
    %c0_i32_1 = arith.constant 0 : i32
    return %c0_i32, %c0_i32_0 : i32, i32
  }
  func.func @transform_7(%arg0: i32) -> (i32, i32) {
    %c0_i32 = arith.constant 0 : i32
    %c0_i32_0 = arith.constant 0 : i32
    %c0_i32_1 = arith.constant 0 : i32
    return %c0_i32, %c0_i32_0 : i32, i32
  }
  func.func @transform_8(%arg0: i32) -> (i32, i32) {
    %c0_i32 = arith.constant 0 : i32
    %c0_i32_0 = arith.constant 0 : i32
    %c0_i32_1 = arith.constant 0 : i32
    return %c0_i32, %c0_i32_0 : i32, i32
  }
  func.func @transform_9(%arg0: i32) -> (i32, i32) {
    %c0_i32 = arith.constant 0 : i32
    %c0_i32_0 = arith.constant 0 : i32
    %c0_i32_1 = arith.constant 0 : i32
    return %c0_i32, %c0_i32_0 : i32, i32
  }
  func.func @transform_10(%arg0: i32) -> (i32, i32) {
    %c0_i32 = arith.constant 0 : i32
    %c0_i32_0 = arith.constant 0 : i32
    %c0_i32_1 = arith.constant 0 : i32
    return %c0_i32, %c0_i32_0 : i32, i32
  }
  func.func @transform_11(%arg0: i32) -> (i32, i32) {
    %c0_i32 = arith.constant 0 : i32
    %c0_i32_0 = arith.constant 0 : i32
    %c0_i32_1 = arith.constant 0 : i32
    return %c0_i32, %c0_i32_0 : i32, i32
  }
  func.func @transform_12(%arg0: i32) -> (i32, i32) {
    %c0_i32 = arith.constant 0 : i32
    %c0_i32_0 = arith.constant 0 : i32
    %c0_i32_1 = arith.constant 0 : i32
    return %c0_i32, %c0_i32_0 : i32, i32
  }
  func.func @transform_13(%arg0: i32) -> (i32, i32) {
    %c0_i32 = arith.constant 0 : i32
    %c0_i32_0 = arith.constant 0 : i32
    %c0_i32_1 = arith.constant 0 : i32
    return %c0_i32, %c0_i32_0 : i32, i32
  }
  func.func @transform_14(%arg0: i32) -> i32 {
    %c0_i32 = arith.constant 0 : i32
    %c0_i32_0 = arith.constant 0 : i32
    return %c0_i32 : i32
  }
  func.func @transform_15(%arg0: i32) -> (i32, i32, i32) {
    %c0_i32 = arith.constant 0 : i32
    %c0_i32_0 = arith.constant 0 : i32
    %c0_i32_1 = arith.constant 0 : i32
    return %arg0, %c0_i32, %c0_i32_0 : i32, i32, i32
  }
  func.func @transform_16(%arg0: i32) -> (i32, i32, i32) {
    %c0_i32 = arith.constant 0 : i32
    %c0_i32_0 = arith.constant 0 : i32
    %c0_i32_1 = arith.constant 0 : i32
    return %arg0, %c0_i32, %c0_i32_0 : i32, i32, i32
  }
}

</mosaic_0001>

<llo_original>
// kernel: tpu_custom_call.1
$region0: #{tpu_custom_call.1}
  #allocation0 [shape = 'u32[]', space=smem, size = 0x4, offset = 0x4, fixed_abs, tag = 'smem constant byte address 0x4 - core index']
  #allocation1 [shape = 'u32[144,128]{1,0:T(1,128)}', space=vmem, size = 0x12000, scoped, tag = 'internal scratch']
  %s0 = inlined_call_operand.vmem [shape: f32[2,64,256], index: 0, kind: input, shape index: {}]
  %s1 = inlined_call_operand.vmem [shape: f32[2,64,256], index: 1, kind: input, shape index: {}]
  %s2 = inlined_call_operand.vmem [shape: bf16[8,64], index: 2, kind: input, shape index: {}]
  %s3 = inlined_call_operand.vmem [shape: f32[8,1], index: 3, kind: input, shape index: {}]
  %s4 = inlined_call_operand.hbm [shape: bf16[8,64], index: 4, kind: input, shape index: {}]
  %s5 = inlined_call_operand.vmem [shape: f32[8,1], index: 5, kind: input, shape index: {}]
  %s6 = inlined_call_operand.vmem [shape: bf16[65,64], index: 6, kind: input, shape index: {}]
  %s7 = inlined_call_operand.vmem [shape: f32[65,1], index: 7, kind: input, shape index: {}]
  %s8 = inlined_call_operand.vmem [shape: bf16[65,64], index: 8, kind: input, shape index: {}]
  %s9 = inlined_call_operand.vmem [shape: f32[65,1], index: 9, kind: input, shape index: {}]
  %s10 = inlined_call_operand.vmem [shape: bf16[256,256], index: 10, kind: input, shape index: {}]
  %s11 = inlined_call_operand.vmem [shape: f32[256,1], index: 11, kind: input, shape index: {}]
  %s12 = inlined_call_operand.hbm [shape: bf16[256,256], index: 12, kind: input, shape index: {}]
  %s13 = inlined_call_operand.vmem [shape: f32[256,1], index: 13, kind: input, shape index: {}]
  %s14 = inlined_call_operand.vmem [shape: f32[2], index: 14, kind: input, shape index: {}]
  %s15 = inlined_call_operand.hbm [shape: f32[2,64,256], index: 15, kind: output, shape index: {0}]
  %s16 = inlined_call_operand.hbm [shape: f32[2,64,256], index: 16, kind: output, shape index: {1}]
  %17 = xla_tuple %s15, %s16
  %s18 = sld [smem:[#allocation0]]
  $region113: #{tpu_custom_call.1} parent=0
    _
  %s20 = ssub.s32 1, %s18
  %s21 = scalar_select 0, %s20, %s18
  $region1: #{tpu_custom_call.1} parent=0
    #allocation2 [shape = 'u8[2048]{0}', space=vmem, size = 0x800, scoped, tag = 'input window, operand 4, single buffered']
    #allocation3 [shape = 's32[2]{0}', space=sflag, size = 0x8, scoped, tag = 'scoped memory for tpu_custom_call.1']
    #allocation4 [shape = 's32[2]{0}', space=sflag, size = 0x8, scoped, tag = 'scoped memory for tpu_custom_call.1']
    #allocation5 [shape = 's32[2]{0}', space=sflag, size = 0x8, scoped, tag = 'scoped memory for tpu_custom_call.1']
    #allocation6 [shape = 'u8[131072]{0}', space=vmem, size = 0x20000, scoped, tag = 'input window, operand 12, single buffered']
    #allocation7 [shape = 's32[1]{0}', space=sflag, size = 0x4, scoped, tag = 'scoped memory for tpu_custom_call.1']
    #allocation8 [shape = 'u8[512]{0}', space=smem, size = 0x200, scoped, tag = 'input window, operand 14, single buffered']
    #allocation9 [shape = 'u8[131072]{0}', space=vmem, size = 0x20000, scoped, tag = 'output window, operand 0']
    #allocation10 [shape = 'u8[131072]{0}', space=vmem, size = 0x20000, scoped, tag = 'output window, operand 1']
    #allocation11 [shape = 's32[2]{0}', space=sflag, size = 0x8, scoped, tag = 'scoped memory for tpu_custom_call.1']
    %22 = vsyncpa [#allocation3], 0
    %23 = vsyncpa [#allocation7], 0
    %24 = vsyncpa [#allocation5], 0
    %25 = vsyncpa [#allocation4], 0
    %s26 = scalar_lea.sflag [#allocation4], 1
    %27 = vsyncpa %s26, 0
    %28 = vsyncpa [#allocation11], 0
    %s29 = scalar_lea.sflag [#allocation11], 1
    %30 = vsyncpa %s29, 0
    loop: start=0, step=1, limit=4
    $region2: #{tpu_custom_call.1} parent=1 // loop_pre_header
      _
    $region3: #{tpu_custom_call.1} parent=1 // loop_header
      %s32 = sphi 0, %s36
      %p33 = scmp.ge.s32.totalorder %s32, 4
      %s42 = sphi 0, %s44
      %s45 = sphi 0, %s42
      %s46 = sphi 0, %s45
      %s62 = sphi 0, %s46
      %s68 = sphi 0, %s70
      %s71 = sphi 0, %s68
      %s72 = sphi 0, %s71
      %s88 = sphi 0, %s72
      %s92 = sphi 0, %s92
      %s94 = sphi 0, %s92
      %s95 = sphi 0, %s94
      %s109 = sphi 0, %s95
      %s113 = sphi 0, %s113
      %s115 = sphi 0, %s113
      %s116 = sphi 0, %s115
      %s130 = sphi 0, %s116
      %s134 = sphi 0, %s134
      %s136 = sphi 0, %s134
      %s137 = sphi 0, %s136
      %s151 = sphi 0, %s137
      %s155 = sphi 0, %s155
      %s157 = sphi 0, %s155
      %s158 = sphi 0, %s157
      %s172 = sphi 0, %s158
      %s176 = sphi 0, %s176
      %s178 = sphi 0, %s176
      %s179 = sphi 0, %s178
      %s193 = sphi 0, %s179
      %s197 = sphi 0, %s197
      %s199 = sphi 0, %s197
      %s200 = sphi 0, %s199
      %s214 = sphi 0, %s200
      %s218 = sphi 0, %s218
      %s220 = sphi 0, %s218
      %s221 = sphi 0, %s220
      %s235 = sphi 0, %s221
      %s239 = sphi 0, %s239
      %s241 = sphi 0, %s239
      %s242 = sphi 0, %s241
      %s256 = sphi 0, %s242
      %s260 = sphi 0, %s260
      %s262 = sphi 0, %s260
      %s263 = sphi 0, %s262
      %s277 = sphi 0, %s263
      %s281 = sphi 0, %s281
      %s283 = sphi 0, %s281
      %s284 = sphi 0, %s283
      %s298 = sphi 0, %s284
      %s302 = sphi 0, %s302
      %s304 = sphi 0, %s302
      %s305 = sphi 0, %s304
      %s319 = sphi 0, %s305
      %s323 = sphi 0, %s323
      %s325 = sphi 0, %s323
      %s326 = sphi 0, %s325
      %s340 = sphi 0, %s326
      %s344 = sphi 0, %s344
      %s346 = sphi 0, %s344
      %s347 = sphi 0, %s346
      %s361 = sphi 0, %s347
      %s367 = sphi 0, %s369
      %s370 = sphi 0, %s367
      %s371 = sphi 0, %s370
      %s387 = sphi 0, %s371
      %s393 = sphi 0, %s395
      %s396 = sphi 0, %s393
      %s397 = sphi 0, %s396
      %s413 = sphi 0, %s397
    $region4: #{tpu_custom_call.1} parent=1 // loop_header_branch
      %35 = sbr.rel (%p33) target = $region8
    $region5: #{tpu_custom_call.1} parent=1 // loop_body
      %s37 = ssub.s32 %s32, 1
      %s38 = ssub.s32 %s32, 2
      %s39 = sadd.s32 %s32, 1
      %s40 = ssub.s32 %s32, %s39
      %p41 = scmp.eq.s32.totalorder %s40, 0
      %s43 = sadd.s32 %s42, 1
      %s44 = scalar_select %p41, %s42, %s43
      %p47 = pneg %p41
      %p48 = scmp.eq.s32.totalorder %s32, 1
      %p49 = por %p47, %p48
      %p50 = scmp.ne.s32.totalorder %s42, %s45
      %p51 = scmp.eq.s32.totalorder %s32, 0
      %p52 = por %p50, %p51
      %p53 = scmp.ne.s32.totalorder %s42, %s45
      %p54 = scmp.eq.s32.totalorder %s37, 1
      %p55 = por %p53, %p54
      %p56 = scmp.ne.s32.totalorder %s45, %s46
      %p57 = scmp.eq.s32.totalorder %s37, 0
      %p58 = por %p56, %p57
      %p59 = scmp.ne.s32.totalorder %s45, %s46
      %p60 = scmp.eq.s32.totalorder %s38, 1
      %p61 = por %p59, %p60
      %p63 = scmp.ne.s32.totalorder %s46, %s62
      %p64 = scmp.eq.s32.totalorder %s38, 0
      %p65 = por %p63, %p64
      %s66 = ssub.s32 %s32, %s39
      %p67 = scmp.eq.s32.totalorder %s66, 0
      %s69 = sadd.s32 %s68, 1
      %s70 = scalar_select %p67, %s68, %s69
      %p73 = pneg %p67
      %p74 = scmp.eq.s32.totalorder %s32, 1
      %p75 = por %p73, %p74
      %p76 = scmp.ne.s32.totalorder %s68, %s71
      %p77 = scmp.eq.s32.totalorder %s32, 0
      %p78 = por %p76, %p77
      %p79 = scmp.ne.s32.totalorder %s68, %s71
      %p80 = scmp.eq.s32.totalorder %s37, 1
      %p81 = por %p79, %p80
      %p82 = scmp.ne.s32.totalorder %s71, %s72
      %p83 = scmp.eq.s32.totalorder %s37, 0
      %p84 = por %p82, %p83
      %p85 = scmp.ne.s32.totalorder %s71, %s72
      %p86 = scmp.eq.s32.totalorder %s38, 1
      %p87 = por %p85, %p86
      %p89 = scmp.ne.s32.totalorder %s72, %s88
      %p90 = scmp.eq.s32.totalorder %s38, 0
      %p91 = por %p89, %p90
      %s93 = sadd.s32 %s92, 1
      %p96 = scmp.eq.s32.totalorder %s32, 1
      %p97 = scmp.ne.s32.totalorder %s92, %s94
      %p98 = scmp.eq.s32.totalorder %s32, 0
      %p99 = por %p97, %p98
      %p100 = scmp.ne.s32.totalorder %s92, %s94
      %p101 = scmp.eq.s32.totalorder %s37, 1
      %p102 = por %p100, %p101
      %p103 = scmp.ne.s32.totalorder %s94, %s95
      %p104 = scmp.eq.s32.totalorder %s37, 0
      %p105 = por %p103, %p104
      %p106 = scmp.ne.s32.totalorder %s94, %s95
      %p107 = scmp.eq.s32.totalorder %s38, 1
      %p108 = por %p106, %p107
      %p110 = scmp.ne.s32.totalorder %s95, %s109
      %p111 = scmp.eq.s32.totalorder %s38, 0
      %p112 = por %p110, %p111
      %s114 = sadd.s32 %s113, 1
      %p117 = scmp.eq.s32.totalorder %s32, 1
      %p118 = scmp.ne.s32.totalorder %s113, %s115
      %p119 = scmp.eq.s32.totalorder %s32, 0
      %p120 = por %p118, %p119
      %p121 = scmp.ne.s32.totalorder %s113, %s115
      %p122 = scmp.eq.s32.totalorder %s37, 1
      %p123 = por %p121, %p122
      %p124 = scmp.ne.s32.totalorder %s115, %s116
      %p125 = scmp.eq.s32.totalorder %s37, 0
      %p126 = por %p124, %p125
      %p127 = scmp.ne.s32.totalorder %s115, %s116
      %p128 = scmp.eq.s32.totalorder %s38, 1
      %p129 = por %p127, %p128
      %p131 = scmp.ne.s32.totalorder %s116, %s130
      %p132 = scmp.eq.s32.totalorder %s38, 0
      %p133 = por %p131, %p132
      %s135 = sadd.s32 %s134, 1
      %p138 = scmp.eq.s32.totalorder %s32, 1
      %p139 = scmp.ne.s32.totalorder %s134, %s136
      %p140 = scmp.eq.s32.totalorder %s32, 0
      %p141 = por %p139, %p140
      %p142 = scmp.ne.s32.totalorder %s134, %s136
      %p143 = scmp.eq.s32.totalorder %s37, 1
      %p144 = por %p142, %p143
      %p145 = scmp.ne.s32.totalorder %s136, %s137
      %p146 = scmp.eq.s32.totalorder %s37, 0
      %p147 = por %p145, %p146
      %p148 = scmp.ne.s32.totalorder %s136, %s137
      %p149 = scmp.eq.s32.totalorder %s38, 1
      %p150 = por %p148, %p149
      %p152 = scmp.ne.s32.totalorder %s137, %s151
      %p153 = scmp.eq.s32.totalorder %s38, 0
      %p154 = por %p152, %p153
      %s156 = sadd.s32 %s155, 1
      %p159 = scmp.eq.s32.totalorder %s32, 1
      %p160 = scmp.ne.s32.totalorder %s155, %s157
      %p161 = scmp.eq.s32.totalorder %s32, 0
      %p162 = por %p160, %p161
      %p163 = scmp.ne.s32.totalorder %s155, %s157
      %p164 = scmp.eq.s32.totalorder %s37, 1
      %p165 = por %p163, %p164
      %p166 = scmp.ne.s32.totalorder %s157, %s158
      %p167 = scmp.eq.s32.totalorder %s37, 0
      %p168 = por %p166, %p167
      %p169 = scmp.ne.s32.totalorder %s157, %s158
      %p170 = scmp.eq.s32.totalorder %s38, 1
      %p171 = por %p169, %p170
      %p173 = scmp.ne.s32.totalorder %s158, %s172
      %p174 = scmp.eq.s32.totalorder %s38, 0
      %p175 = por %p173, %p174
      %s177 = sadd.s32 %s176, 1
      %p180 = scmp.eq.s32.totalorder %s32, 1
      %p181 = scmp.ne.s32.totalorder %s176, %s178
      %p182 = scmp.eq.s32.totalorder %s32, 0
      %p183 = por %p181, %p182
      %p184 = scmp.ne.s32.totalorder %s176, %s178
      %p185 = scmp.eq.s32.totalorder %s37, 1
      %p186 = por %p184, %p185
      %p187 = scmp.ne.s32.totalorder %s178, %s179
      %p188 = scmp.eq.s32.totalorder %s37, 0
      %p189 = por %p187, %p188
      %p190 = scmp.ne.s32.totalorder %s178, %s179
      %p191 = scmp.eq.s32.totalorder %s38, 1
      %p192 = por %p190, %p191
      %p194 = scmp.ne.s32.totalorder %s179, %s193
      %p195 = scmp.eq.s32.totalorder %s38, 0
      %p196 = por %p194, %p195
      %s198 = sadd.s32 %s197, 1
      %p201 = scmp.eq.s32.totalorder %s32, 1
      %p202 = scmp.ne.s32.totalorder %s197, %s199
      %p203 = scmp.eq.s32.totalorder %s32, 0
      %p204 = por %p202, %p203
      %p205 = scmp.ne.s32.totalorder %s197, %s199
      %p206 = scmp.eq.s32.totalorder %s37, 1
      %p207 = por %p205, %p206
      %p208 = scmp.ne.s32.totalorder %s199, %s200
      %p209 = scmp.eq.s32.totalorder %s37, 0
      %p210 = por %p208, %p209
      %p211 = scmp.ne.s32.totalorder %s199, %s200
      %p212 = scmp.eq.s32.totalorder %s38, 1
      %p213 = por %p211, %p212
      %p215 = scmp.ne.s32.totalorder %s200, %s214
      %p216 = scmp.eq.s32.totalorder %s38, 0
      %p217 = por %p215, %p216
      %s219 = sadd.s32 %s218, 1
      %p222 = scmp.eq.s32.totalorder %s32, 1
      %p223 = scmp.ne.s32.totalorder %s218, %s220
      %p224 = scmp.eq.s32.totalorder %s32, 0
      %p225 = por %p223, %p224
      %p226 = scmp.ne.s32.totalorder %s218, %s220
      %p227 = scmp.eq.s32.totalorder %s37, 1
      %p228 = por %p226, %p227
      %p229 = scmp.ne.s32.totalorder %s220, %s221
      %p230 = scmp.eq.s32.totalorder %s37, 0
      %p231 = por %p229, %p230
      %p232 = scmp.ne.s32.totalorder %s220, %s221
      %p233 = scmp.eq.s32.totalorder %s38, 1
      %p234 = por %p232, %p233
      %p236 = scmp.ne.s32.totalorder %s221, %s235
      %p237 = scmp.eq.s32.totalorder %s38, 0
      %p238 = por %p236, %p237
      %s240 = sadd.s32 %s239, 1
      %p243 = scmp.eq.s32.totalorder %s32, 1
      %p244 = scmp.ne.s32.totalorder %s239, %s241
      %p245 = scmp.eq.s32.totalorder %s32, 0
      %p246 = por %p244, %p245
      %p247 = scmp.ne.s32.totalorder %s239, %s241
      %p248 = scmp.eq.s32.totalorder %s37, 1
      %p249 = por %p247, %p248
      %p250 = scmp.ne.s32.totalorder %s241, %s242
      %p251 = scmp.eq.s32.totalorder %s37, 0
      %p252 = por %p250, %p251
      %p253 = scmp.ne.s32.totalorder %s241, %s242
      %p254 = scmp.eq.s32.totalorder %s38, 1
      %p255 = por %p253, %p254
      %p257 = scmp.ne.s32.totalorder %s242, %s256
      %p258 = scmp.eq.s32.totalorder %s38, 0
      %p259 = por %p257, %p258
      %s261 = sadd.s32 %s260, 1
      %p264 = scmp.eq.s32.totalorder %s32, 1
      %p265 = scmp.ne.s32.totalorder %s260, %s262
      %p266 = scmp.eq.s32.totalorder %s32, 0
      %p267 = por %p265, %p266
      %p268 = scmp.ne.s32.totalorder %s260, %s262
      %p269 = scmp.eq.s32.totalorder %s37, 1
      %p270 = por %p268, %p269
      %p271 = scmp.ne.s32.totalorder %s262, %s263
      %p272 = scmp.eq.s32.totalorder %s37, 0
      %p273 = por %p271, %p272
      %p274 = scmp.ne.s32.totalorder %s262, %s263
      %p275 = scmp.eq.s32.totalorder %s38, 1
      %p276 = por %p274, %p275
      %p278 = scmp.ne.s32.totalorder %s263, %s277
      %p279 = scmp.eq.s32.totalorder %s38, 0
      %p280 = por %p278, %p279
      %s282 = sadd.s32 %s281, 1
      %p285 = scmp.eq.s32.totalorder %s32, 1
      %p286 = scmp.ne.s32.totalorder %s281, %s283
      %p287 = scmp.eq.s32.totalorder %s32, 0
      %p288 = por %p286, %p287
      %p289 = scmp.ne.s32.totalorder %s281, %s283
      %p290 = scmp.eq.s32.totalorder %s37, 1
      %p291 = por %p289, %p290
      %p292 = scmp.ne.s32.totalorder %s283, %s284
      %p293 = scmp.eq.s32.totalorder %s37, 0
      %p294 = por %p292, %p293
      %p295 = scmp.ne.s32.totalorder %s283, %s284
      %p296 = scmp.eq.s32.totalorder %s38, 1
      %p297 = por %p295, %p296
      %p299 = scmp.ne.s32.totalorder %s284, %s298
      %p300 = scmp.eq.s32.totalorder %s38, 0
      %p301 = por %p299, %p300
      %s303 = sadd.s32 %s302, 1
      %p306 = scmp.eq.s32.totalorder %s32, 1
      %p307 = scmp.ne.s32.totalorder %s302, %s304
      %p308 = scmp.eq.s32.totalorder %s32, 0
      %p309 = por %p307, %p308
      %p310 = scmp.ne.s32.totalorder %s302, %s304
      %p311 = scmp.eq.s32.totalorder %s37, 1
      %p312 = por %p310, %p311
      %p313 = scmp.ne.s32.totalorder %s304, %s305
      %p314 = scmp.eq.s32.totalorder %s37, 0
      %p315 = por %p313, %p314
      %p316 = scmp.ne.s32.totalorder %s304, %s305
      %p317 = scmp.eq.s32.totalorder %s38, 1
      %p318 = por %p316, %p317
      %p320 = scmp.ne.s32.totalorder %s305, %s319
      %p321 = scmp.eq.s32.totalorder %s38, 0
      %p322 = por %p320, %p321
      %s324 = sadd.s32 %s323, 1
      %p327 = scmp.eq.s32.totalorder %s32, 1
      %p328 = scmp.ne.s32.totalorder %s323, %s325
      %p329 = scmp.eq.s32.totalorder %s32, 0
      %p330 = por %p328, %p329
      %p331 = scmp.ne.s32.totalorder %s323, %s325
      %p332 = scmp.eq.s32.totalorder %s37, 1
      %p333 = por %p331, %p332
      %p334 = scmp.ne.s32.totalorder %s325, %s326
      %p335 = scmp.eq.s32.totalorder %s37, 0
      %p336 = por %p334, %p335
      %p337 = scmp.ne.s32.totalorder %s325, %s326
      %p338 = scmp.eq.s32.totalorder %s38, 1
      %p339 = por %p337, %p338
      %p341 = scmp.ne.s32.totalorder %s326, %s340
      %p342 = scmp.eq.s32.totalorder %s38, 0
      %p343 = por %p341, %p342
      %s345 = sadd.s32 %s344, 1
      %p348 = scmp.eq.s32.totalorder %s32, 1
      %p349 = scmp.ne.s32.totalorder %s344, %s346
      %p350 = scmp.eq.s32.totalorder %s32, 0
      %p351 = por %p349, %p350
      %p352 = scmp.ne.s32.totalorder %s344, %s346
      %p353 = scmp.eq.s32.totalorder %s37, 1
      %p354 = por %p352, %p353
      %p355 = scmp.ne.s32.totalorder %s346, %s347
      %p356 = scmp.eq.s32.totalorder %s37, 0
      %p357 = por %p355, %p356
      %p358 = scmp.ne.s32.totalorder %s346, %s347
      %p359 = scmp.eq.s32.totalorder %s38, 1
      %p360 = por %p358, %p359
      %p362 = scmp.ne.s32.totalorder %s347, %s361
      %p363 = scmp.eq.s32.totalorder %s38, 0
      %p364 = por %p362, %p363
      %s365 = ssub.s32 %s32, %s39
      %p366 = scmp.eq.s32.totalorder %s365, 0
      %s368 = sadd.s32 %s367, 1
      %s369 = scalar_select %p366, %s367, %s368
      %p372 = pneg %p366
      %p373 = scmp.eq.s32.totalorder %s32, 1
      %p374 = por %p372, %p373
      %p375 = scmp.ne.s32.totalorder %s367, %s370
      %p376 = scmp.eq.s32.totalorder %s32, 0
      %p377 = por %p375, %p376
      %p378 = scmp.ne.s32.totalorder %s367, %s370
      %p379 = scmp.eq.s32.totalorder %s37, 1
      %p380 = por %p378, %p379
      %p381 = scmp.ne.s32.totalorder %s370, %s371
      %p382 = scmp.eq.s32.totalorder %s37, 0
      %p383 = por %p381, %p382
      %p384 = scmp.ne.s32.totalorder %s370, %s371
      %p385 = scmp.eq.s32.totalorder %s38, 1
      %p386 = por %p384, %p385
      %p388 = scmp.ne.s32.totalorder %s371, %s387
      %p389 = scmp.eq.s32.totalorder %s38, 0
      %p390 = por %p388, %p389
      %s391 = ssub.s32 %s32, %s39
      %p392 = scmp.eq.s32.totalorder %s391, 0
      %s394 = sadd.s32 %s393, 1
      %s395 = scalar_select %p392, %s393, %s394
      %p398 = pneg %p392
      %p399 = scmp.eq.s32.totalorder %s32, 1
      %p400 = por %p398, %p399
      %p401 = scmp.ne.s32.totalorder %s393, %s396
      %p402 = scmp.eq.s32.totalorder %s32, 0
      %p403 = por %p401, %p402
      %p404 = scmp.ne.s32.totalorder %s393, %s396
      %p405 = scmp.eq.s32.totalorder %s37, 1
      %p406 = por %p404, %p405
      %p407 = scmp.ne.s32.totalorder %s396, %s397
      %p408 = scmp.eq.s32.totalorder %s37, 0
      %p409 = por %p407, %p408
      %p410 = scmp.ne.s32.totalorder %s396, %s397
      %p411 = scmp.eq.s32.totalorder %s38, 1
      %p412 = por %p410, %p411
      %p414 = scmp.ne.s32.totalorder %s397, %s413
      %p415 = scmp.eq.s32.totalorder %s38, 0
      %p416 = por %p414, %p415
      %p417 = scmp.le.s32.totalorder 1, %s32
      %p418 = scmp.lt.s32.totalorder %s32, 3
      %p419 = pnand %p417, %p418
      %p420 = pneg %p419
      // Predicated region
      $region9: #{tpu_custom_call.1} parent=5 // pred_check
        _
      $region10: #{tpu_custom_call.1} parent=5 // pred_check_branch
        %422 = sbr.rel (%p419) target = $region12
      $region11: #{tpu_custom_call.1} parent=5 // pred_region
        %s423 = ssub.s32 %s32, 1
        // Predicated region
        $region13: #{tpu_custom_call.1} parent=11 // pred_check
          %p424 = pneg %p105
        $region14: #{tpu_custom_call.1} parent=11 // pred_check_branch
          %426 = sbr.rel (%p424) target = $region16
        $region15: #{tpu_custom_call.1} parent=11 // pred_region
          _
        $region16: #{tpu_custom_call.1} parent=11 // pred_fallthru
          _
        // Predicated region
        $region17: #{tpu_custom_call.1} parent=11 // pred_check
          %p427 = pneg %p126
        $region18: #{tpu_custom_call.1} parent=11 // pred_check_branch
          %429 = sbr.rel (%p427) target = $region20
        $region19: #{tpu_custom_call.1} parent=11 // pred_region
          _
        $region20: #{tpu_custom_call.1} parent=11 // pred_fallthru
          _
        // Predicated region
        $region21: #{tpu_custom_call.1} parent=11 // pred_check
          %p430 = pneg %p147
        $region22: #{tpu_custom_call.1} parent=11 // pred_check_branch
          %432 = sbr.rel (%p430) target = $region24
        $region23: #{tpu_custom_call.1} parent=11 // pred_region
          %s434 = ssub.s32 64, 64
          %435 = vsyncadd [#allocation3], %s434
          %s437 = sshll.u32 [#allocation2], 4
          %s438 = int_to_ptr.vmem [resolvable:$true] %s437
          %440 = dma.hbm_to_vmem [thread:$0]  %s4, 64, %s438, [#allocation3]
        $region24: #{tpu_custom_call.1} parent=11 // pred_fallthru
          _
        // Predicated region
        $region25: #{tpu_custom_call.1} parent=11 // pred_check
          %p441 = pneg %p168
        $region26: #{tpu_custom_call.1} parent=11 // pred_check_branch
          %443 = sbr.rel (%p441) target = $region28
        $region27: #{tpu_custom_call.1} parent=11 // pred_region
          _
        $region28: #{tpu_custom_call.1} parent=11 // pred_fallthru
          _
        // Predicated region
        $region29: #{tpu_custom_call.1} parent=11 // pred_check
          %p444 = pneg %p189
        $region30: #{tpu_custom_call.1} parent=11 // pred_check_branch
          %446 = sbr.rel (%p444) target = $region32
        $region31: #{tpu_custom_call.1} parent=11 // pred_region
          _
        $region32: #{tpu_custom_call.1} parent=11 // pred_fallthru
          _
        // Predicated region
        $region33: #{tpu_custom_call.1} parent=11 // pred_check
          %p447 = pneg %p210
        $region34: #{tpu_custom_call.1} parent=11 // pred_check_branch
          %449 = sbr.rel (%p447) target = $region36
        $region35: #{tpu_custom_call.1} parent=11 // pred_region
          _
        $region36: #{tpu_custom_call.1} parent=11 // pred_fallthru
          _
        // Predicated region
        $region37: #{tpu_custom_call.1} parent=11 // pred_check
          %p450 = pneg %p231
        $region38: #{tpu_custom_call.1} parent=11 // pred_check_branch
          %452 = sbr.rel (%p450) target = $region40
        $region39: #{tpu_custom_call.1} parent=11 // pred_region
          _
        $region40: #{tpu_custom_call.1} parent=11 // pred_fallthru
          _
        // Predicated region
        $region41: #{tpu_custom_call.1} parent=11 // pred_check
          %p453 = pneg %p252
        $region42: #{tpu_custom_call.1} parent=11 // pred_check_branch
          %455 = sbr.rel (%p453) target = $region44
        $region43: #{tpu_custom_call.1} parent=11 // pred_region
          _
        $region44: #{tpu_custom_call.1} parent=11 // pred_fallthru
          _
        // Predicated region
        $region45: #{tpu_custom_call.1} parent=11 // pred_check
          %p456 = pneg %p273
        $region46: #{tpu_custom_call.1} parent=11 // pred_check_branch
          %458 = sbr.rel (%p456) target = $region48
        $region47: #{tpu_custom_call.1} parent=11 // pred_region
          _
        $region48: #{tpu_custom_call.1} parent=11 // pred_fallthru
          _
        // Predicated region
        $region49: #{tpu_custom_call.1} parent=11 // pred_check
          %p459 = pneg %p294
        $region50: #{tpu_custom_call.1} parent=11 // pred_check_branch
          %461 = sbr.rel (%p459) target = $region52
        $region51: #{tpu_custom_call.1} parent=11 // pred_region
          _
        $region52: #{tpu_custom_call.1} parent=11 // pred_fallthru
          _
        // Predicated region
        $region53: #{tpu_custom_call.1} parent=11 // pred_check
          %p462 = pneg %p315
        $region54: #{tpu_custom_call.1} parent=11 // pred_check_branch
          %464 = sbr.rel (%p462) target = $region56
        $region55: #{tpu_custom_call.1} parent=11 // pred_region
          %s466 = ssub.s32 4096, 4096
          %467 = vsyncadd [#allocation7], %s466
          %s468 = sshll.u32 [#allocation6], 4
          %s469 = int_to_ptr.vmem [resolvable:$true] %s468
          %474 = dma.hbm_to_vmem [thread:$0]  %s12, 4096, %s469, [#allocation7], 128, 128, 8
        $region56: #{tpu_custom_call.1} parent=11 // pred_fallthru
          _
        // Predicated region
        $region57: #{tpu_custom_call.1} parent=11 // pred_check
          %p475 = pneg %p336
        $region58: #{tpu_custom_call.1} parent=11 // pred_check_branch
          %477 = sbr.rel (%p475) target = $region60
        $region59: #{tpu_custom_call.1} parent=11 // pred_region
          _
        $region60: #{tpu_custom_call.1} parent=11 // pred_fallthru
          _
        // Predicated region
        $region61: #{tpu_custom_call.1} parent=11 // pred_check
          %p478 = pneg %p357
        $region62: #{tpu_custom_call.1} parent=11 // pred_check_branch
          %480 = sbr.rel (%p478) target = $region64
        $region63: #{tpu_custom_call.1} parent=11 // pred_region
          %s482 = ssub.s32 16, 16
          %483 = vsyncadd [#allocation5], %s482
          %s485 = sshll.u32 %s14, 4
          %s486 = int_to_ptr.vmem [resolvable:$true] %s485
          %488 = dma.vmem_to_smem %s486, 16, [#allocation8], [#allocation5]
        $region64: #{tpu_custom_call.1} parent=11 // pred_fallthru
          _
      $region12: #{tpu_custom_call.1} parent=5 // pred_fallthru
        _
      %p489 = scmp.lt.s32.totalorder %s32, 2
      // Predicated region
      $region65: #{tpu_custom_call.1} parent=5 // pred_check
        %p490 = pneg %p489
      $region66: #{tpu_custom_call.1} parent=5 // pred_check_branch
        %492 = sbr.rel (%p490) target = $region68
      $region67: #{tpu_custom_call.1} parent=5 // pred_region
        // Predicated region
        $region69: #{tpu_custom_call.1} parent=67 // pred_check
          %p493 = pneg %p52
        $region70: #{tpu_custom_call.1} parent=67 // pred_check_branch
          %495 = sbr.rel (%p493) target = $region72
        $region71: #{tpu_custom_call.1} parent=67 // pred_region
          %p496 = scmp.lt.s32.totalorder %s32, 1
          %s497 = scalar_select %p496, %s32, 1
          %s498 = smul.addr %s497, 16
          %s499 = smul.addr %s498, 8
          %s500 = scalar_lea.vmem %s0, %s499
        $region72: #{tpu_custom_call.1} parent=67 // pred_fallthru
          _
        // Predicated region
        $region73: #{tpu_custom_call.1} parent=67 // pred_check
          %p501 = pneg %p78
        $region74: #{tpu_custom_call.1} parent=67 // pred_check_branch
          %503 = sbr.rel (%p501) target = $region76
        $region75: #{tpu_custom_call.1} parent=67 // pred_region
          %p504 = scmp.lt.s32.totalorder %s32, 1
          %s505 = scalar_select %p504, %s32, 1
          %s506 = smul.addr %s505, 16
          %s507 = smul.addr %s506, 8
          %s508 = scalar_lea.vmem %s1, %s507
        $region76: #{tpu_custom_call.1} parent=67 // pred_fallthru
          _
      $region68: #{tpu_custom_call.1} parent=5 // pred_fallthru
        _
      %p509 = scmp.le.s32.totalorder 1, %s32
      %p510 = scmp.lt.s32.totalorder %s32, 3
      %p511 = pnand %p509, %p510
      %p512 = pneg %p511
      // Predicated region
      $region77: #{tpu_custom_call.1} parent=5 // pred_check
        _
      $region78: #{tpu_custom_call.1} parent=5 // pred_check_branch
        %514 = sbr.rel (%p511) target = $region80
      $region79: #{tpu_custom_call.1} parent=5 // pred_region
        %s515 = ssub.s32 %s32, 1
        // Predicated region
        $region81: #{tpu_custom_call.1} parent=79 // pred_check
          %p516 = pneg %p147
        $region82: #{tpu_custom_call.1} parent=79 // pred_check_branch
          %518 = sbr.rel (%p516) target = $region84
        $region83: #{tpu_custom_call.1} parent=79 // pred_region
          %519 = dma.done [#allocation3], 64
        $region84: #{tpu_custom_call.1} parent=79 // pred_fallthru
          _
        // Predicated region
        $region85: #{tpu_custom_call.1} parent=79 // pred_check
          %p520 = pneg %p315
        $region86: #{tpu_custom_call.1} parent=79 // pred_check_branch
          %522 = sbr.rel (%p520) target = $region88
        $region87: #{tpu_custom_call.1} parent=79 // pred_region
          %523 = dma.done [#allocation7], 4096
        $region88: #{tpu_custom_call.1} parent=79 // pred_fallthru
          _
        // Predicated region
        $region89: #{tpu_custom_call.1} parent=79 // pred_check
          %p524 = pneg %p357
        $region90: #{tpu_custom_call.1} parent=79 // pred_check_branch
          %526 = sbr.rel (%p524) target = $region92
        $region91: #{tpu_custom_call.1} parent=79 // pred_region
          %527 = dma.done [#allocation5], 16
        $region92: #{tpu_custom_call.1} parent=79 // pred_fallthru
          _
        %528 = sfence
        %p529 = scmp.lt.s32.totalorder %s37, 1
        %s530 = scalar_select %p529, %s37, 1
        %s531 = smul.addr %s530, 16
        %s532 = smul.addr %s531, 8
        %s533 = scalar_lea.vmem %s0, %s532
        %p534 = pneg %p58
        %p535 = pneg %p55
        %p536 = scmp.lt.s32.totalorder %s37, 1
        %s537 = scalar_select %p536, %s37, 1
        %s538 = smul.addr %s537, 16
        %s539 = smul.addr %s538, 8
        %s540 = scalar_lea.vmem %s1, %s539
        %p541 = pneg %p84
        %p542 = pneg %p81
        %p543 = pneg %p105
        %p544 = pneg %p102
        %p545 = pneg %p126
        %p546 = pneg %p123
        %p547 = pneg %p147
        %p548 = pneg %p144
        %p549 = pneg %p168
        %p550 = pneg %p165
        %p551 = pneg %p189
        %p552 = pneg %p186
        %p553 = pneg %p210
        %p554 = pneg %p207
        %p555 = pneg %p231
        %p556 = pneg %p228
        %p557 = pneg %p252
        %p558 = pneg %p249
        %p559 = pneg %p273
        %p560 = pneg %p270
        %p561 = pneg %p294
        %p562 = pneg %p291
        %p563 = pneg %p315
        %p564 = pneg %p312
        %p565 = pneg %p336
        %p566 = pneg %p333
        %p567 = pneg %p357
        %p568 = pneg %p354
        %p569 = pneg %p383
        %p570 = pneg %p380
        %s571 = sand.u32 %s370, 1
        %s572 = scalar_lea.sflag [#allocation4], %s571
        %s573 = sand.u32 %s370, 1
        %s574 = smul.addr %s573, 128
        %s575 = scalar_lea.vmem [#allocation9], %s574
        %p576 = pneg %p409
        %p577 = pneg %p406
        %s578 = sand.u32 %s396, 1
        %s579 = scalar_lea.sflag [#allocation11], %s578
        %s580 = sand.u32 %s396, 1
        %s581 = smul.addr %s580, 128
        %s582 = scalar_lea.vmem [#allocation10], %s581
        %p583 = scmp.lt.s32.totalorder %s37, 1
        %s584 = scalar_select %p583, %s37, 1
        %s585 = smul.addr %s584, 16
        %s586 = smul.addr %s585, 8
        %s587 = scalar_lea.vmem %s0, %s586
        %p588 = scmp.lt.s32.totalorder %s37, 1
        %s589 = scalar_select %p588, %s37, 1
        %s590 = smul.addr %s589, 16
        %s591 = smul.addr %s590, 8
        %s592 = scalar_lea.vmem %s1, %s591
        %v594 = vld [vmem:[%s587] sm:$0xff]
        %v595 = vld [vmem:[%s587 + $0x8] sm:$0xff]
        %v596 = vld [vmem:[%s587 + $0x10] sm:$0xff]
        %v597 = vld [vmem:[%s587 + $0x18] sm:$0xff]
        %v598 = vld [vmem:[%s587 + $0x20] sm:$0xff]
        %v599 = vld [vmem:[%s587 + $0x28] sm:$0xff]
        %v600 = vld [vmem:[%s587 + $0x30] sm:$0xff]
        %v601 = vld [vmem:[%s587 + $0x38] sm:$0xff]
        %v602 = vld [vmem:[%s587 + $0x40] sm:$0xff]
        %v603 = vld [vmem:[%s587 + $0x48] sm:$0xff]
        %v604 = vld [vmem:[%s587 + $0x50] sm:$0xff]
        %v605 = vld [vmem:[%s587 + $0x58] sm:$0xff]
        %v606 = vld [vmem:[%s587 + $0x60] sm:$0xff]
        %v607 = vld [vmem:[%s587 + $0x68] sm:$0xff]
        %v608 = vld [vmem:[%s587 + $0x70] sm:$0xff]
        %v609 = vld [vmem:[%s587 + $0x78] sm:$0xff]
        %v610 = vld [vmem:[%s592] sm:$0xff]
        %v611 = vld [vmem:[%s592 + $0x8] sm:$0xff]
        %v612 = vld [vmem:[%s592 + $0x10] sm:$0xff]
        %v613 = vld [vmem:[%s592 + $0x18] sm:$0xff]
        %v614 = vld [vmem:[%s592 + $0x20] sm:$0xff]
        %v615 = vld [vmem:[%s592 + $0x28] sm:$0xff]
        %v616 = vld [vmem:[%s592 + $0x30] sm:$0xff]
        %v617 = vld [vmem:[%s592 + $0x38] sm:$0xff]
        %v618 = vld [vmem:[%s592 + $0x40] sm:$0xff]
        %v619 = vld [vmem:[%s592 + $0x48] sm:$0xff]
        %v620 = vld [vmem:[%s592 + $0x50] sm:$0xff]
        %v621 = vld [vmem:[%s592 + $0x58] sm:$0xff]
        %v622 = vld [vmem:[%s592 + $0x60] sm:$0xff]
        %v623 = vld [vmem:[%s592 + $0x68] sm:$0xff]
        %v624 = vld [vmem:[%s592 + $0x70] sm:$0xff]
        %v625 = vld [vmem:[%s592 + $0x78] sm:$0xff]
        %v626 = vpack.c.bf16 %v596, %v594
        %v627 = vpack.c.bf16 %v597, %v595
        %v628 = vpack.c.bf16 %v600, %v598
        %v629 = vpack.c.bf16 %v601, %v599
        %v630 = vpack.c.bf16 %v604, %v602
        %v631 = vpack.c.bf16 %v605, %v603
        %v632 = vpack.c.bf16 %v608, %v606
        %v633 = vpack.c.bf16 %v609, %v607
        %v634 = vpack.c.bf16 %v612, %v610
        %v635 = vpack.c.bf16 %v613, %v611
        %v636 = vpack.c.bf16 %v616, %v614
        %v637 = vpack.c.bf16 %v617, %v615
        %v638 = vpack.c.bf16 %v620, %v618
        %v639 = vpack.c.bf16 %v621, %v619
        %v640 = vpack.c.bf16 %v624, %v622
        %v641 = vpack.c.bf16 %v625, %v623
        %v642 = vld [vmem:[%s2] sm:$0xf]
        %v643 = vld [vmem:[%s3] sm:$0xff]
        %645 = vset.pattern.permute.xlu0 0
        %646 = vperm.xlu0 %645, %v643
        %v647 = vpop.permute.xlu0 %646
        %vm649 = vcmask 523264
        %v651 = vsel %vm649, %v642, 0
        %653 = vmatprep.subr.bf16.mxu0 %v627
        %654 = vmatpush1.bf16.msra.mxu0 %v626
        %655 = vmatprep.subr.bf16.mxu0 %v629
        %656 = vmatpush1.bf16.msra.mxu0 %v628
        %657 = vmatprep.subr.bf16.mxu0 %v631
        %658 = vmatpush1.bf16.msra.mxu0 %v630
        %659 = vmatprep.subr.bf16.mxu0 %v633
        %660 = vmatpush1.bf16.msra.mxu0 %v632
        %661 = vmatprep.subr.bf16.mxu0 0
        %662 = vmatpush1.bf16.msra.mxu0 0
        %663 = vmatprep.subr.bf16.mxu0 0
        %664 = vmatpush1.bf16.msra.mxu0 0
        %665 = vmatprep.subr.bf16.mxu0 0
        %666 = vmatpush1.bf16.msra.mxu0 0
        %667 = vmatprep.subr.bf16.mxu0 0
        %668 = vmatpush1.bf16.msra.mxu0 0
        %669 = vmatprep.subr.bf16.mxu0 0
        %670 = vmatpush1.bf16.msra.mxu0 0
        %671 = vmatprep.subr.bf16.mxu0 0
        %672 = vmatpush1.bf16.msra.mxu0 0
        %673 = vmatprep.subr.bf16.mxu0 0
        %674 = vmatpush1.bf16.msra.mxu0 0
        %675 = vmatprep.subr.bf16.mxu0 0
        %676 = vmatpush1.bf16.msra.mxu0 0
        %677 = vmatprep.subr.bf16.mxu0 0
        %678 = vmatpush1.bf16.msra.mxu0 0
        %679 = vmatprep.subr.bf16.mxu0 0
        %680 = vmatpush1.bf16.msra.mxu0 0
        %681 = vmatprep.subr.bf16.mxu0 0
        %682 = vmatpush1.bf16.msra.mxu0 0
        %683 = vmatprep.subr.bf16.mxu0 0
        %684 = vmatpush1.bf16.msra.mxu0 0
        %685 = vmatprep.mubr.bf16.mxu0 0
        %686 = vmatmul.mubr.bf16.gmra.mrb[0].mxu0 %v651
        %v687 = vpop.f32.mrb[0].mxu0
        %v688 = vadd.f32 %v647, %v687
        %v689 = vpop.f32.mrb[0].mxu0
        %v690 = vadd.f32 %v647, %v689
        %v691 = vpop.f32.mrb[0].mxu0
        %v692 = vpop.f32.mrb[0].mxu0
        %693 = vdwg.mxu0
        %v694 = vld [vmem:[#allocation2] sm:$0xf]
        %v695 = vld [vmem:[%s5] sm:$0xff]
        %697 = vset.pattern.permute.xlu0 0
        %698 = vperm.xlu0 %697, %v695
        %v699 = vpop.permute.xlu0 %698
        %v702 = vsel %vm649, %v694, 0
        %704 = vmatprep.subr.bf16.mxu0 %v635
        %705 = vmatpush1.bf16.msra.mxu0 %v634
        %706 = vmatprep.subr.bf16.mxu0 %v637
        %707 = vmatpush1.bf16.msra.mxu0 %v636
        %708 = vmatprep.subr.bf16.mxu0 %v639
        %709 = vmatpush1.bf16.msra.mxu0 %v638
        %710 = vmatprep.subr.bf16.mxu0 %v641
        %711 = vmatpush1.bf16.msra.mxu0 %v640
        %712 = vmatprep.subr.bf16.mxu0 0
        %713 = vmatpush1.bf16.msra.mxu0 0
        %714 = vmatprep.subr.bf16.mxu0 0
        %715 = vmatpush1.bf16.msra.mxu0 0
        %716 = vmatprep.subr.bf16.mxu0 0
        %717 = vmatpush1.bf16.msra.mxu0 0
        %718 = vmatprep.subr.bf16.mxu0 0
        %719 = vmatpush1.bf16.msra.mxu0 0
        %720 = vmatprep.subr.bf16.mxu0 0
        %721 = vmatpush1.bf16.msra.mxu0 0
        %722 = vmatprep.subr.bf16.mxu0 0
        %723 = vmatpush1.bf16.msra.mxu0 0
        %724 = vmatprep.subr.bf16.mxu0 0
        %725 = vmatpush1.bf16.msra.mxu0 0
        %726 = vmatprep.subr.bf16.mxu0 0
        %727 = vmatpush1.bf16.msra.mxu0 0
        %728 = vmatprep.subr.bf16.mxu0 0
        %729 = vmatpush1.bf16.msra.mxu0 0
        %730 = vmatprep.subr.bf16.mxu0 0
        %731 = vmatpush1.bf16.msra.mxu0 0
        %732 = vmatprep.subr.bf16.mxu0 0
        %733 = vmatpush1.bf16.msra.mxu0 0
        %734 = vmatprep.subr.bf16.mxu0 0
        %735 = vmatpush1.bf16.msra.mxu0 0
        %736 = vmatprep.mubr.bf16.mxu0 0
        %737 = vmatmul.mubr.bf16.gmra.mrb[0].mxu0 %v702
        %v738 = vpop.f32.mrb[0].mxu0
        %v739 = vadd.f32 %v699, %v738
        %v740 = vpop.f32.mrb[0].mxu0
        %v741 = vadd.f32 %v699, %v740
        %v742 = vpop.f32.mrb[0].mxu0
        %v743 = vpop.f32.mrb[0].mxu0
        %744 = vdwg.mxu0
        %v745 = vpack.c.bf16 %v688, %v688
        %v746 = vpack.c.bf16 %v690, %v690
        %v747 = vpack.c.bf16 %v739, %v739
        %v748 = vpack.c.bf16 %v741, %v741
        %s749 = sld [smem:[#allocation8]]
        %s750 = sld [smem:[#allocation8 + $0x1]]
        %v751 = vld [vmem:[%s10] sm:$0xff]
        %v752 = vld [vmem:[%s10 + $0x8] sm:$0xff]
        %v753 = vld [vmem:[%s10 + $0x10] sm:$0xff]
        %v754 = vld [vmem:[%s10 + $0x18] sm:$0xff]
        %v755 = vld [vmem:[%s10 + $0x20] sm:$0xff]
        %v756 = vld [vmem:[%s10 + $0x28] sm:$0xff]
        %v757 = vld [vmem:[%s10 + $0x30] sm:$0xff]
        %v758 = vld [vmem:[%s10 + $0x38] sm:$0xff]
        %v759 = vld [vmem:[%s10 + $0x40] sm:$0xff]
        %v760 = vld [vmem:[%s10 + $0x48] sm:$0xff]
        %v761 = vld [vmem:[%s10 + $0x50] sm:$0xff]
        %v762 = vld [vmem:[%s10 + $0x58] sm:$0xff]
        %v763 = vld [vmem:[%s10 + $0x60] sm:$0xff]
        %v764 = vld [vmem:[%s10 + $0x68] sm:$0xff]
        %v765 = vld [vmem:[%s10 + $0x70] sm:$0xff]
        %v766 = vld [vmem:[%s10 + $0x78] sm:$0xff]
        %v767 = vld [vmem:[%s10 + $0x80] sm:$0xff]
        %v768 = vld [vmem:[%s10 + $0x88] sm:$0xff]
        %v769 = vld [vmem:[%s10 + $0x90] sm:$0xff]
        %v770 = vld [vmem:[%s10 + $0x98] sm:$0xff]
        %v771 = vld [vmem:[%s10 + $0xa0] sm:$0xff]
        %v772 = vld [vmem:[%s10 + $0xa8] sm:$0xff]
        %v773 = vld [vmem:[%s10 + $0xb0] sm:$0xff]
        %v774 = vld [vmem:[%s10 + $0xb8] sm:$0xff]
        %v775 = vld [vmem:[%s10 + $0xc0] sm:$0xff]
        %v776 = vld [vmem:[%s10 + $0xc8] sm:$0xff]
        %v777 = vld [vmem:[%s10 + $0xd0] sm:$0xff]
        %v778 = vld [vmem:[%s10 + $0xd8] sm:$0xff]
        %v779 = vld [vmem:[%s10 + $0xe0] sm:$0xff]
        %v780 = vld [vmem:[%s10 + $0xe8] sm:$0xff]
        %v781 = vld [vmem:[%s10 + $0xf0] sm:$0xff]
        %v782 = vld [vmem:[%s10 + $0xf8] sm:$0xff]
        %v815 = vunpack.c.l.b16 %v751
        %v816 = vunpack.c.h.b16 %v751
        %v817 = vunpack.c.l.b16 %v752
        %v818 = vunpack.c.h.b16 %v752
        %v819 = vunpack.c.l.b16 %v753
        %v820 = vunpack.c.h.b16 %v753
        %v821 = vunpack.c.l.b16 %v754
        %v822 = vunpack.c.h.b16 %v754
        %v823 = vunpack.c.l.b16 %v755
        %v824 = vunpack.c.h.b16 %v755
        %v825 = vunpack.c.l.b16 %v756
        %v826 = vunpack.c.h.b16 %v756
        %v827 = vunpack.c.l.b16 %v757
        %v828 = vunpack.c.h.b16 %v757
        %v829 = vunpack.c.l.b16 %v758
        %v830 = vunpack.c.h.b16 %v758
        %v831 = vunpack.c.l.b16 %v759
        %v832 = vunpack.c.h.b16 %v759
        %v833 = vunpack.c.l.b16 %v760
        %v834 = vunpack.c.h.b16 %v760
        %v835 = vunpack.c.l.b16 %v761
        %v836 = vunpack.c.h.b16 %v761
        %v837 = vunpack.c.l.b16 %v762
        %v838 = vunpack.c.h.b16 %v762
        %v839 = vunpack.c.l.b16 %v763
        %v840 = vunpack.c.h.b16 %v763
        %v841 = vunpack.c.l.b16 %v764
        %v842 = vunpack.c.h.b16 %v764
        %v843 = vunpack.c.l.b16 %v765
        %v844 = vunpack.c.h.b16 %v765
        %v845 = vunpack.c.l.b16 %v766
        %v846 = vunpack.c.h.b16 %v766
        %v847 = vunpack.c.l.b16 %v767
        %v848 = vunpack.c.h.b16 %v767
        %v849 = vunpack.c.l.b16 %v768
        %v850 = vunpack.c.h.b16 %v768
        %v851 = vunpack.c.l.b16 %v769
        %v852 = vunpack.c.h.b16 %v769
        %v853 = vunpack.c.l.b16 %v770
        %v854 = vunpack.c.h.b16 %v770
        %v855 = vunpack.c.l.b16 %v771
        %v856 = vunpack.c.h.b16 %v771
        %v857 = vunpack.c.l.b16 %v772
        %v858 = vunpack.c.h.b16 %v772
        %v859 = vunpack.c.l.b16 %v773
        %v860 = vunpack.c.h.b16 %v773
        %v861 = vunpack.c.l.b16 %v774
        %v862 = vunpack.c.h.b16 %v774
        %v863 = vunpack.c.l.b16 %v775
        %v864 = vunpack.c.h.b16 %v775
        %v865 = vunpack.c.l.b16 %v776
        %v866 = vunpack.c.h.b16 %v776
        %v867 = vunpack.c.l.b16 %v777
        %v868 = vunpack.c.h.b16 %v777
        %v869 = vunpack.c.l.b16 %v778
        %v870 = vunpack.c.h.b16 %v778
        %v871 = vunpack.c.l.b16 %v779
        %v872 = vunpack.c.h.b16 %v779
        %v873 = vunpack.c.l.b16 %v780
        %v874 = vunpack.c.h.b16 %v780
        %v875 = vunpack.c.l.b16 %v781
        %v876 = vunpack.c.h.b16 %v781
        %v877 = vunpack.c.l.b16 %v782
        %v878 = vunpack.c.h.b16 %v782
        %v879 = vpack.c.b16 %v817, %v815
        %v880 = vpack.c.b16 %v818, %v816
        %v881 = vpack.c.b16 %v821, %v819
        %v882 = vpack.c.b16 %v822, %v820
        %v883 = vpack.c.b16 %v825, %v823
        %v884 = vpack.c.b16 %v826, %v824
        %v885 = vpack.c.b16 %v829, %v827
        %v886 = vpack.c.b16 %v830, %v828
        %v887 = vpack.c.b16 %v833, %v831
        %v888 = vpack.c.b16 %v834, %v832
        %v889 = vpack.c.b16 %v837, %v835
        %v890 = vpack.c.b16 %v838, %v836
        %v891 = vpack.c.b16 %v841, %v839
        %v892 = vpack.c.b16 %v842, %v840
        %v893 = vpack.c.b16 %v845, %v843
        %v894 = vpack.c.b16 %v846, %v844
        %v895 = vpack.c.b16 %v849, %v847
        %v896 = vpack.c.b16 %v850, %v848
        %v897 = vpack.c.b16 %v853, %v851
        %v898 = vpack.c.b16 %v854, %v852
        %v899 = vpack.c.b16 %v857, %v855
        %v900 = vpack.c.b16 %v858, %v856
        %v901 = vpack.c.b16 %v861, %v859
        %v902 = vpack.c.b16 %v862, %v860
        %v903 = vpack.c.b16 %v865, %v863
        %v904 = vpack.c.b16 %v866, %v864
        %v905 = vpack.c.b16 %v869, %v867
        %v906 = vpack.c.b16 %v870, %v868
        %v907 = vpack.c.b16 %v873, %v871
        %v908 = vpack.c.b16 %v874, %v872
        %v909 = vpack.c.b16 %v877, %v875
        %v910 = vpack.c.b16 %v878, %v876
        %943 = vmatprep.subr.bf16.mxu0 %v880
        %944 = vmatpush1.bf16.msra.mxu0 %v879
        %945 = vmatprep.subr.bf16.mxu0 %v882
        %946 = vmatpush1.bf16.msra.mxu0 %v881
        %947 = vmatprep.subr.bf16.mxu0 %v884
        %948 = vmatpush1.bf16.msra.mxu0 %v883
        %949 = vmatprep.subr.bf16.mxu0 %v886
        %950 = vmatpush1.bf16.msra.mxu0 %v885
        %951 = vmatprep.subr.bf16.mxu0 %v888
        %952 = vmatpush1.bf16.msra.mxu0 %v887
        %953 = vmatprep.subr.bf16.mxu0 %v890
        %954 = vmatpush1.bf16.msra.mxu0 %v889
        %955 = vmatprep.subr.bf16.mxu0 %v892
        %956 = vmatpush1.bf16.msra.mxu0 %v891
        %957 = vmatprep.subr.bf16.mxu0 %v894
        %958 = vmatpush1.bf16.msra.mxu0 %v893
        %959 = vmatprep.subr.bf16.mxu0 %v896
        %960 = vmatpush1.bf16.msra.mxu0 %v895
        %961 = vmatprep.subr.bf16.mxu0 %v898
        %962 = vmatpush1.bf16.msra.mxu0 %v897
        %963 = vmatprep.subr.bf16.mxu0 %v900
        %964 = vmatpush1.bf16.msra.mxu0 %v899
        %965 = vmatprep.subr.bf16.mxu0 %v902
        %966 = vmatpush1.bf16.msra.mxu0 %v901
        %967 = vmatprep.subr.bf16.mxu0 %v904
        %968 = vmatpush1.bf16.msra.mxu0 %v903
        %969 = vmatprep.subr.bf16.mxu0 %v906
        %970 = vmatpush1.bf16.msra.mxu0 %v905
        %971 = vmatprep.subr.bf16.mxu0 %v908
        %972 = vmatpush1.bf16.msra.mxu0 %v907
        %973 = vmatprep.subr.bf16.mxu0 %v910
        %974 = vmatpush1.bf16.msra.mxu0 %v909
        %975 = vmatprep.mubr.bf16.mxu0 %v748
        %976 = vmatmul.mubr.bf16.gmra.mrb[0].mxu0 %v747
        %v977 = vpop.f32.mrb[0].mxu0
        %v978 = vadd.f32 0.0, %v977
        %v979 = vpop.f32.mrb[0].mxu0
        %v980 = vadd.f32 0.0, %v979
        %v981 = vpop.f32.mrb[0].mxu0
        %v982 = vpop.f32.mrb[0].mxu0
        %983 = vdwg.mxu0
        %v984 = vpack.c.bf16 %v978, %v978
        %v985 = vpack.c.bf16 %v980, %v980
        %v986 = vld [vmem:[%s11] sm:$0xff]
        %v987 = vld [vmem:[%s11 + $0x8] sm:$0xff]
        %v988 = vld [vmem:[%s11 + $0x10] sm:$0xff]
        %v989 = vld [vmem:[%s11 + $0x18] sm:$0xff]
        %v990 = vld [vmem:[%s11 + $0x20] sm:$0xff]
        %v991 = vld [vmem:[%s11 + $0x28] sm:$0xff]
        %v992 = vld [vmem:[%s11 + $0x30] sm:$0xff]
        %v993 = vld [vmem:[%s11 + $0x38] sm:$0xff]
        %v994 = vld [vmem:[%s11 + $0x40] sm:$0xff]
        %v995 = vld [vmem:[%s11 + $0x48] sm:$0xff]
        %v996 = vld [vmem:[%s11 + $0x50] sm:$0xff]
        %v997 = vld [vmem:[%s11 + $0x58] sm:$0xff]
        %v998 = vld [vmem:[%s11 + $0x60] sm:$0xff]
        %v999 = vld [vmem:[%s11 + $0x68] sm:$0xff]
        %v1000 = vld [vmem:[%s11 + $0x70] sm:$0xff]
        %v1001 = vld [vmem:[%s11 + $0x78] sm:$0xff]
        %v1002 = vld [vmem:[%s11 + $0x80] sm:$0xff]
        %v1003 = vld [vmem:[%s11 + $0x88] sm:$0xff]
        %v1004 = vld [vmem:[%s11 + $0x90] sm:$0xff]
        %v1005 = vld [vmem:[%s11 + $0x98] sm:$0xff]
        %v1006 = vld [vmem:[%s11 + $0xa0] sm:$0xff]
        %v1007 = vld [vmem:[%s11 + $0xa8] sm:$0xff]
        %v1008 = vld [vmem:[%s11 + $0xb0] sm:$0xff]
        %v1009 = vld [vmem:[%s11 + $0xb8] sm:$0xff]
        %v1010 = vld [vmem:[%s11 + $0xc0] sm:$0xff]
        %v1011 = vld [vmem:[%s11 + $0xc8] sm:$0xff]
        %v1012 = vld [vmem:[%s11 + $0xd0] sm:$0xff]
        %v1013 = vld [vmem:[%s11 + $0xd8] sm:$0xff]
        %v1014 = vld [vmem:[%s11 + $0xe0] sm:$0xff]
        %v1015 = vld [vmem:[%s11 + $0xe8] sm:$0xff]
        %v1016 = vld [vmem:[%s11 + $0xf0] sm:$0xff]
        %v1017 = vld [vmem:[%s11 + $0xf8] sm:$0xff]
        %1019 = vset.pattern.permute.xlu0 0
        %1020 = vperm.xlu0 %1019, %v986
        %v1021 = vpop.permute.xlu0 %1020
        %1024 = vset.pattern.permute.xlu0 0
        %1025 = vperm.xlu0 %1024, %v987
        %v1026 = vpop.permute.xlu0 %1025
        %1029 = vset.pattern.permute.xlu0 0
        %1030 = vperm.xlu0 %1029, %v988
        %v1031 = vpop.permute.xlu0 %1030
        %1034 = vset.pattern.permute.xlu0 0
        %1035 = vperm.xlu0 %1034, %v989
        %v1036 = vpop.permute.xlu0 %1035
        %1039 = vset.pattern.permute.xlu0 0
        %1040 = vperm.xlu0 %1039, %v990
        %v1041 = vpop.permute.xlu0 %1040
        %1044 = vset.pattern.permute.xlu0 0
        %1045 = vperm.xlu0 %1044, %v991
        %v1046 = vpop.permute.xlu0 %1045
        %1049 = vset.pattern.permute.xlu0 0
        %1050 = vperm.xlu0 %1049, %v992
        %v1051 = vpop.permute.xlu0 %1050
        %1054 = vset.pattern.permute.xlu0 0
        %1055 = vperm.xlu0 %1054, %v993
        %v1056 = vpop.permute.xlu0 %1055
        %1059 = vset.pattern.permute.xlu0 0
        %1060 = vperm.xlu0 %1059, %v994
        %v1061 = vpop.permute.xlu0 %1060
        %1064 = vset.pattern.permute.xlu0 0
        %1065 = vperm.xlu0 %1064, %v995
        %v1066 = vpop.permute.xlu0 %1065
        %1069 = vset.pattern.permute.xlu0 0
        %1070 = vperm.xlu0 %1069, %v996
        %v1071 = vpop.permute.xlu0 %1070
        %1074 = vset.pattern.permute.xlu0 0
        %1075 = vperm.xlu0 %1074, %v997
        %v1076 = vpop.permute.xlu0 %1075
        %1079 = vset.pattern.permute.xlu0 0
        %1080 = vperm.xlu0 %1079, %v998
        %v1081 = vpop.permute.xlu0 %1080
        %1084 = vset.pattern.permute.xlu0 0
        %1085 = vperm.xlu0 %1084, %v999
        %v1086 = vpop.permute.xlu0 %1085
        %1089 = vset.pattern.permute.xlu0 0
        %1090 = vperm.xlu0 %1089, %v1000
        %v1091 = vpop.permute.xlu0 %1090
        %1094 = vset.pattern.permute.xlu0 0
        %1095 = vperm.xlu0 %1094, %v1001
        %v1096 = vpop.permute.xlu0 %1095
        %1099 = vset.pattern.permute.xlu0 0
        %1100 = vperm.xlu0 %1099, %v1002
        %v1101 = vpop.permute.xlu0 %1100
        %1104 = vset.pattern.permute.xlu0 0
        %1105 = vperm.xlu0 %1104, %v1003
        %v1106 = vpop.permute.xlu0 %1105
        %1109 = vset.pattern.permute.xlu0 0
        %1110 = vperm.xlu0 %1109, %v1004
        %v1111 = vpop.permute.xlu0 %1110
        %1114 = vset.pattern.permute.xlu0 0
        %1115 = vperm.xlu0 %1114, %v1005
        %v1116 = vpop.permute.xlu0 %1115
        %1119 = vset.pattern.permute.xlu0 0
        %1120 = vperm.xlu0 %1119, %v1006
        %v1121 = vpop.permute.xlu0 %1120
        %1124 = vset.pattern.permute.xlu0 0
        %1125 = vperm.xlu0 %1124, %v1007
        %v1126 = vpop.permute.xlu0 %1125
        %1129 = vset.pattern.permute.xlu0 0
        %1130 = vperm.xlu0 %1129, %v1008
        %v1131 = vpop.permute.xlu0 %1130
        %1134 = vset.pattern.permute.xlu0 0
        %1135 = vperm.xlu0 %1134, %v1009
        %v1136 = vpop.permute.xlu0 %1135
        %1139 = vset.pattern.permute.xlu0 0
        %1140 = vperm.xlu0 %1139, %v1010
        %v1141 = vpop.permute.xlu0 %1140
        %1144 = vset.pattern.permute.xlu0 0
        %1145 = vperm.xlu0 %1144, %v1011
        %v1146 = vpop.permute.xlu0 %1145
        %1149 = vset.pattern.permute.xlu0 0
        %1150 = vperm.xlu0 %1149, %v1012
        %v1151 = vpop.permute.xlu0 %1150
        %1154 = vset.pattern.permute.xlu0 0
        %1155 = vperm.xlu0 %1154, %v1013
        %v1156 = vpop.permute.xlu0 %1155
        %1159 = vset.pattern.permute.xlu0 0
        %1160 = vperm.xlu0 %1159, %v1014
        %v1161 = vpop.permute.xlu0 %1160
        %1164 = vset.pattern.permute.xlu0 0
        %1165 = vperm.xlu0 %1164, %v1015
        %v1166 = vpop.permute.xlu0 %1165
        %1169 = vset.pattern.permute.xlu0 0
        %1170 = vperm.xlu0 %1169, %v1016
        %v1171 = vpop.permute.xlu0 %1170
        %1174 = vset.pattern.permute.xlu0 0
        %1175 = vperm.xlu0 %1174, %v1017
        %v1176 = vpop.permute.xlu0 %1175
        %1178 = vxpose.xlu0.c.b16.start [1/8] %v984, 128
        %1179 = vxpose.xlu0.c.b16.cont [2/8] 0, 128
        %1180 = vxpose.xlu0.c.b16.cont [3/8] 0, 128
        %1181 = vxpose.xlu0.c.b16.cont [4/8] 0, 128
        %1182 = vxpose.xlu0.c.b16.cont [5/8] 0, 128
        %1183 = vxpose.xlu0.c.b16.cont [6/8] 0, 128
        %1184 = vxpose.xlu0.c.b16.cont [7/8] 0, 128
        %1185 = vxpose.xlu0.c.b16.end [8/8] 0, 128
        %v1186 = vpop.trf.xlu0
        %v1187 = vpop.trf.xlu0
        %v1188 = vpop.trf.xlu0
        %v1189 = vpop.trf.xlu0
        %v1190 = vpop.trf.xlu0
        %v1191 = vpop.trf.xlu0
        %v1192 = vpop.trf.xlu0
        %v1193 = vpop.trf.xlu0
        %1194 = vxpose.xlu0.c.b16.start [1/8] %v985, 128
        %1195 = vxpose.xlu0.c.b16.cont [2/8] 0, 128
        %1196 = vxpose.xlu0.c.b16.cont [3/8] 0, 128
        %1197 = vxpose.xlu0.c.b16.cont [4/8] 0, 128
        %1198 = vxpose.xlu0.c.b16.cont [5/8] 0, 128
        %1199 = vxpose.xlu0.c.b16.cont [6/8] 0, 128
        %1200 = vxpose.xlu0.c.b16.cont [7/8] 0, 128
        %1201 = vxpose.xlu0.c.b16.end [8/8] 0, 128
        %v1202 = vpop.trf.xlu0
        %v1203 = vpop.trf.xlu0
        %v1204 = vpop.trf.xlu0
        %v1205 = vpop.trf.xlu0
        %v1206 = vpop.trf.xlu0
        %v1207 = vpop.trf.xlu0
        %v1208 = vpop.trf.xlu0
        %v1209 = vpop.trf.xlu0
        %vm1210 = vcmask 64512
        %v1212 = vsel %vm1210, %v1186, 0
        %v1215 = vsel %vm1210, %v1187, 0
        %v1218 = vsel %vm1210, %v1188, 0
        %v1221 = vsel %vm1210, %v1189, 0
        %v1224 = vsel %vm1210, %v1190, 0
        %v1227 = vsel %vm1210, %v1191, 0
        %v1230 = vsel %vm1210, %v1192, 0
        %v1233 = vsel %vm1210, %v1193, 0
        %v1236 = vsel %vm1210, %v1202, 0
        %v1239 = vsel %vm1210, %v1203, 0
        %v1242 = vsel %vm1210, %v1204, 0
        %v1245 = vsel %vm1210, %v1205, 0
        %v1248 = vsel %vm1210, %v1206, 0
        %v1251 = vsel %vm1210, %v1207, 0
        %v1254 = vsel %vm1210, %v1208, 0
        %v1257 = vsel %vm1210, %v1209, 0
        %vm1259 = vcmask 1043456
        %v1261 = vsel %vm1259, %v745, 0
        %v1264 = vsel %vm1259, %v746, 0
        %1266 = vmatprep.subr.bf16.mxu0 %v1264
        %1267 = vmatpush1.bf16.msra.mxu0 %v1261
        %1268 = vmatprep.subr.bf16.mxu0 0
        %1269 = vmatpush1.bf16.msra.mxu0 0
        %1270 = vmatprep.subr.bf16.mxu0 0
        %1271 = vmatpush1.bf16.msra.mxu0 0
        %1272 = vmatprep.subr.bf16.mxu0 0
        %1273 = vmatpush1.bf16.msra.mxu0 0
        %1274 = vmatprep.subr.bf16.mxu0 0
        %1275 = vmatpush1.bf16.msra.mxu0 0
        %1276 = vmatprep.subr.bf16.mxu0 0
        %1277 = vmatpush1.bf16.msra.mxu0 0
        %1278 = vmatprep.subr.bf16.mxu0 0
        %1279 = vmatpush1.bf16.msra.mxu0 0
        %1280 = vmatprep.subr.bf16.mxu0 0
        %1281 = vmatpush1.bf16.msra.mxu0 0
        %1282 = vmatprep.subr.bf16.mxu0 0
        %1283 = vmatpush1.bf16.msra.mxu0 0
        %1284 = vmatprep.subr.bf16.mxu0 0
        %1285 = vmatpush1.bf16.msra.mxu0 0
        %1286 = vmatprep.subr.bf16.mxu0 0
        %1287 = vmatpush1.bf16.msra.mxu0 0
        %1288 = vmatprep.subr.bf16.mxu0 0
        %1289 = vmatpush1.bf16.msra.mxu0 0
        %1290 = vmatprep.subr.bf16.mxu0 0
        %1291 = vmatpush1.bf16.msra.mxu0 0
        %1292 = vmatprep.subr.bf16.mxu0 0
        %1293 = vmatpush1.bf16.msra.mxu0 0
        %1294 = vmatprep.subr.bf16.mxu0 0
        %1295 = vmatpush1.bf16.msra.mxu0 0
        %1296 = vmatprep.subr.bf16.mxu0 0
        %1297 = vmatpush1.bf16.msra.mxu0 0
        %1298 = vmatprep.mubr.bf16.mxu0 0
        %1299 = vmatmul.mubr.bf16.gmra.mrb[0].mxu0 %v1212
        %v1300 = vpop.f32.mrb[0].mxu0
        %v1301 = vadd.f32 %v1021, %v1300
        %v1302 = vpop.f32.mrb[0].mxu0
        %v1303 = vadd.f32 %v1021, %v1302
        %v1304 = vpop.f32.mrb[0].mxu0
        %v1305 = vadd.f32 %v1026, %v1304
        %v1306 = vpop.f32.mrb[0].mxu0
        %v1307 = vadd.f32 %v1026, %v1306
        %1308 = vmatprep.mubr.bf16.mxu0 0
        %1309 = vmatmul.mubr.bf16.gmra.mrb[0].mxu0 %v1215
        %v1310 = vpop.f32.mrb[0].mxu0
        %v1311 = vadd.f32 %v1031, %v1310
        %v1312 = vpop.f32.mrb[0].mxu0
        %v1313 = vadd.f32 %v1031, %v1312
        %v1314 = vpop.f32.mrb[0].mxu0
        %v1315 = vadd.f32 %v1036, %v1314
        %v1316 = vpop.f32.mrb[0].mxu0
        %v1317 = vadd.f32 %v1036, %v1316
        %1318 = vmatprep.mubr.bf16.mxu0 0
        %1319 = vmatmul.mubr.bf16.gmra.mrb[0].mxu0 %v1218
        %v1320 = vpop.f32.mrb[0].mxu0
        %v1321 = vadd.f32 %v1041, %v1320
        %v1322 = vpop.f32.mrb[0].mxu0
        %v1323 = vadd.f32 %v1041, %v1322
        %v1324 = vpop.f32.mrb[0].mxu0
        %v1325 = vadd.f32 %v1046, %v1324
        %v1326 = vpop.f32.mrb[0].mxu0
        %v1327 = vadd.f32 %v1046, %v1326
        %1328 = vmatprep.mubr.bf16.mxu0 0
        %1329 = vmatmul.mubr.bf16.gmra.mrb[0].mxu0 %v1221
        %v1330 = vpop.f32.mrb[0].mxu0
        %v1331 = vadd.f32 %v1051, %v1330
        %v1332 = vpop.f32.mrb[0].mxu0
        %v1333 = vadd.f32 %v1051, %v1332
        %v1334 = vpop.f32.mrb[0].mxu0
        %v1335 = vadd.f32 %v1056, %v1334
        %v1336 = vpop.f32.mrb[0].mxu0
        %v1337 = vadd.f32 %v1056, %v1336
        %1338 = vmatprep.mubr.bf16.mxu0 0
        %1339 = vmatmul.mubr.bf16.gmra.mrb[0].mxu0 %v1224
        %v1340 = vpop.f32.mrb[0].mxu0
        %v1341 = vadd.f32 %v1061, %v1340
        %v1342 = vpop.f32.mrb[0].mxu0
        %v1343 = vadd.f32 %v1061, %v1342
        %v1344 = vpop.f32.mrb[0].mxu0
        %v1345 = vadd.f32 %v1066, %v1344
        %v1346 = vpop.f32.mrb[0].mxu0
        %v1347 = vadd.f32 %v1066, %v1346
        %1348 = vmatprep.mubr.bf16.mxu0 0
        %1349 = vmatmul.mubr.bf16.gmra.mrb[0].mxu0 %v1227
        %v1350 = vpop.f32.mrb[0].mxu0
        %v1351 = vadd.f32 %v1071, %v1350
        %v1352 = vpop.f32.mrb[0].mxu0
        %v1353 = vadd.f32 %v1071, %v1352
        %v1354 = vpop.f32.mrb[0].mxu0
        %v1355 = vadd.f32 %v1076, %v1354
        %v1356 = vpop.f32.mrb[0].mxu0
        %v1357 = vadd.f32 %v1076, %v1356
        %1358 = vmatprep.mubr.bf16.mxu0 0
        %1359 = vmatmul.mubr.bf16.gmra.mrb[0].mxu0 %v1230
        %v1360 = vpop.f32.mrb[0].mxu0
        %v1361 = vadd.f32 %v1081, %v1360
        %v1362 = vpop.f32.mrb[0].mxu0
        %v1363 = vadd.f32 %v1081, %v1362
        %v1364 = vpop.f32.mrb[0].mxu0
        %v1365 = vadd.f32 %v1086, %v1364
        %v1366 = vpop.f32.mrb[0].mxu0
        %v1367 = vadd.f32 %v1086, %v1366
        %1368 = vmatprep.mubr.bf16.mxu0 0
        %1369 = vmatmul.mubr.bf16.gmra.mrb[0].mxu0 %v1233
        %v1370 = vpop.f32.mrb[0].mxu0
        %v1371 = vadd.f32 %v1091, %v1370
        %v1372 = vpop.f32.mrb[0].mxu0
        %v1373 = vadd.f32 %v1091, %v1372
        %v1374 = vpop.f32.mrb[0].mxu0
        %v1375 = vadd.f32 %v1096, %v1374
        %v1376 = vpop.f32.mrb[0].mxu0
        %v1377 = vadd.f32 %v1096, %v1376
        %1378 = vmatprep.mubr.bf16.mxu0 0
        %1379 = vmatmul.mubr.bf16.gmra.mrb[0].mxu0 %v1236
        %v1380 = vpop.f32.mrb[0].mxu0
        %v1381 = vadd.f32 %v1101, %v1380
        %v1382 = vpop.f32.mrb[0].mxu0
        %v1383 = vadd.f32 %v1101, %v1382
        %v1384 = vpop.f32.mrb[0].mxu0
        %v1385 = vadd.f32 %v1106, %v1384
        %v1386 = vpop.f32.mrb[0].mxu0
        %v1387 = vadd.f32 %v1106, %v1386
        %1388 = vmatprep.mubr.bf16.mxu0 0
        %1389 = vmatmul.mubr.bf16.gmra.mrb[0].mxu0 %v1239
        %v1390 = vpop.f32.mrb[0].mxu0
        %v1391 = vadd.f32 %v1111, %v1390
        %v1392 = vpop.f32.mrb[0].mxu0
        %v1393 = vadd.f32 %v1111, %v1392
        %v1394 = vpop.f32.mrb[0].mxu0
        %v1395 = vadd.f32 %v1116, %v1394
        %v1396 = vpop.f32.mrb[0].mxu0
        %v1397 = vadd.f32 %v1116, %v1396
        %1398 = vmatprep.mubr.bf16.mxu0 0
        %1399 = vmatmul.mubr.bf16.gmra.mrb[0].mxu0 %v1242
        %v1400 = vpop.f32.mrb[0].mxu0
        %v1401 = vadd.f32 %v1121, %v1400
        %v1402 = vpop.f32.mrb[0].mxu0
        %v1403 = vadd.f32 %v1121, %v1402
        %v1404 = vpop.f32.mrb[0].mxu0
        %v1405 = vadd.f32 %v1126, %v1404
        %v1406 = vpop.f32.mrb[0].mxu0
        %v1407 = vadd.f32 %v1126, %v1406
        %1408 = vmatprep.mubr.bf16.mxu0 0
        %1409 = vmatmul.mubr.bf16.gmra.mrb[0].mxu0 %v1245
        %v1410 = vpop.f32.mrb[0].mxu0
        %v1411 = vadd.f32 %v1131, %v1410
        %v1412 = vpop.f32.mrb[0].mxu0
        %v1413 = vadd.f32 %v1131, %v1412
        %v1414 = vpop.f32.mrb[0].mxu0
        %v1415 = vadd.f32 %v1136, %v1414
        %v1416 = vpop.f32.mrb[0].mxu0
        %v1417 = vadd.f32 %v1136, %v1416
        %1418 = vmatprep.mubr.bf16.mxu0 0
        %1419 = vmatmul.mubr.bf16.gmra.mrb[0].mxu0 %v1248
        %v1420 = vpop.f32.mrb[0].mxu0
        %v1421 = vadd.f32 %v1141, %v1420
        %v1422 = vpop.f32.mrb[0].mxu0
        %v1423 = vadd.f32 %v1141, %v1422
        %v1424 = vpop.f32.mrb[0].mxu0
        %v1425 = vadd.f32 %v1146, %v1424
        %v1426 = vpop.f32.mrb[0].mxu0
        %v1427 = vadd.f32 %v1146, %v1426
        %1428 = vmatprep.mubr.bf16.mxu0 0
        %1429 = vmatmul.mubr.bf16.gmra.mrb[0].mxu0 %v1251
        %v1430 = vpop.f32.mrb[0].mxu0
        %v1431 = vadd.f32 %v1151, %v1430
        %v1432 = vpop.f32.mrb[0].mxu0
        %v1433 = vadd.f32 %v1151, %v1432
        %v1434 = vpop.f32.mrb[0].mxu0
        %v1435 = vadd.f32 %v1156, %v1434
        %v1436 = vpop.f32.mrb[0].mxu0
        %v1437 = vadd.f32 %v1156, %v1436
        %1438 = vmatprep.mubr.bf16.mxu0 0
        %1439 = vmatmul.mubr.bf16.gmra.mrb[0].mxu0 %v1254
        %v1440 = vpop.f32.mrb[0].mxu0
        %v1441 = vadd.f32 %v1161, %v1440
        %v1442 = vpop.f32.mrb[0].mxu0
        %v1443 = vadd.f32 %v1161, %v1442
        %v1444 = vpop.f32.mrb[0].mxu0
        %v1445 = vadd.f32 %v1166, %v1444
        %v1446 = vpop.f32.mrb[0].mxu0
        %v1447 = vadd.f32 %v1166, %v1446
        %1448 = vmatprep.mubr.bf16.mxu0 0
        %1449 = vmatmul.mubr.bf16.gmra.mrb[0].mxu0 %v1257
        %v1450 = vpop.f32.mrb[0].mxu0
        %v1451 = vadd.f32 %v1171, %v1450
        %v1452 = vpop.f32.mrb[0].mxu0
        %v1453 = vadd.f32 %v1171, %v1452
        %v1454 = vpop.f32.mrb[0].mxu0
        %v1455 = vadd.f32 %v1176, %v1454
        %v1456 = vpop.f32.mrb[0].mxu0
        %v1457 = vadd.f32 %v1176, %v1456
        %1458 = vdwg.mxu0
        %v1459 = vmax.f32 %v1301, %v1311
        %v1460 = vmax.f32 %v1305, %v1315
        %v1461 = vmax.f32 %v1459, %v1321
        %v1462 = vmax.f32 %v1460, %v1325
        %v1463 = vmax.f32 %v1461, %v1331
        %v1464 = vmax.f32 %v1462, %v1335
        %v1465 = vmax.f32 %v1463, %v1341
        %v1466 = vmax.f32 %v1464, %v1345
        %v1467 = vmax.f32 %v1465, %v1351
        %v1468 = vmax.f32 %v1466, %v1355
        %v1469 = vmax.f32 %v1467, %v1361
        %v1470 = vmax.f32 %v1468, %v1365
        %v1471 = vmax.f32 %v1469, %v1371
        %v1472 = vmax.f32 %v1470, %v1375
        %v1473 = vmax.f32 %v1471, %v1381
        %v1474 = vmax.f32 %v1472, %v1385
        %v1475 = vmax.f32 %v1473, %v1391
        %v1476 = vmax.f32 %v1474, %v1395
        %v1477 = vmax.f32 %v1475, %v1401
        %v1478 = vmax.f32 %v1476, %v1405
        %v1479 = vmax.f32 %v1477, %v1411
        %v1480 = vmax.f32 %v1478, %v1415
        %v1481 = vmax.f32 %v1479, %v1421
        %v1482 = vmax.f32 %v1480, %v1425
        %v1483 = vmax.f32 %v1481, %v1431
        %v1484 = vmax.f32 %v1482, %v1435
        %v1485 = vmax.f32 %v1483, %v1441
        %v1486 = vmax.f32 %v1484, %v1445
        %v1487 = vmax.f32 %v1485, %v1451
        %v1488 = vmax.f32 %v1486, %v1455
        %v1489 = vmax.f32 %v1487, %v1488
        %v1490 = vrot.slane %v1489, 4
        %v1491 = vmax.f32 %v1489, %v1490
        %v1492 = vrot.slane %v1491, 2
        %v1493 = vmax.f32 %v1491, %v1492
        %v1494 = vrot.slane %v1493, 1
        %v1495 = vmax.f32 %v1493, %v1494
        %v1496 = vmax.f32 %v1303, %v1313
        %v1497 = vmax.f32 %v1307, %v1317
        %v1498 = vmax.f32 %v1496, %v1323
        %v1499 = vmax.f32 %v1497, %v1327
        %v1500 = vmax.f32 %v1498, %v1333
        %v1501 = vmax.f32 %v1499, %v1337
        %v1502 = vmax.f32 %v1500, %v1343
        %v1503 = vmax.f32 %v1501, %v1347
        %v1504 = vmax.f32 %v1502, %v1353
        %v1505 = vmax.f32 %v1503, %v1357
        %v1506 = vmax.f32 %v1504, %v1363
        %v1507 = vmax.f32 %v1505, %v1367
        %v1508 = vmax.f32 %v1506, %v1373
        %v1509 = vmax.f32 %v1507, %v1377
        %v1510 = vmax.f32 %v1508, %v1383
        %v1511 = vmax.f32 %v1509, %v1387
        %v1512 = vmax.f32 %v1510, %v1393
        %v1513 = vmax.f32 %v1511, %v1397
        %v1514 = vmax.f32 %v1512, %v1403
        %v1515 = vmax.f32 %v1513, %v1407
        %v1516 = vmax.f32 %v1514, %v1413
        %v1517 = vmax.f32 %v1515, %v1417
        %v1518 = vmax.f32 %v1516, %v1423
        %v1519 = vmax.f32 %v1517, %v1427
        %v1520 = vmax.f32 %v1518, %v1433
        %v1521 = vmax.f32 %v1519, %v1437
        %v1522 = vmax.f32 %v1520, %v1443
        %v1523 = vmax.f32 %v1521, %v1447
        %v1524 = vmax.f32 %v1522, %v1453
        %v1525 = vmax.f32 %v1523, %v1457
        %v1526 = vmax.f32 %v1524, %v1525
        %v1527 = vrot.slane %v1526, 4
        %v1528 = vmax.f32 %v1526, %v1527
        %v1529 = vrot.slane %v1528, 2
        %v1530 = vmax.f32 %v1528, %v1529
        %v1531 = vrot.slane %v1530, 1
        %v1532 = vmax.f32 %v1530, %v1531
        %v1533 = vsub.f32 %v1301, %v1495
        %v1534 = vsub.f32 %v1303, %v1532
        %v1535 = vsub.f32 %v1305, %v1495
        %v1536 = vsub.f32 %v1307, %v1532
        %v1537 = vsub.f32 %v1311, %v1495
        %v1538 = vsub.f32 %v1313, %v1532
        %v1539 = vsub.f32 %v1315, %v1495
        %v1540 = vsub.f32 %v1317, %v1532
        %v1541 = vsub.f32 %v1321, %v1495
        %v1542 = vsub.f32 %v1323, %v1532
        %v1543 = vsub.f32 %v1325, %v1495
        %v1544 = vsub.f32 %v1327, %v1532
        %v1545 = vsub.f32 %v1331, %v1495
        %v1546 = vsub.f32 %v1333, %v1532
        %v1547 = vsub.f32 %v1335, %v1495
        %v1548 = vsub.f32 %v1337, %v1532
        %v1549 = vsub.f32 %v1341, %v1495
        %v1550 = vsub.f32 %v1343, %v1532
        %v1551 = vsub.f32 %v1345, %v1495
        %v1552 = vsub.f32 %v1347, %v1532
        %v1553 = vsub.f32 %v1351, %v1495
        %v1554 = vsub.f32 %v1353, %v1532
        %v1555 = vsub.f32 %v1355, %v1495
        %v1556 = vsub.f32 %v1357, %v1532
        %v1557 = vsub.f32 %v1361, %v1495
        %v1558 = vsub.f32 %v1363, %v1532
        %v1559 = vsub.f32 %v1365, %v1495
        %v1560 = vsub.f32 %v1367, %v1532
        %v1561 = vsub.f32 %v1371, %v1495
        %v1562 = vsub.f32 %v1373, %v1532
        %v1563 = vsub.f32 %v1375, %v1495
        %v1564 = vsub.f32 %v1377, %v1532
        %v1565 = vsub.f32 %v1381, %v1495
        %v1566 = vsub.f32 %v1383, %v1532
        %v1567 = vsub.f32 %v1385, %v1495
        %v1568 = vsub.f32 %v1387, %v1532
        %v1569 = vsub.f32 %v1391, %v1495
        %v1570 = vsub.f32 %v1393, %v1532
        %v1571 = vsub.f32 %v1395, %v1495
        %v1572 = vsub.f32 %v1397, %v1532
        %v1573 = vsub.f32 %v1401, %v1495
        %v1574 = vsub.f32 %v1403, %v1532
        %v1575 = vsub.f32 %v1405, %v1495
        %v1576 = vsub.f32 %v1407, %v1532
        %v1577 = vsub.f32 %v1411, %v1495
        %v1578 = vsub.f32 %v1413, %v1532
        %v1579 = vsub.f32 %v1415, %v1495
        %v1580 = vsub.f32 %v1417, %v1532
        %v1581 = vsub.f32 %v1421, %v1495
        %v1582 = vsub.f32 %v1423, %v1532
        %v1583 = vsub.f32 %v1425, %v1495
        %v1584 = vsub.f32 %v1427, %v1532
        %v1585 = vsub.f32 %v1431, %v1495
        %v1586 = vsub.f32 %v1433, %v1532
        %v1587 = vsub.f32 %v1435, %v1495
        %v1588 = vsub.f32 %v1437, %v1532
        %v1589 = vsub.f32 %v1441, %v1495
        %v1590 = vsub.f32 %v1443, %v1532
        %v1591 = vsub.f32 %v1445, %v1495
        %v1592 = vsub.f32 %v1447, %v1532
        %v1593 = vsub.f32 %v1451, %v1495
        %v1594 = vsub.f32 %v1453, %v1532
        %v1595 = vsub.f32 %v1455, %v1495
        %v1596 = vsub.f32 %v1457, %v1532
        %v1597 = vmul.f32 %v1533, 1.442695
        %v1598 = vpow.pop %v1597
        %v1599 = vmul.f32 %v1534, 1.442695
        %v1600 = vpow.pop %v1599
        %v1601 = vmul.f32 %v1535, 1.442695
        %v1602 = vpow.pop %v1601
        %v1603 = vmul.f32 %v1536, 1.442695
        %v1604 = vpow.pop %v1603
        %v1605 = vmul.f32 %v1537, 1.442695
        %v1606 = vpow.pop %v1605
        %v1607 = vmul.f32 %v1538, 1.442695
        %v1608 = vpow.pop %v1607
        %v1609 = vmul.f32 %v1539, 1.442695
        %v1610 = vpow.pop %v1609
        %v1611 = vmul.f32 %v1540, 1.442695
        %v1612 = vpow.pop %v1611
        %v1613 = vmul.f32 %v1541, 1.442695
        %v1614 = vpow.pop %v1613
        %v1615 = vmul.f32 %v1542, 1.442695
        %v1616 = vpow.pop %v1615
        %v1617 = vmul.f32 %v1543, 1.442695
        %v1618 = vpow.pop %v1617
        %v1619 = vmul.f32 %v1544, 1.442695
        %v1620 = vpow.pop %v1619
        %v1621 = vmul.f32 %v1545, 1.442695
        %v1622 = vpow.pop %v1621
        %v1623 = vmul.f32 %v1546, 1.442695
        %v1624 = vpow.pop %v1623
        %v1625 = vmul.f32 %v1547, 1.442695
        %v1626 = vpow.pop %v1625
        %v1627 = vmul.f32 %v1548, 1.442695
        %v1628 = vpow.pop %v1627
        %v1629 = vmul.f32 %v1549, 1.442695
        %v1630 = vpow.pop %v1629
        %v1631 = vmul.f32 %v1550, 1.442695
        %v1632 = vpow.pop %v1631
        %v1633 = vmul.f32 %v1551, 1.442695
        %v1634 = vpow.pop %v1633
        %v1635 = vmul.f32 %v1552, 1.442695
        %v1636 = vpow.pop %v1635
        %v1637 = vmul.f32 %v1553, 1.442695
        %v1638 = vpow.pop %v1637
        %v1639 = vmul.f32 %v1554, 1.442695
        %v1640 = vpow.pop %v1639
        %v1641 = vmul.f32 %v1555, 1.442695
        %v1642 = vpow.pop %v1641
        %v1643 = vmul.f32 %v1556, 1.442695
        %v1644 = vpow.pop %v1643
        %v1645 = vmul.f32 %v1557, 1.442695
        %v1646 = vpow.pop %v1645
        %v1647 = vmul.f32 %v1558, 1.442695
        %v1648 = vpow.pop %v1647
        %v1649 = vmul.f32 %v1559, 1.442695
        %v1650 = vpow.pop %v1649
        %v1651 = vmul.f32 %v1560, 1.442695
        %v1652 = vpow.pop %v1651
        %v1653 = vmul.f32 %v1561, 1.442695
        %v1654 = vpow.pop %v1653
        %v1655 = vmul.f32 %v1562, 1.442695
        %v1656 = vpow.pop %v1655
        %v1657 = vmul.f32 %v1563, 1.442695
        %v1658 = vpow.pop %v1657
        %v1659 = vmul.f32 %v1564, 1.442695
        %v1660 = vpow.pop %v1659
        %v1661 = vmul.f32 %v1565, 1.442695
        %v1662 = vpow.pop %v1661
        %v1663 = vmul.f32 %v1566, 1.442695
        %v1664 = vpow.pop %v1663
        %v1665 = vmul.f32 %v1567, 1.442695
        %v1666 = vpow.pop %v1665
        %v1667 = vmul.f32 %v1568, 1.442695
        %v1668 = vpow.pop %v1667
        %v1669 = vmul.f32 %v1569, 1.442695
        %v1670 = vpow.pop %v1669
        %v1671 = vmul.f32 %v1570, 1.442695
        %v1672 = vpow.pop %v1671
        %v1673 = vmul.f32 %v1571, 1.442695
        %v1674 = vpow.pop %v1673
        %v1675 = vmul.f32 %v1572, 1.442695
        %v1676 = vpow.pop %v1675
        %v1677 = vmul.f32 %v1573, 1.442695
        %v1678 = vpow.pop %v1677
        %v1679 = vmul.f32 %v1574, 1.442695
        %v1680 = vpow.pop %v1679
        %v1681 = vmul.f32 %v1575, 1.442695
        %v1682 = vpow.pop %v1681
        %v1683 = vmul.f32 %v1576, 1.442695
        %v1684 = vpow.pop %v1683
        %v1685 = vmul.f32 %v1577, 1.442695
        %v1686 = vpow.pop %v1685
        %v1687 = vmul.f32 %v1578, 1.442695
        %v1688 = vpow.pop %v1687
        %v1689 = vmul.f32 %v1579, 1.442695
        %v1690 = vpow.pop %v1689
        %v1691 = vmul.f32 %v1580, 1.442695
        %v1692 = vpow.pop %v1691
        %v1693 = vmul.f32 %v1581, 1.442695
        %v1694 = vpow.pop %v1693
        %v1695 = vmul.f32 %v1582, 1.442695
        %v1696 = vpow.pop %v1695
        %v1697 = vmul.f32 %v1583, 1.442695
        %v1698 = vpow.pop %v1697
        %v1699 = vmul.f32 %v1584, 1.442695
        %v1700 = vpow.pop %v1699
        %v1701 = vmul.f32 %v1585, 1.442695
        %v1702 = vpow.pop %v1701
        %v1703 = vmul.f32 %v1586, 1.442695
        %v1704 = vpow.pop %v1703
        %v1705 = vmul.f32 %v1587, 1.442695
        %v1706 = vpow.pop %v1705
        %v1707 = vmul.f32 %v1588, 1.442695
        %v1708 = vpow.pop %v1707
        %v1709 = vmul.f32 %v1589, 1.442695
        %v1710 = vpow.pop %v1709
        %v1711 = vmul.f32 %v1590, 1.442695
        %v1712 = vpow.pop %v1711
        %v1713 = vmul.f32 %v1591, 1.442695
        %v1714 = vpow.pop %v1713
        %v1715 = vmul.f32 %v1592, 1.442695
        %v1716 = vpow.pop %v1715
        %v1717 = vmul.f32 %v1593, 1.442695
        %v1718 = vpow.pop %v1717
        %v1719 = vmul.f32 %v1594, 1.442695
        %v1720 = vpow.pop %v1719
        %v1721 = vmul.f32 %v1595, 1.442695
        %v1722 = vpow.pop %v1721
        %v1723 = vmul.f32 %v1596, 1.442695
        %v1724 = vpow.pop %v1723
        %v1725 = vpack.c.bf16 %v1602, %v1598
        %v1726 = vpack.c.bf16 %v1604, %v1600
        %v1727 = vpack.c.bf16 %v1610, %v1606
        %v1728 = vpack.c.bf16 %v1612, %v1608
        %v1729 = vpack.c.bf16 %v1618, %v1614
        %v1730 = vpack.c.bf16 %v1620, %v1616
        %v1731 = vpack.c.bf16 %v1626, %v1622
        %v1732 = vpack.c.bf16 %v1628, %v1624
        %v1733 = vpack.c.bf16 %v1634, %v1630
        %v1734 = vpack.c.bf16 %v1636, %v1632
        %v1735 = vpack.c.bf16 %v1642, %v1638
        %v1736 = vpack.c.bf16 %v1644, %v1640
        %v1737 = vpack.c.bf16 %v1650, %v1646
        %v1738 = vpack.c.bf16 %v1652, %v1648
        %v1739 = vpack.c.bf16 %v1658, %v1654
        %v1740 = vpack.c.bf16 %v1660, %v1656
        %v1741 = vpack.c.bf16 %v1666, %v1662
        %v1742 = vpack.c.bf16 %v1668, %v1664
        %v1743 = vpack.c.bf16 %v1674, %v1670
        %v1744 = vpack.c.bf16 %v1676, %v1672
        %v1745 = vpack.c.bf16 %v1682, %v1678
        %v1746 = vpack.c.bf16 %v1684, %v1680
        %v1747 = vpack.c.bf16 %v1690, %v1686
        %v1748 = vpack.c.bf16 %v1692, %v1688
        %v1749 = vpack.c.bf16 %v1698, %v1694
        %v1750 = vpack.c.bf16 %v1700, %v1696
        %v1751 = vpack.c.bf16 %v1706, %v1702
        %v1752 = vpack.c.bf16 %v1708, %v1704
        %v1753 = vpack.c.bf16 %v1714, %v1710
        %v1754 = vpack.c.bf16 %v1716, %v1712
        %v1755 = vpack.c.bf16 %v1722, %v1718
        %v1756 = vpack.c.bf16 %v1724, %v1720
        %v1757 = vld [vmem:[%s8] sm:$0xf]
        %v1758 = vld [vmem:[%s8 + $0x4] sm:$0xf]
        %v1759 = vld [vmem:[%s8 + $0x8] sm:$0xf]
        %v1760 = vld [vmem:[%s8 + $0xc] sm:$0xf]
        %v1761 = vld [vmem:[%s8 + $0x10] sm:$0xf]
        %v1762 = vld [vmem:[%s8 + $0x14] sm:$0xf]
        %v1763 = vld [vmem:[%s8 + $0x18] sm:$0xf]
        %v1764 = vld [vmem:[%s8 + $0x1c] sm:$0xf]
        %v1765 = vld [vmem:[%s8 + $0x20] sm:$0x1]
        %v1766 = vld [vmem:[%s9] sm:$0xff]
        %v1767 = vld [vmem:[%s9 + $0x8] sm:$0xff]
        %v1768 = vld [vmem:[%s9 + $0x10] sm:$0xff]
        %v1769 = vld [vmem:[%s9 + $0x18] sm:$0xff]
        %v1770 = vld [vmem:[%s9 + $0x20] sm:$0xff]
        %v1771 = vld [vmem:[%s9 + $0x28] sm:$0xff]
        %v1772 = vld [vmem:[%s9 + $0x30] sm:$0xff]
        %v1773 = vld [vmem:[%s9 + $0x38] sm:$0xff]
        %v1774 = vld [vmem:[%s9 + $0x40] sm:$0x1]
        %1776 = vset.pattern.permute.xlu0 0
        %1777 = vperm.xlu0 %1776, %v1766
        %v1778 = vpop.permute.xlu0 %1777
        %1781 = vset.pattern.permute.xlu0 0
        %1782 = vperm.xlu0 %1781, %v1767
        %v1783 = vpop.permute.xlu0 %1782
        %1786 = vset.pattern.permute.xlu0 0
        %1787 = vperm.xlu0 %1786, %v1768
        %v1788 = vpop.permute.xlu0 %1787
        %1791 = vset.pattern.permute.xlu0 0
        %1792 = vperm.xlu0 %1791, %v1769
        %v1793 = vpop.permute.xlu0 %1792
        %1796 = vset.pattern.permute.xlu0 0
        %1797 = vperm.xlu0 %1796, %v1770
        %v1798 = vpop.permute.xlu0 %1797
        %1801 = vset.pattern.permute.xlu0 0
        %1802 = vperm.xlu0 %1801, %v1771
        %v1803 = vpop.permute.xlu0 %1802
        %1806 = vset.pattern.permute.xlu0 0
        %1807 = vperm.xlu0 %1806, %v1772
        %v1808 = vpop.permute.xlu0 %1807
        %1811 = vset.pattern.permute.xlu0 0
        %1812 = vperm.xlu0 %1811, %v1773
        %v1813 = vpop.permute.xlu0 %1812
        %1816 = vset.pattern.permute.xlu0 0
        %1817 = vperm.xlu0 %1816, %v1774
        %v1818 = vpop.permute.xlu0 %1817
        %v1829 = vunpack.c.l.b16 %v1757
        %v1830 = vunpack.c.l.b16 %v1758
        %v1831 = vunpack.c.l.b16 %v1759
        %v1832 = vunpack.c.l.b16 %v1760
        %v1833 = vunpack.c.l.b16 %v1761
        %v1834 = vunpack.c.l.b16 %v1762
        %v1835 = vunpack.c.l.b16 %v1763
        %v1836 = vunpack.c.l.b16 %v1764
        %v1837 = vunpack.c.l.b16 %v1765
        %v1838 = vpack.c.b16 %v1830, %v1829
        %v1839 = vpack.c.b16 %v1832, %v1831
        %v1840 = vpack.c.b16 %v1834, %v1833
        %v1841 = vpack.c.b16 %v1836, %v1835
        %v1842 = vpack.c.b16 %v1837, %v1837
        %v1844 = vsel %vm649, %v1838, 0
        %v1847 = vsel %vm649, %v1839, 0
        %v1850 = vsel %vm649, %v1840, 0
        %v1853 = vsel %vm649, %v1841, 0
        %v1856 = vsel %vm649, %v1842, 0
        %1858 = vmatprep.subr.bf16.mxu0 %v635
        %1859 = vmatpush1.bf16.msra.mxu0 %v634
        %1860 = vmatprep.subr.bf16.mxu0 %v637
        %1861 = vmatpush1.bf16.msra.mxu0 %v636
        %1862 = vmatprep.subr.bf16.mxu0 %v639
        %1863 = vmatpush1.bf16.msra.mxu0 %v638
        %1864 = vmatprep.subr.bf16.mxu0 %v641
        %1865 = vmatpush1.bf16.msra.mxu0 %v640
        %1866 = vmatprep.subr.bf16.mxu0 0
        %1867 = vmatpush1.bf16.msra.mxu0 0
        %1868 = vmatprep.subr.bf16.mxu0 0
        %1869 = vmatpush1.bf16.msra.mxu0 0
        %1870 = vmatprep.subr.bf16.mxu0 0
        %1871 = vmatpush1.bf16.msra.mxu0 0
        %1872 = vmatprep.subr.bf16.mxu0 0
        %1873 = vmatpush1.bf16.msra.mxu0 0
        %1874 = vmatprep.subr.bf16.mxu0 0
        %1875 = vmatpush1.bf16.msra.mxu0 0
        %1876 = vmatprep.subr.bf16.mxu0 0
        %1877 = vmatpush1.bf16.msra.mxu0 0
        %1878 = vmatprep.subr.bf16.mxu0 0
        %1879 = vmatpush1.bf16.msra.mxu0 0
        %1880 = vmatprep.subr.bf16.mxu0 0
        %1881 = vmatpush1.bf16.msra.mxu0 0
        %1882 = vmatprep.subr.bf16.mxu0 0
        %1883 = vmatpush1.bf16.msra.mxu0 0
        %1884 = vmatprep.subr.bf16.mxu0 0
        %1885 = vmatpush1.bf16.msra.mxu0 0
        %1886 = vmatprep.subr.bf16.mxu0 0
        %1887 = vmatpush1.bf16.msra.mxu0 0
        %1888 = vmatprep.subr.bf16.mxu0 0
        %1889 = vmatpush1.bf16.msra.mxu0 0
        %1890 = vmatprep.mubr.bf16.mxu0 0
        %1891 = vmatmul.mubr.bf16.gmra.mrb[0].mxu0 %v1844
        %v1892 = vpop.f32.mrb[0].mxu0
        %v1893 = vadd.f32 %v1778, %v1892
        %v1894 = vpop.f32.mrb[0].mxu0
        %v1895 = vadd.f32 %v1778, %v1894
        %v1896 = vpop.f32.mrb[0].mxu0
        %v1897 = vadd.f32 %v1783, %v1896
        %v1898 = vpop.f32.mrb[0].mxu0
        %v1899 = vadd.f32 %v1783, %v1898
        %1900 = vmatprep.mubr.bf16.mxu0 0
        %1901 = vmatmul.mubr.bf16.gmra.mrb[0].mxu0 %v1847
        %v1902 = vpop.f32.mrb[0].mxu0
        %v1903 = vadd.f32 %v1788, %v1902
        %v1904 = vpop.f32.mrb[0].mxu0
        %v1905 = vadd.f32 %v1788, %v1904
        %v1906 = vpop.f32.mrb[0].mxu0
        %v1907 = vadd.f32 %v1793, %v1906
        %v1908 = vpop.f32.mrb[0].mxu0
        %v1909 = vadd.f32 %v1793, %v1908
        %1910 = vmatprep.mubr.bf16.mxu0 0
        %1911 = vmatmul.mubr.bf16.gmra.mrb[0].mxu0 %v1850
        %v1912 = vpop.f32.mrb[0].mxu0
        %v1913 = vadd.f32 %v1798, %v1912
        %v1914 = vpop.f32.mrb[0].mxu0
        %v1915 = vadd.f32 %v1798, %v1914
        %v1916 = vpop.f32.mrb[0].mxu0
        %v1917 = vadd.f32 %v1803, %v1916
        %v1918 = vpop.f32.mrb[0].mxu0
        %v1919 = vadd.f32 %v1803, %v1918
        %1920 = vmatprep.mubr.bf16.mxu0 0
        %1921 = vmatmul.mubr.bf16.gmra.mrb[0].mxu0 %v1853
        %v1922 = vpop.f32.mrb[0].mxu0
        %v1923 = vadd.f32 %v1808, %v1922
        %v1924 = vpop.f32.mrb[0].mxu0
        %v1925 = vadd.f32 %v1808, %v1924
        %v1926 = vpop.f32.mrb[0].mxu0
        %v1927 = vadd.f32 %v1813, %v1926
        %v1928 = vpop.f32.mrb[0].mxu0
        %v1929 = vadd.f32 %v1813, %v1928
        %1930 = vmatprep.mubr.bf16.mxu0 0
        %1931 = vmatmul.mubr.bf16.gmra.mrb[0].mxu0 %v1856
        %v1932 = vpop.f32.mrb[0].mxu0
        %v1933 = vadd.f32 %v1818, %v1932
        %v1934 = vpop.f32.mrb[0].mxu0
        %v1935 = vadd.f32 %v1818, %v1934
        %v1936 = vpop.f32.mrb[0].mxu0
        %v1937 = vpop.f32.mrb[0].mxu0
        %1938 = vdwg.mxu0
        %v1939 = vpack.c.bf16 %v1897, %v1893
        %v1940 = vpack.c.bf16 %v1899, %v1895
        %v1941 = vpack.c.bf16 %v1907, %v1903
        %v1942 = vpack.c.bf16 %v1909, %v1905
        %v1943 = vpack.c.bf16 %v1917, %v1913
        %v1944 = vpack.c.bf16 %v1919, %v1915
        %v1945 = vpack.c.bf16 %v1927, %v1923
        %v1946 = vpack.c.bf16 %v1929, %v1925
        %v1947 = vpack.c.bf16 %v1933, %v1933
        %v1948 = vpack.c.bf16 %v1935, %v1935
        %1949 = vmatprep.subr.bf16.mxu0 %v1726
        %1950 = vmatpush1.bf16.msra.mxu0 %v1725
        %1951 = vmatprep.subr.bf16.mxu0 %v1728
        %1952 = vmatpush1.bf16.msra.mxu0 %v1727
        %1953 = vmatprep.subr.bf16.mxu0 %v1730
        %1954 = vmatpush1.bf16.msra.mxu0 %v1729
        %1955 = vmatprep.subr.bf16.mxu0 %v1732
        %1956 = vmatpush1.bf16.msra.mxu0 %v1731
        %1957 = vmatprep.subr.bf16.mxu0 %v1734
        %1958 = vmatpush1.bf16.msra.mxu0 %v1733
        %1959 = vmatprep.subr.bf16.mxu0 %v1736
        %1960 = vmatpush1.bf16.msra.mxu0 %v1735
        %1961 = vmatprep.subr.bf16.mxu0 %v1738
        %1962 = vmatpush1.bf16.msra.mxu0 %v1737
        %1963 = vmatprep.subr.bf16.mxu0 %v1740
        %1964 = vmatpush1.bf16.msra.mxu0 %v1739
        %1965 = vmatprep.subr.bf16.mxu0 %v1742
        %1966 = vmatpush1.bf16.msra.mxu0 %v1741
        %1967 = vmatprep.subr.bf16.mxu0 %v1744
        %1968 = vmatpush1.bf16.msra.mxu0 %v1743
        %1969 = vmatprep.subr.bf16.mxu0 %v1746
        %1970 = vmatpush1.bf16.msra.mxu0 %v1745
        %1971 = vmatprep.subr.bf16.mxu0 %v1748
        %1972 = vmatpush1.bf16.msra.mxu0 %v1747
        %1973 = vmatprep.subr.bf16.mxu0 %v1750
        %1974 = vmatpush1.bf16.msra.mxu0 %v1749
        %1975 = vmatprep.subr.bf16.mxu0 %v1752
        %1976 = vmatpush1.bf16.msra.mxu0 %v1751
        %1977 = vmatprep.subr.bf16.mxu0 %v1754
        %1978 = vmatpush1.bf16.msra.mxu0 %v1753
        %1979 = vmatprep.subr.bf16.mxu0 %v1756
        %1980 = vmatpush1.bf16.msra.mxu0 %v1755
        %1981 = vmatprep.mubr.bf16.mxu0 %v1940
        %1982 = vmatmul.mubr.bf16.gmra.mrb[0].mxu0 %v1939
        %v1983 = vpop.f32.mrb[0].mxu0
        %v1984 = vadd.f32 0.0, %v1983
        %v1985 = vpop.f32.mrb[0].mxu0
        %v1986 = vadd.f32 0.0, %v1985
        %v1987 = vpop.f32.mrb[0].mxu0
        %v1988 = vadd.f32 0.0, %v1987
        %v1989 = vpop.f32.mrb[0].mxu0
        %v1990 = vadd.f32 0.0, %v1989
        %1991 = vmatprep.mubr.bf16.mxu0 %v1942
        %1992 = vmatmul.mubr.bf16.gmra.mrb[0].mxu0 %v1941
        %v1993 = vpop.f32.mrb[0].mxu0
        %v1994 = vadd.f32 0.0, %v1993
        %v1995 = vpop.f32.mrb[0].mxu0
        %v1996 = vadd.f32 0.0, %v1995
        %v1997 = vpop.f32.mrb[0].mxu0
        %v1998 = vadd.f32 0.0, %v1997
        %v1999 = vpop.f32.mrb[0].mxu0
        %v2000 = vadd.f32 0.0, %v1999
        %2001 = vmatprep.mubr.bf16.mxu0 %v1944
        %2002 = vmatmul.mubr.bf16.gmra.mrb[0].mxu0 %v1943
        %v2003 = vpop.f32.mrb[0].mxu0
        %v2004 = vadd.f32 0.0, %v2003
        %v2005 = vpop.f32.mrb[0].mxu0
        %v2006 = vadd.f32 0.0, %v2005
        %v2007 = vpop.f32.mrb[0].mxu0
        %v2008 = vadd.f32 0.0, %v2007
        %v2009 = vpop.f32.mrb[0].mxu0
        %v2010 = vadd.f32 0.0, %v2009
        %2011 = vmatprep.mubr.bf16.mxu0 %v1946
        %2012 = vmatmul.mubr.bf16.gmra.mrb[0].mxu0 %v1945
        %v2013 = vpop.f32.mrb[0].mxu0
        %v2014 = vadd.f32 0.0, %v2013
        %v2015 = vpop.f32.mrb[0].mxu0
        %v2016 = vadd.f32 0.0, %v2015
        %v2017 = vpop.f32.mrb[0].mxu0
        %v2018 = vadd.f32 0.0, %v2017
        %v2019 = vpop.f32.mrb[0].mxu0
        %v2020 = vadd.f32 0.0, %v2019
        %2021 = vmatprep.mubr.bf16.mxu0 %v1948
        %2022 = vmatmul.mubr.bf16.gmra.mrb[0].mxu0 %v1947
        %v2023 = vpop.f32.mrb[0].mxu0
        %v2024 = vadd.f32 0.0, %v2023
        %v2025 = vpop.f32.mrb[0].mxu0
        %v2026 = vadd.f32 0.0, %v2025
        %v2027 = vpop.f32.mrb[0].mxu0
        %v2028 = vpop.f32.mrb[0].mxu0
        %2029 = vdwg.mxu0
        %v2030 = vrcp.pop %v2024
        %v2031 = vrcp.pop %v2026
        %v2032 = vstv %s749
        %v2033 = vmul.f32 %v2032, %v2030
        %v2034 = vmul.f32 %v2032, %v2031
        %v2035 = vlaneseq
        %v2036 = vshrl.u32 %v2035, 7
        %v2037 = vsub.s32 0, %v2036
        %v2038 = vrot.slane %v2033, %v2037
        %v2039 = vlaneseq
        %v2040 = vshrl.u32 %v2039, 7
        %v2041 = vsub.s32 0, %v2040
        %v2042 = vrot.slane %v2034, %v2041
        %v2043 = vmul.f32 %v1984, %v2038
        %v2044 = vmul.f32 %v1986, %v2042
        %v2045 = vmul.f32 %v1988, %v2038
        %v2046 = vmul.f32 %v1990, %v2042
        %v2047 = vmul.f32 %v1994, %v2038
        %v2048 = vmul.f32 %v1996, %v2042
        %v2049 = vmul.f32 %v1998, %v2038
        %v2050 = vmul.f32 %v2000, %v2042
        %v2051 = vmul.f32 %v2004, %v2038
        %v2052 = vmul.f32 %v2006, %v2042
        %v2053 = vmul.f32 %v2008, %v2038
        %v2054 = vmul.f32 %v2010, %v2042
        %v2055 = vmul.f32 %v2014, %v2038
        %v2056 = vmul.f32 %v2016, %v2042
        %v2057 = vmul.f32 %v2018, %v2038
        %v2058 = vmul.f32 %v2020, %v2042
        %v2059 = vadd.f32 %v2043, %v594
        %v2060 = vadd.f32 %v2044, %v595
        %v2061 = vadd.f32 %v2045, %v596
        %v2062 = vadd.f32 %v2046, %v597
        %v2063 = vadd.f32 %v2047, %v598
        %v2064 = vadd.f32 %v2048, %v599
        %v2065 = vadd.f32 %v2049, %v600
        %v2066 = vadd.f32 %v2050, %v601
        %v2067 = vadd.f32 %v2051, %v602
        %v2068 = vadd.f32 %v2052, %v603
        %v2069 = vadd.f32 %v2053, %v604
        %v2070 = vadd.f32 %v2054, %v605
        %v2071 = vadd.f32 %v2055, %v606
        %v2072 = vadd.f32 %v2056, %v607
        %v2073 = vadd.f32 %v2057, %v608
        %v2074 = vadd.f32 %v2058, %v609
        %2075 = vst [vmem:[%s575] sm:$0xff] %v2059
        %2076 = vst [vmem:[%s575 + $0x8] sm:$0xff] %v2060
        %2077 = vst [vmem:[%s575 + $0x10] sm:$0xff] %v2061
        %2078 = vst [vmem:[%s575 + $0x18] sm:$0xff] %v2062
        %2079 = vst [vmem:[%s575 + $0x20] sm:$0xff] %v2063
        %2080 = vst [vmem:[%s575 + $0x28] sm:$0xff] %v2064
        %2081 = vst [vmem:[%s575 + $0x30] sm:$0xff] %v2065
        %2082 = vst [vmem:[%s575 + $0x38] sm:$0xff] %v2066
        %2083 = vst [vmem:[%s575 + $0x40] sm:$0xff] %v2067
        %2084 = vst [vmem:[%s575 + $0x48] sm:$0xff] %v2068
        %2085 = vst [vmem:[%s575 + $0x50] sm:$0xff] %v2069
        %2086 = vst [vmem:[%s575 + $0x58] sm:$0xff] %v2070
        %2087 = vst [vmem:[%s575 + $0x60] sm:$0xff] %v2071
        %2088 = vst [vmem:[%s575 + $0x68] sm:$0xff] %v2072
        %2089 = vst [vmem:[%s575 + $0x70] sm:$0xff] %v2073
        %2090 = vst [vmem:[%s575 + $0x78] sm:$0xff] %v2074
        %v2091 = vld [vmem:[#allocation6] sm:$0xff]
        %v2092 = vld [vmem:[#allocation6 + $0x8] sm:$0xff]
        %v2093 = vld [vmem:[#allocation6 + $0x10] sm:$0xff]
        %v2094 = vld [vmem:[#allocation6 + $0x18] sm:$0xff]
        %v2095 = vld [vmem:[#allocation6 + $0x20] sm:$0xff]
        %v2096 = vld [vmem:[#allocation6 + $0x28] sm:$0xff]
        %v2097 = vld [vmem:[#allocation6 + $0x30] sm:$0xff]
        %v2098 = vld [vmem:[#allocation6 + $0x38] sm:$0xff]
        %v2099 = vld [vmem:[#allocation6 + $0x40] sm:$0xff]
        %v2100 = vld [vmem:[#allocation6 + $0x48] sm:$0xff]
        %v2101 = vld [vmem:[#allocation6 + $0x50] sm:$0xff]
        %v2102 = vld [vmem:[#allocation6 + $0x58] sm:$0xff]
        %v2103 = vld [vmem:[#allocation6 + $0x60] sm:$0xff]
        %v2104 = vld [vmem:[#allocation6 + $0x68] sm:$0xff]
        %v2105 = vld [vmem:[#allocation6 + $0x70] sm:$0xff]
        %v2106 = vld [vmem:[#allocation6 + $0x78] sm:$0xff]
        %v2107 = vld [vmem:[#allocation6 + $0x80] sm:$0xff]
        %v2108 = vld [vmem:[#allocation6 + $0x88] sm:$0xff]
        %v2109 = vld [vmem:[#allocation6 + $0x90] sm:$0xff]
        %v2110 = vld [vmem:[#allocation6 + $0x98] sm:$0xff]
        %v2111 = vld [vmem:[#allocation6 + $0xa0] sm:$0xff]
        %v2112 = vld [vmem:[#allocation6 + $0xa8] sm:$0xff]
        %v2113 = vld [vmem:[#allocation6 + $0xb0] sm:$0xff]
        %v2114 = vld [vmem:[#allocation6 + $0xb8] sm:$0xff]
        %v2115 = vld [vmem:[#allocation6 + $0xc0] sm:$0xff]
        %v2116 = vld [vmem:[#allocation6 + $0xc8] sm:$0xff]
        %v2117 = vld [vmem:[#allocation6 + $0xd0] sm:$0xff]
        %v2118 = vld [vmem:[#allocation6 + $0xd8] sm:$0xff]
        %v2119 = vld [vmem:[#allocation6 + $0xe0] sm:$0xff]
        %v2120 = vld [vmem:[#allocation6 + $0xe8] sm:$0xff]
        %v2121 = vld [vmem:[#allocation6 + $0xf0] sm:$0xff]
        %v2122 = vld [vmem:[#allocation6 + $0xf8] sm:$0xff]
        %v2155 = vunpack.c.l.b16 %v2091
        %v2156 = vunpack.c.h.b16 %v2091
        %v2157 = vunpack.c.l.b16 %v2092
        %v2158 = vunpack.c.h.b16 %v2092
        %v2159 = vunpack.c.l.b16 %v2093
        %v2160 = vunpack.c.h.b16 %v2093
        %v2161 = vunpack.c.l.b16 %v2094
        %v2162 = vunpack.c.h.b16 %v2094
        %v2163 = vunpack.c.l.b16 %v2095
        %v2164 = vunpack.c.h.b16 %v2095
        %v2165 = vunpack.c.l.b16 %v2096
        %v2166 = vunpack.c.h.b16 %v2096
        %v2167 = vunpack.c.l.b16 %v2097
        %v2168 = vunpack.c.h.b16 %v2097
        %v2169 = vunpack.c.l.b16 %v2098
        %v2170 = vunpack.c.h.b16 %v2098
        %v2171 = vunpack.c.l.b16 %v2099
        %v2172 = vunpack.c.h.b16 %v2099
        %v2173 = vunpack.c.l.b16 %v2100
        %v2174 = vunpack.c.h.b16 %v2100
        %v2175 = vunpack.c.l.b16 %v2101
        %v2176 = vunpack.c.h.b16 %v2101
        %v2177 = vunpack.c.l.b16 %v2102
        %v2178 = vunpack.c.h.b16 %v2102
        %v2179 = vunpack.c.l.b16 %v2103
        %v2180 = vunpack.c.h.b16 %v2103
        %v2181 = vunpack.c.l.b16 %v2104
        %v2182 = vunpack.c.h.b16 %v2104
        %v2183 = vunpack.c.l.b16 %v2105
        %v2184 = vunpack.c.h.b16 %v2105
        %v2185 = vunpack.c.l.b16 %v2106
        %v2186 = vunpack.c.h.b16 %v2106
        %v2187 = vunpack.c.l.b16 %v2107
        %v2188 = vunpack.c.h.b16 %v2107
        %v2189 = vunpack.c.l.b16 %v2108
        %v2190 = vunpack.c.h.b16 %v2108
        %v2191 = vunpack.c.l.b16 %v2109
        %v2192 = vunpack.c.h.b16 %v2109
        %v2193 = vunpack.c.l.b16 %v2110
        %v2194 = vunpack.c.h.b16 %v2110
        %v2195 = vunpack.c.l.b16 %v2111
        %v2196 = vunpack.c.h.b16 %v2111
        %v2197 = vunpack.c.l.b16 %v2112
        %v2198 = vunpack.c.h.b16 %v2112
        %v2199 = vunpack.c.l.b16 %v2113
        %v2200 = vunpack.c.h.b16 %v2113
        %v2201 = vunpack.c.l.b16 %v2114
        %v2202 = vunpack.c.h.b16 %v2114
        %v2203 = vunpack.c.l.b16 %v2115
        %v2204 = vunpack.c.h.b16 %v2115
        %v2205 = vunpack.c.l.b16 %v2116
        %v2206 = vunpack.c.h.b16 %v2116
        %v2207 = vunpack.c.l.b16 %v2117
        %v2208 = vunpack.c.h.b16 %v2117
        %v2209 = vunpack.c.l.b16 %v2118
        %v2210 = vunpack.c.h.b16 %v2118
        %v2211 = vunpack.c.l.b16 %v2119
        %v2212 = vunpack.c.h.b16 %v2119
        %v2213 = vunpack.c.l.b16 %v2120
        %v2214 = vunpack.c.h.b16 %v2120
        %v2215 = vunpack.c.l.b16 %v2121
        %v2216 = vunpack.c.h.b16 %v2121
        %v2217 = vunpack.c.l.b16 %v2122
        %v2218 = vunpack.c.h.b16 %v2122
        %v2219 = vpack.c.b16 %v2157, %v2155
        %v2220 = vpack.c.b16 %v2158, %v2156
        %v2221 = vpack.c.b16 %v2161, %v2159
        %v2222 = vpack.c.b16 %v2162, %v2160
        %v2223 = vpack.c.b16 %v2165, %v2163
        %v2224 = vpack.c.b16 %v2166, %v2164
        %v2225 = vpack.c.b16 %v2169, %v2167
        %v2226 = vpack.c.b16 %v2170, %v2168
        %v2227 = vpack.c.b16 %v2173, %v2171
        %v2228 = vpack.c.b16 %v2174, %v2172
        %v2229 = vpack.c.b16 %v2177, %v2175
        %v2230 = vpack.c.b16 %v2178, %v2176
        %v2231 = vpack.c.b16 %v2181, %v2179
        %v2232 = vpack.c.b16 %v2182, %v2180
        %v2233 = vpack.c.b16 %v2185, %v2183
        %v2234 = vpack.c.b16 %v2186, %v2184
        %v2235 = vpack.c.b16 %v2189, %v2187
        %v2236 = vpack.c.b16 %v2190, %v2188
        %v2237 = vpack.c.b16 %v2193, %v2191
        %v2238 = vpack.c.b16 %v2194, %v2192
        %v2239 = vpack.c.b16 %v2197, %v2195
        %v2240 = vpack.c.b16 %v2198, %v2196
        %v2241 = vpack.c.b16 %v2201, %v2199
        %v2242 = vpack.c.b16 %v2202, %v2200
        %v2243 = vpack.c.b16 %v2205, %v2203
        %v2244 = vpack.c.b16 %v2206, %v2204
        %v2245 = vpack.c.b16 %v2209, %v2207
        %v2246 = vpack.c.b16 %v2210, %v2208
        %v2247 = vpack.c.b16 %v2213, %v2211
        %v2248 = vpack.c.b16 %v2214, %v2212
        %v2249 = vpack.c.b16 %v2217, %v2215
        %v2250 = vpack.c.b16 %v2218, %v2216
        %2283 = vmatprep.subr.bf16.mxu0 %v2220
        %2284 = vmatpush1.bf16.msra.mxu0 %v2219
        %2285 = vmatprep.subr.bf16.mxu0 %v2222
        %2286 = vmatpush1.bf16.msra.mxu0 %v2221
        %2287 = vmatprep.subr.bf16.mxu0 %v2224
        %2288 = vmatpush1.bf16.msra.mxu0 %v2223
        %2289 = vmatprep.subr.bf16.mxu0 %v2226
        %2290 = vmatpush1.bf16.msra.mxu0 %v2225
        %2291 = vmatprep.subr.bf16.mxu0 %v2228
        %2292 = vmatpush1.bf16.msra.mxu0 %v2227
        %2293 = vmatprep.subr.bf16.mxu0 %v2230
        %2294 = vmatpush1.bf16.msra.mxu0 %v2229
        %2295 = vmatprep.subr.bf16.mxu0 %v2232
        %2296 = vmatpush1.bf16.msra.mxu0 %v2231
        %2297 = vmatprep.subr.bf16.mxu0 %v2234
        %2298 = vmatpush1.bf16.msra.mxu0 %v2233
        %2299 = vmatprep.subr.bf16.mxu0 %v2236
        %2300 = vmatpush1.bf16.msra.mxu0 %v2235
        %2301 = vmatprep.subr.bf16.mxu0 %v2238
        %2302 = vmatpush1.bf16.msra.mxu0 %v2237
        %2303 = vmatprep.subr.bf16.mxu0 %v2240
        %2304 = vmatpush1.bf16.msra.mxu0 %v2239
        %2305 = vmatprep.subr.bf16.mxu0 %v2242
        %2306 = vmatpush1.bf16.msra.mxu0 %v2241
        %2307 = vmatprep.subr.bf16.mxu0 %v2244
        %2308 = vmatpush1.bf16.msra.mxu0 %v2243
        %2309 = vmatprep.subr.bf16.mxu0 %v2246
        %2310 = vmatpush1.bf16.msra.mxu0 %v2245
        %2311 = vmatprep.subr.bf16.mxu0 %v2248
        %2312 = vmatpush1.bf16.msra.mxu0 %v2247
        %2313 = vmatprep.subr.bf16.mxu0 %v2250
        %2314 = vmatpush1.bf16.msra.mxu0 %v2249
        %2315 = vmatprep.mubr.bf16.mxu0 %v746
        %2316 = vmatmul.mubr.bf16.gmra.mrb[0].mxu0 %v745
        %v2317 = vpop.f32.mrb[0].mxu0
        %v2318 = vadd.f32 0.0, %v2317
        %v2319 = vpop.f32.mrb[0].mxu0
        %v2320 = vadd.f32 0.0, %v2319
        %v2321 = vpop.f32.mrb[0].mxu0
        %v2322 = vpop.f32.mrb[0].mxu0
        %2323 = vdwg.mxu0
        %v2324 = vpack.c.bf16 %v2318, %v2318
        %v2325 = vpack.c.bf16 %v2320, %v2320
        %v2326 = vld [vmem:[%s13] sm:$0xff]
        %v2327 = vld [vmem:[%s13 + $0x8] sm:$0xff]
        %v2328 = vld [vmem:[%s13 + $0x10] sm:$0xff]
        %v2329 = vld [vmem:[%s13 + $0x18] sm:$0xff]
        %v2330 = vld [vmem:[%s13 + $0x20] sm:$0xff]
        %v2331 = vld [vmem:[%s13 + $0x28] sm:$0xff]
        %v2332 = vld [vmem:[%s13 + $0x30] sm:$0xff]
        %v2333 = vld [vmem:[%s13 + $0x38] sm:$0xff]
        %v2334 = vld [vmem:[%s13 + $0x40] sm:$0xff]
        %v2335 = vld [vmem:[%s13 + $0x48] sm:$0xff]
        %v2336 = vld [vmem:[%s13 + $0x50] sm:$0xff]
        %v2337 = vld [vmem:[%s13 + $0x58] sm:$0xff]
        %v2338 = vld [vmem:[%s13 + $0x60] sm:$0xff]
        %v2339 = vld [vmem:[%s13 + $0x68] sm:$0xff]
        %v2340 = vld [vmem:[%s13 + $0x70] sm:$0xff]
        %v2341 = vld [vmem:[%s13 + $0x78] sm:$0xff]
        %v2342 = vld [vmem:[%s13 + $0x80] sm:$0xff]
        %v2343 = vld [vmem:[%s13 + $0x88] sm:$0xff]
        %v2344 = vld [vmem:[%s13 + $0x90] sm:$0xff]
        %v2345 = vld [vmem:[%s13 + $0x98] sm:$0xff]
        %v2346 = vld [vmem:[%s13 + $0xa0] sm:$0xff]
        %v2347 = vld [vmem:[%s13 + $0xa8] sm:$0xff]
        %v2348 = vld [vmem:[%s13 + $0xb0] sm:$0xff]
        %v2349 = vld [vmem:[%s13 + $0xb8] sm:$0xff]
        %v2350 = vld [vmem:[%s13 + $0xc0] sm:$0xff]
        %v2351 = vld [vmem:[%s13 + $0xc8] sm:$0xff]
        %v2352 = vld [vmem:[%s13 + $0xd0] sm:$0xff]
        %v2353 = vld [vmem:[%s13 + $0xd8] sm:$0xff]
        %v2354 = vld [vmem:[%s13 + $0xe0] sm:$0xff]
        %v2355 = vld [vmem:[%s13 + $0xe8] sm:$0xff]
        %v2356 = vld [vmem:[%s13 + $0xf0] sm:$0xff]
        %v2357 = vld [vmem:[%s13 + $0xf8] sm:$0xff]
        %2359 = vset.pattern.permute.xlu0 0
        %2360 = vperm.xlu0 %2359, %v2326
        %v2361 = vpop.permute.xlu0 %2360
        %2364 = vset.pattern.permute.xlu0 0
        %2365 = vperm.xlu0 %2364, %v2327
        %v2366 = vpop.permute.xlu0 %2365
        %2369 = vset.pattern.permute.xlu0 0
        %2370 = vperm.xlu0 %2369, %v2328
        %v2371 = vpop.permute.xlu0 %2370
        %2374 = vset.pattern.permute.xlu0 0
        %2375 = vperm.xlu0 %2374, %v2329
        %v2376 = vpop.permute.xlu0 %2375
        %2379 = vset.pattern.permute.xlu0 0
        %2380 = vperm.xlu0 %2379, %v2330
        %v2381 = vpop.permute.xlu0 %2380
        %2384 = vset.pattern.permute.xlu0 0
        %2385 = vperm.xlu0 %2384, %v2331
        %v2386 = vpop.permute.xlu0 %2385
        %2389 = vset.pattern.permute.xlu0 0
        %2390 = vperm.xlu0 %2389, %v2332
        %v2391 = vpop.permute.xlu0 %2390
        %2394 = vset.pattern.permute.xlu0 0
        %2395 = vperm.xlu0 %2394, %v2333
        %v2396 = vpop.permute.xlu0 %2395
        %2399 = vset.pattern.permute.xlu0 0
        %2400 = vperm.xlu0 %2399, %v2334
        %v2401 = vpop.permute.xlu0 %2400
        %2404 = vset.pattern.permute.xlu0 0
        %2405 = vperm.xlu0 %2404, %v2335
        %v2406 = vpop.permute.xlu0 %2405
        %2409 = vset.pattern.permute.xlu0 0
        %2410 = vperm.xlu0 %2409, %v2336
        %v2411 = vpop.permute.xlu0 %2410
        %2414 = vset.pattern.permute.xlu0 0
        %2415 = vperm.xlu0 %2414, %v2337
        %v2416 = vpop.permute.xlu0 %2415
        %2419 = vset.pattern.permute.xlu0 0
        %2420 = vperm.xlu0 %2419, %v2338
        %v2421 = vpop.permute.xlu0 %2420
        %2424 = vset.pattern.permute.xlu0 0
        %2425 = vperm.xlu0 %2424, %v2339
        %v2426 = vpop.permute.xlu0 %2425
        %2429 = vset.pattern.permute.xlu0 0
        %2430 = vperm.xlu0 %2429, %v2340
        %v2431 = vpop.permute.xlu0 %2430
        %2434 = vset.pattern.permute.xlu0 0
        %2435 = vperm.xlu0 %2434, %v2341
        %v2436 = vpop.permute.xlu0 %2435
        %2439 = vset.pattern.permute.xlu0 0
        %2440 = vperm.xlu0 %2439, %v2342
        %v2441 = vpop.permute.xlu0 %2440
        %2444 = vset.pattern.permute.xlu0 0
        %2445 = vperm.xlu0 %2444, %v2343
        %v2446 = vpop.permute.xlu0 %2445
        %2449 = vset.pattern.permute.xlu0 0
        %2450 = vperm.xlu0 %2449, %v2344
        %v2451 = vpop.permute.xlu0 %2450
        %2454 = vset.pattern.permute.xlu0 0
        %2455 = vperm.xlu0 %2454, %v2345
        %v2456 = vpop.permute.xlu0 %2455
        %2459 = vset.pattern.permute.xlu0 0
        %2460 = vperm.xlu0 %2459, %v2346
        %v2461 = vpop.permute.xlu0 %2460
        %2464 = vset.pattern.permute.xlu0 0
        %2465 = vperm.xlu0 %2464, %v2347
        %v2466 = vpop.permute.xlu0 %2465
        %2469 = vset.pattern.permute.xlu0 0
        %2470 = vperm.xlu0 %2469, %v2348
        %v2471 = vpop.permute.xlu0 %2470
        %2474 = vset.pattern.permute.xlu0 0
        %2475 = vperm.xlu0 %2474, %v2349
        %v2476 = vpop.permute.xlu0 %2475
        %2479 = vset.pattern.permute.xlu0 0
        %2480 = vperm.xlu0 %2479, %v2350
        %v2481 = vpop.permute.xlu0 %2480
        %2484 = vset.pattern.permute.xlu0 0
        %2485 = vperm.xlu0 %2484, %v2351
        %v2486 = vpop.permute.xlu0 %2485
        %2489 = vset.pattern.permute.xlu0 0
        %2490 = vperm.xlu0 %2489, %v2352
        %v2491 = vpop.permute.xlu0 %2490
        %2494 = vset.pattern.permute.xlu0 0
        %2495 = vperm.xlu0 %2494, %v2353
        %v2496 = vpop.permute.xlu0 %2495
        %2499 = vset.pattern.permute.xlu0 0
        %2500 = vperm.xlu0 %2499, %v2354
        %v2501 = vpop.permute.xlu0 %2500
        %2504 = vset.pattern.permute.xlu0 0
        %2505 = vperm.xlu0 %2504, %v2355
        %v2506 = vpop.permute.xlu0 %2505
        %2509 = vset.pattern.permute.xlu0 0
        %2510 = vperm.xlu0 %2509, %v2356
        %v2511 = vpop.permute.xlu0 %2510
        %2514 = vset.pattern.permute.xlu0 0
        %2515 = vperm.xlu0 %2514, %v2357
        %v2516 = vpop.permute.xlu0 %2515
        %2518 = vxpose.xlu0.c.b16.start [1/8] %v2324, 128
        %2519 = vxpose.xlu0.c.b16.cont [2/8] 0, 128
        %2520 = vxpose.xlu0.c.b16.cont [3/8] 0, 128
        %2521 = vxpose.xlu0.c.b16.cont [4/8] 0, 128
        %2522 = vxpose.xlu0.c.b16.cont [5/8] 0, 128
        %2523 = vxpose.xlu0.c.b16.cont [6/8] 0, 128
        %2524 = vxpose.xlu0.c.b16.cont [7/8] 0, 128
        %2525 = vxpose.xlu0.c.b16.end [8/8] 0, 128
        %v2526 = vpop.trf.xlu0
        %v2527 = vpop.trf.xlu0
        %v2528 = vpop.trf.xlu0
        %v2529 = vpop.trf.xlu0
        %v2530 = vpop.trf.xlu0
        %v2531 = vpop.trf.xlu0
        %v2532 = vpop.trf.xlu0
        %v2533 = vpop.trf.xlu0
        %2534 = vxpose.xlu0.c.b16.start [1/8] %v2325, 128
        %2535 = vxpose.xlu0.c.b16.cont [2/8] 0, 128
        %2536 = vxpose.xlu0.c.b16.cont [3/8] 0, 128
        %2537 = vxpose.xlu0.c.b16.cont [4/8] 0, 128
        %2538 = vxpose.xlu0.c.b16.cont [5/8] 0, 128
        %2539 = vxpose.xlu0.c.b16.cont [6/8] 0, 128
        %2540 = vxpose.xlu0.c.b16.cont [7/8] 0, 128
        %2541 = vxpose.xlu0.c.b16.end [8/8] 0, 128
        %v2542 = vpop.trf.xlu0
        %v2543 = vpop.trf.xlu0
        %v2544 = vpop.trf.xlu0
        %v2545 = vpop.trf.xlu0
        %v2546 = vpop.trf.xlu0
        %v2547 = vpop.trf.xlu0
        %v2548 = vpop.trf.xlu0
        %v2549 = vpop.trf.xlu0
        %v2551 = vsel %vm1210, %v2526, 0
        %v2554 = vsel %vm1210, %v2527, 0
        %v2557 = vsel %vm1210, %v2528, 0
        %v2560 = vsel %vm1210, %v2529, 0
        %v2563 = vsel %vm1210, %v2530, 0
        %v2566 = vsel %vm1210, %v2531, 0
        %v2569 = vsel %vm1210, %v2532, 0
        %v2572 = vsel %vm1210, %v2533, 0
        %v2575 = vsel %vm1210, %v2542, 0
        %v2578 = vsel %vm1210, %v2543, 0
        %v2581 = vsel %vm1210, %v2544, 0
        %v2584 = vsel %vm1210, %v2545, 0
        %v2587 = vsel %vm1210, %v2546, 0
        %v2590 = vsel %vm1210, %v2547, 0
        %v2593 = vsel %vm1210, %v2548, 0
        %v2596 = vsel %vm1210, %v2549, 0
        %v2599 = vsel %vm1259, %v747, 0
        %v2602 = vsel %vm1259, %v748, 0
        %2604 = vmatprep.subr.bf16.mxu0 %v2602
        %2605 = vmatpush1.bf16.msra.mxu0 %v2599
        %2606 = vmatprep.subr.bf16.mxu0 0
        %2607 = vmatpush1.bf16.msra.mxu0 0
        %2608 = vmatprep.subr.bf16.mxu0 0
        %2609 = vmatpush1.bf16.msra.mxu0 0
        %2610 = vmatprep.subr.bf16.mxu0 0
        %2611 = vmatpush1.bf16.msra.mxu0 0
        %2612 = vmatprep.subr.bf16.mxu0 0
        %2613 = vmatpush1.bf16.msra.mxu0 0
        %2614 = vmatprep.subr.bf16.mxu0 0
        %2615 = vmatpush1.bf16.msra.mxu0 0
        %2616 = vmatprep.subr.bf16.mxu0 0
        %2617 = vmatpush1.bf16.msra.mxu0 0
        %2618 = vmatprep.subr.bf16.mxu0 0
        %2619 = vmatpush1.bf16.msra.mxu0 0
        %2620 = vmatprep.subr.bf16.mxu0 0
        %2621 = vmatpush1.bf16.msra.mxu0 0
        %2622 = vmatprep.subr.bf16.mxu0 0
        %2623 = vmatpush1.bf16.msra.mxu0 0
        %2624 = vmatprep.subr.bf16.mxu0 0
        %2625 = vmatpush1.bf16.msra.mxu0 0
        %2626 = vmatprep.subr.bf16.mxu0 0
        %2627 = vmatpush1.bf16.msra.mxu0 0
        %2628 = vmatprep.subr.bf16.mxu0 0
        %2629 = vmatpush1.bf16.msra.mxu0 0
        %2630 = vmatprep.subr.bf16.mxu0 0
        %2631 = vmatpush1.bf16.msra.mxu0 0
        %2632 = vmatprep.subr.bf16.mxu0 0
        %2633 = vmatpush1.bf16.msra.mxu0 0
        %2634 = vmatprep.subr.bf16.mxu0 0
        %2635 = vmatpush1.bf16.msra.mxu0 0
        %2636 = vmatprep.mubr.bf16.mxu0 0
        %2637 = vmatmul.mubr.bf16.gmra.mrb[0].mxu0 %v2551
        %v2638 = vpop.f32.mrb[0].mxu0
        %v2639 = vadd.f32 %v2361, %v2638
        %v2640 = vpop.f32.mrb[0].mxu0
        %v2641 = vadd.f32 %v2361, %v2640
        %v2642 = vpop.f32.mrb[0].mxu0
        %v2643 = vadd.f32 %v2366, %v2642
        %v2644 = vpop.f32.mrb[0].mxu0
        %v2645 = vadd.f32 %v2366, %v2644
        %2646 = vmatprep.mubr.bf16.mxu0 0
        %2647 = vmatmul.mubr.bf16.gmra.mrb[0].mxu0 %v2554
        %v2648 = vpop.f32.mrb[0].mxu0
        %v2649 = vadd.f32 %v2371, %v2648
        %v2650 = vpop.f32.mrb[0].mxu0
        %v2651 = vadd.f32 %v2371, %v2650
        %v2652 = vpop.f32.mrb[0].mxu0
        %v2653 = vadd.f32 %v2376, %v2652
        %v2654 = vpop.f32.mrb[0].mxu0
        %v2655 = vadd.f32 %v2376, %v2654
        %2656 = vmatprep.mubr.bf16.mxu0 0
        %2657 = vmatmul.mubr.bf16.gmra.mrb[0].mxu0 %v2557
        %v2658 = vpop.f32.mrb[0].mxu0
        %v2659 = vadd.f32 %v2381, %v2658
        %v2660 = vpop.f32.mrb[0].mxu0
        %v2661 = vadd.f32 %v2381, %v2660
        %v2662 = vpop.f32.mrb[0].mxu0
        %v2663 = vadd.f32 %v2386, %v2662
        %v2664 = vpop.f32.mrb[0].mxu0
        %v2665 = vadd.f32 %v2386, %v2664
        %2666 = vmatprep.mubr.bf16.mxu0 0
        %2667 = vmatmul.mubr.bf16.gmra.mrb[0].mxu0 %v2560
        %v2668 = vpop.f32.mrb[0].mxu0
        %v2669 = vadd.f32 %v2391, %v2668
        %v2670 = vpop.f32.mrb[0].mxu0
        %v2671 = vadd.f32 %v2391, %v2670
        %v2672 = vpop.f32.mrb[0].mxu0
        %v2673 = vadd.f32 %v2396, %v2672
        %v2674 = vpop.f32.mrb[0].mxu0
        %v2675 = vadd.f32 %v2396, %v2674
        %2676 = vmatprep.mubr.bf16.mxu0 0
        %2677 = vmatmul.mubr.bf16.gmra.mrb[0].mxu0 %v2563
        %v2678 = vpop.f32.mrb[0].mxu0
        %v2679 = vadd.f32 %v2401, %v2678
        %v2680 = vpop.f32.mrb[0].mxu0
        %v2681 = vadd.f32 %v2401, %v2680
        %v2682 = vpop.f32.mrb[0].mxu0
        %v2683 = vadd.f32 %v2406, %v2682
        %v2684 = vpop.f32.mrb[0].mxu0
        %v2685 = vadd.f32 %v2406, %v2684
        %2686 = vmatprep.mubr.bf16.mxu0 0
        %2687 = vmatmul.mubr.bf16.gmra.mrb[0].mxu0 %v2566
        %v2688 = vpop.f32.mrb[0].mxu0
        %v2689 = vadd.f32 %v2411, %v2688
        %v2690 = vpop.f32.mrb[0].mxu0
        %v2691 = vadd.f32 %v2411, %v2690
        %v2692 = vpop.f32.mrb[0].mxu0
        %v2693 = vadd.f32 %v2416, %v2692
        %v2694 = vpop.f32.mrb[0].mxu0
        %v2695 = vadd.f32 %v2416, %v2694
        %2696 = vmatprep.mubr.bf16.mxu0 0
        %2697 = vmatmul.mubr.bf16.gmra.mrb[0].mxu0 %v2569
        %v2698 = vpop.f32.mrb[0].mxu0
        %v2699 = vadd.f32 %v2421, %v2698
        %v2700 = vpop.f32.mrb[0].mxu0
        %v2701 = vadd.f32 %v2421, %v2700
        %v2702 = vpop.f32.mrb[0].mxu0
        %v2703 = vadd.f32 %v2426, %v2702
        %v2704 = vpop.f32.mrb[0].mxu0
        %v2705 = vadd.f32 %v2426, %v2704
        %2706 = vmatprep.mubr.bf16.mxu0 0
        %2707 = vmatmul.mubr.bf16.gmra.mrb[0].mxu0 %v2572
        %v2708 = vpop.f32.mrb[0].mxu0
        %v2709 = vadd.f32 %v2431, %v2708
        %v2710 = vpop.f32.mrb[0].mxu0
        %v2711 = vadd.f32 %v2431, %v2710
        %v2712 = vpop.f32.mrb[0].mxu0
        %v2713 = vadd.f32 %v2436, %v2712
        %v2714 = vpop.f32.mrb[0].mxu0
        %v2715 = vadd.f32 %v2436, %v2714
        %2716 = vmatprep.mubr.bf16.mxu0 0
        %2717 = vmatmul.mubr.bf16.gmra.mrb[0].mxu0 %v2575
        %v2718 = vpop.f32.mrb[0].mxu0
        %v2719 = vadd.f32 %v2441, %v2718
        %v2720 = vpop.f32.mrb[0].mxu0
        %v2721 = vadd.f32 %v2441, %v2720
        %v2722 = vpop.f32.mrb[0].mxu0
        %v2723 = vadd.f32 %v2446, %v2722
        %v2724 = vpop.f32.mrb[0].mxu0
        %v2725 = vadd.f32 %v2446, %v2724
        %2726 = vmatprep.mubr.bf16.mxu0 0
        %2727 = vmatmul.mubr.bf16.gmra.mrb[0].mxu0 %v2578
        %v2728 = vpop.f32.mrb[0].mxu0
        %v2729 = vadd.f32 %v2451, %v2728
        %v2730 = vpop.f32.mrb[0].mxu0
        %v2731 = vadd.f32 %v2451, %v2730
        %v2732 = vpop.f32.mrb[0].mxu0
        %v2733 = vadd.f32 %v2456, %v2732
        %v2734 = vpop.f32.mrb[0].mxu0
        %v2735 = vadd.f32 %v2456, %v2734
        %2736 = vmatprep.mubr.bf16.mxu0 0
        %2737 = vmatmul.mubr.bf16.gmra.mrb[0].mxu0 %v2581
        %v2738 = vpop.f32.mrb[0].mxu0
        %v2739 = vadd.f32 %v2461, %v2738
        %v2740 = vpop.f32.mrb[0].mxu0
        %v2741 = vadd.f32 %v2461, %v2740
        %v2742 = vpop.f32.mrb[0].mxu0
        %v2743 = vadd.f32 %v2466, %v2742
        %v2744 = vpop.f32.mrb[0].mxu0
        %v2745 = vadd.f32 %v2466, %v2744
        %2746 = vmatprep.mubr.bf16.mxu0 0
        %2747 = vmatmul.mubr.bf16.gmra.mrb[0].mxu0 %v2584
        %v2748 = vpop.f32.mrb[0].mxu0
        %v2749 = vadd.f32 %v2471, %v2748
        %v2750 = vpop.f32.mrb[0].mxu0
        %v2751 = vadd.f32 %v2471, %v2750
        %v2752 = vpop.f32.mrb[0].mxu0
        %v2753 = vadd.f32 %v2476, %v2752
        %v2754 = vpop.f32.mrb[0].mxu0
        %v2755 = vadd.f32 %v2476, %v2754
        %2756 = vmatprep.mubr.bf16.mxu0 0
        %2757 = vmatmul.mubr.bf16.gmra.mrb[0].mxu0 %v2587
        %v2758 = vpop.f32.mrb[0].mxu0
        %v2759 = vadd.f32 %v2481, %v2758
        %v2760 = vpop.f32.mrb[0].mxu0
        %v2761 = vadd.f32 %v2481, %v2760
        %v2762 = vpop.f32.mrb[0].mxu0
        %v2763 = vadd.f32 %v2486, %v2762
        %v2764 = vpop.f32.mrb[0].mxu0
        %v2765 = vadd.f32 %v2486, %v2764
        %2766 = vmatprep.mubr.bf16.mxu0 0
        %2767 = vmatmul.mubr.bf16.gmra.mrb[0].mxu0 %v2590
        %v2768 = vpop.f32.mrb[0].mxu0
        %v2769 = vadd.f32 %v2491, %v2768
        %v2770 = vpop.f32.mrb[0].mxu0
        %v2771 = vadd.f32 %v2491, %v2770
        %v2772 = vpop.f32.mrb[0].mxu0
        %v2773 = vadd.f32 %v2496, %v2772
        %v2774 = vpop.f32.mrb[0].mxu0
        %v2775 = vadd.f32 %v2496, %v2774
        %2776 = vmatprep.mubr.bf16.mxu0 0
        %2777 = vmatmul.mubr.bf16.gmra.mrb[0].mxu0 %v2593
        %v2778 = vpop.f32.mrb[0].mxu0
        %v2779 = vadd.f32 %v2501, %v2778
        %v2780 = vpop.f32.mrb[0].mxu0
        %v2781 = vadd.f32 %v2501, %v2780
        %v2782 = vpop.f32.mrb[0].mxu0
        %v2783 = vadd.f32 %v2506, %v2782
        %v2784 = vpop.f32.mrb[0].mxu0
        %v2785 = vadd.f32 %v2506, %v2784
        %2786 = vmatprep.mubr.bf16.mxu0 0
        %2787 = vmatmul.mubr.bf16.gmra.mrb[0].mxu0 %v2596
        %v2788 = vpop.f32.mrb[0].mxu0
        %v2789 = vadd.f32 %v2511, %v2788
        %v2790 = vpop.f32.mrb[0].mxu0
        %v2791 = vadd.f32 %v2511, %v2790
        %v2792 = vpop.f32.mrb[0].mxu0
        %v2793 = vadd.f32 %v2516, %v2792
        %v2794 = vpop.f32.mrb[0].mxu0
        %v2795 = vadd.f32 %v2516, %v2794
        %2796 = vdwg.mxu0
        %v2797 = vmax.f32 %v2639, %v2649
        %v2798 = vmax.f32 %v2643, %v2653
        %v2799 = vmax.f32 %v2797, %v2659
        %v2800 = vmax.f32 %v2798, %v2663
        %v2801 = vmax.f32 %v2799, %v2669
        %v2802 = vmax.f32 %v2800, %v2673
        %v2803 = vmax.f32 %v2801, %v2679
        %v2804 = vmax.f32 %v2802, %v2683
        %v2805 = vmax.f32 %v2803, %v2689
        %v2806 = vmax.f32 %v2804, %v2693
        %v2807 = vmax.f32 %v2805, %v2699
        %v2808 = vmax.f32 %v2806, %v2703
        %v2809 = vmax.f32 %v2807, %v2709
        %v2810 = vmax.f32 %v2808, %v2713
        %v2811 = vmax.f32 %v2809, %v2719
        %v2812 = vmax.f32 %v2810, %v2723
        %v2813 = vmax.f32 %v2811, %v2729
        %v2814 = vmax.f32 %v2812, %v2733
        %v2815 = vmax.f32 %v2813, %v2739
        %v2816 = vmax.f32 %v2814, %v2743
        %v2817 = vmax.f32 %v2815, %v2749
        %v2818 = vmax.f32 %v2816, %v2753
        %v2819 = vmax.f32 %v2817, %v2759
        %v2820 = vmax.f32 %v2818, %v2763
        %v2821 = vmax.f32 %v2819, %v2769
        %v2822 = vmax.f32 %v2820, %v2773
        %v2823 = vmax.f32 %v2821, %v2779
        %v2824 = vmax.f32 %v2822, %v2783
        %v2825 = vmax.f32 %v2823, %v2789
        %v2826 = vmax.f32 %v2824, %v2793
        %v2827 = vmax.f32 %v2825, %v2826
        %v2828 = vrot.slane %v2827, 4
        %v2829 = vmax.f32 %v2827, %v2828
        %v2830 = vrot.slane %v2829, 2
        %v2831 = vmax.f32 %v2829, %v2830
        %v2832 = vrot.slane %v2831, 1
        %v2833 = vmax.f32 %v2831, %v2832
        %v2834 = vmax.f32 %v2641, %v2651
        %v2835 = vmax.f32 %v2645, %v2655
        %v2836 = vmax.f32 %v2834, %v2661
        %v2837 = vmax.f32 %v2835, %v2665
        %v2838 = vmax.f32 %v2836, %v2671
        %v2839 = vmax.f32 %v2837, %v2675
        %v2840 = vmax.f32 %v2838, %v2681
        %v2841 = vmax.f32 %v2839, %v2685
        %v2842 = vmax.f32 %v2840, %v2691
        %v2843 = vmax.f32 %v2841, %v2695
        %v2844 = vmax.f32 %v2842, %v2701
        %v2845 = vmax.f32 %v2843, %v2705
        %v2846 = vmax.f32 %v2844, %v2711
        %v2847 = vmax.f32 %v2845, %v2715
        %v2848 = vmax.f32 %v2846, %v2721
        %v2849 = vmax.f32 %v2847, %v2725
        %v2850 = vmax.f32 %v2848, %v2731
        %v2851 = vmax.f32 %v2849, %v2735
        %v2852 = vmax.f32 %v2850, %v2741
        %v2853 = vmax.f32 %v2851, %v2745
        %v2854 = vmax.f32 %v2852, %v2751
        %v2855 = vmax.f32 %v2853, %v2755
        %v2856 = vmax.f32 %v2854, %v2761
        %v2857 = vmax.f32 %v2855, %v2765
        %v2858 = vmax.f32 %v2856, %v2771
        %v2859 = vmax.f32 %v2857, %v2775
        %v2860 = vmax.f32 %v2858, %v2781
        %v2861 = vmax.f32 %v2859, %v2785
        %v2862 = vmax.f32 %v2860, %v2791
        %v2863 = vmax.f32 %v2861, %v2795
        %v2864 = vmax.f32 %v2862, %v2863
        %v2865 = vrot.slane %v2864, 4
        %v2866 = vmax.f32 %v2864, %v2865
        %v2867 = vrot.slane %v2866, 2
        %v2868 = vmax.f32 %v2866, %v2867
        %v2869 = vrot.slane %v2868, 1
        %v2870 = vmax.f32 %v2868, %v2869
        %v2871 = vsub.f32 %v2639, %v2833
        %v2872 = vsub.f32 %v2641, %v2870
        %v2873 = vsub.f32 %v2643, %v2833
        %v2874 = vsub.f32 %v2645, %v2870
        %v2875 = vsub.f32 %v2649, %v2833
        %v2876 = vsub.f32 %v2651, %v2870
        %v2877 = vsub.f32 %v2653, %v2833
        %v2878 = vsub.f32 %v2655, %v2870
        %v2879 = vsub.f32 %v2659, %v2833
        %v2880 = vsub.f32 %v2661, %v2870
        %v2881 = vsub.f32 %v2663, %v2833
        %v2882 = vsub.f32 %v2665, %v2870
        %v2883 = vsub.f32 %v2669, %v2833
        %v2884 = vsub.f32 %v2671, %v2870
        %v2885 = vsub.f32 %v2673, %v2833
        %v2886 = vsub.f32 %v2675, %v2870
        %v2887 = vsub.f32 %v2679, %v2833
        %v2888 = vsub.f32 %v2681, %v2870
        %v2889 = vsub.f32 %v2683, %v2833
        %v2890 = vsub.f32 %v2685, %v2870
        %v2891 = vsub.f32 %v2689, %v2833
        %v2892 = vsub.f32 %v2691, %v2870
        %v2893 = vsub.f32 %v2693, %v2833
        %v2894 = vsub.f32 %v2695, %v2870
        %v2895 = vsub.f32 %v2699, %v2833
        %v2896 = vsub.f32 %v2701, %v2870
        %v2897 = vsub.f32 %v2703, %v2833
        %v2898 = vsub.f32 %v2705, %v2870
        %v2899 = vsub.f32 %v2709, %v2833
        %v2900 = vsub.f32 %v2711, %v2870
        %v2901 = vsub.f32 %v2713, %v2833
        %v2902 = vsub.f32 %v2715, %v2870
        %v2903 = vsub.f32 %v2719, %v2833
        %v2904 = vsub.f32 %v2721, %v2870
        %v2905 = vsub.f32 %v2723, %v2833
        %v2906 = vsub.f32 %v2725, %v2870
        %v2907 = vsub.f32 %v2729, %v2833
        %v2908 = vsub.f32 %v2731, %v2870
        %v2909 = vsub.f32 %v2733, %v2833
        %v2910 = vsub.f32 %v2735, %v2870
        %v2911 = vsub.f32 %v2739, %v2833
        %v2912 = vsub.f32 %v2741, %v2870
        %v2913 = vsub.f32 %v2743, %v2833
        %v2914 = vsub.f32 %v2745, %v2870
        %v2915 = vsub.f32 %v2749, %v2833
        %v2916 = vsub.f32 %v2751, %v2870
        %v2917 = vsub.f32 %v2753, %v2833
        %v2918 = vsub.f32 %v2755, %v2870
        %v2919 = vsub.f32 %v2759, %v2833
        %v2920 = vsub.f32 %v2761, %v2870
        %v2921 = vsub.f32 %v2763, %v2833
        %v2922 = vsub.f32 %v2765, %v2870
        %v2923 = vsub.f32 %v2769, %v2833
        %v2924 = vsub.f32 %v2771, %v2870
        %v2925 = vsub.f32 %v2773, %v2833
        %v2926 = vsub.f32 %v2775, %v2870
        %v2927 = vsub.f32 %v2779, %v2833
        %v2928 = vsub.f32 %v2781, %v2870
        %v2929 = vsub.f32 %v2783, %v2833
        %v2930 = vsub.f32 %v2785, %v2870
        %v2931 = vsub.f32 %v2789, %v2833
        %v2932 = vsub.f32 %v2791, %v2870
        %v2933 = vsub.f32 %v2793, %v2833
        %v2934 = vsub.f32 %v2795, %v2870
        %v2935 = vmul.f32 %v2871, 1.442695
        %v2936 = vpow.pop %v2935
        %v2937 = vmul.f32 %v2872, 1.442695
        %v2938 = vpow.pop %v2937
        %v2939 = vmul.f32 %v2873, 1.442695
        %v2940 = vpow.pop %v2939
        %v2941 = vmul.f32 %v2874, 1.442695
        %v2942 = vpow.pop %v2941
        %v2943 = vmul.f32 %v2875, 1.442695
        %v2944 = vpow.pop %v2943
        %v2945 = vmul.f32 %v2876, 1.442695
        %v2946 = vpow.pop %v2945
        %v2947 = vmul.f32 %v2877, 1.442695
        %v2948 = vpow.pop %v2947
        %v2949 = vmul.f32 %v2878, 1.442695
        %v2950 = vpow.pop %v2949
        %v2951 = vmul.f32 %v2879, 1.442695
        %v2952 = vpow.pop %v2951
        %v2953 = vmul.f32 %v2880, 1.442695
        %v2954 = vpow.pop %v2953
        %v2955 = vmul.f32 %v2881, 1.442695
        %v2956 = vpow.pop %v2955
        %v2957 = vmul.f32 %v2882, 1.442695
        %v2958 = vpow.pop %v2957
        %v2959 = vmul.f32 %v2883, 1.442695
        %v2960 = vpow.pop %v2959
        %v2961 = vmul.f32 %v2884, 1.442695
        %v2962 = vpow.pop %v2961
        %v2963 = vmul.f32 %v2885, 1.442695
        %v2964 = vpow.pop %v2963
        %v2965 = vmul.f32 %v2886, 1.442695
        %v2966 = vpow.pop %v2965
        %v2967 = vmul.f32 %v2887, 1.442695
        %v2968 = vpow.pop %v2967
        %v2969 = vmul.f32 %v2888, 1.442695
        %v2970 = vpow.pop %v2969
        %v2971 = vmul.f32 %v2889, 1.442695
        %v2972 = vpow.pop %v2971
        %v2973 = vmul.f32 %v2890, 1.442695
        %v2974 = vpow.pop %v2973
        %v2975 = vmul.f32 %v2891, 1.442695
        %v2976 = vpow.pop %v2975
        %v2977 = vmul.f32 %v2892, 1.442695
        %v2978 = vpow.pop %v2977
        %v2979 = vmul.f32 %v2893, 1.442695
        %v2980 = vpow.pop %v2979
        %v2981 = vmul.f32 %v2894, 1.442695
        %v2982 = vpow.pop %v2981
        %v2983 = vmul.f32 %v2895, 1.442695
        %v2984 = vpow.pop %v2983
        %v2985 = vmul.f32 %v2896, 1.442695
        %v2986 = vpow.pop %v2985
        %v2987 = vmul.f32 %v2897, 1.442695
        %v2988 = vpow.pop %v2987
        %v2989 = vmul.f32 %v2898, 1.442695
        %v2990 = vpow.pop %v2989
        %v2991 = vmul.f32 %v2899, 1.442695
        %v2992 = vpow.pop %v2991
        %v2993 = vmul.f32 %v2900, 1.442695
        %v2994 = vpow.pop %v2993
        %v2995 = vmul.f32 %v2901, 1.442695
        %v2996 = vpow.pop %v2995
        %v2997 = vmul.f32 %v2902, 1.442695
        %v2998 = vpow.pop %v2997
        %v2999 = vmul.f32 %v2903, 1.442695
        %v3000 = vpow.pop %v2999
        %v3001 = vmul.f32 %v2904, 1.442695
        %v3002 = vpow.pop %v3001
        %v3003 = vmul.f32 %v2905, 1.442695
        %v3004 = vpow.pop %v3003
        %v3005 = vmul.f32 %v2906, 1.442695
        %v3006 = vpow.pop %v3005
        %v3007 = vmul.f32 %v2907, 1.442695
        %v3008 = vpow.pop %v3007
        %v3009 = vmul.f32 %v2908, 1.442695
        %v3010 = vpow.pop %v3009
        %v3011 = vmul.f32 %v2909, 1.442695
        %v3012 = vpow.pop %v3011
        %v3013 = vmul.f32 %v2910, 1.442695
        %v3014 = vpow.pop %v3013
        %v3015 = vmul.f32 %v2911, 1.442695
        %v3016 = vpow.pop %v3015
        %v3017 = vmul.f32 %v2912, 1.442695
        %v3018 = vpow.pop %v3017
        %v3019 = vmul.f32 %v2913, 1.442695
        %v3020 = vpow.pop %v3019
        %v3021 = vmul.f32 %v2914, 1.442695
        %v3022 = vpow.pop %v3021
        %v3023 = vmul.f32 %v2915, 1.442695
        %v3024 = vpow.pop %v3023
        %v3025 = vmul.f32 %v2916, 1.442695
        %v3026 = vpow.pop %v3025
        %v3027 = vmul.f32 %v2917, 1.442695
        %v3028 = vpow.pop %v3027
        %v3029 = vmul.f32 %v2918, 1.442695
        %v3030 = vpow.pop %v3029
        %v3031 = vmul.f32 %v2919, 1.442695
        %v3032 = vpow.pop %v3031
        %v3033 = vmul.f32 %v2920, 1.442695
        %v3034 = vpow.pop %v3033
        %v3035 = vmul.f32 %v2921, 1.442695
        %v3036 = vpow.pop %v3035
        %v3037 = vmul.f32 %v2922, 1.442695
        %v3038 = vpow.pop %v3037
        %v3039 = vmul.f32 %v2923, 1.442695
        %v3040 = vpow.pop %v3039
        %v3041 = vmul.f32 %v2924, 1.442695
        %v3042 = vpow.pop %v3041
        %v3043 = vmul.f32 %v2925, 1.442695
        %v3044 = vpow.pop %v3043
        %v3045 = vmul.f32 %v2926, 1.442695
        %v3046 = vpow.pop %v3045
        %v3047 = vmul.f32 %v2927, 1.442695
        %v3048 = vpow.pop %v3047
        %v3049 = vmul.f32 %v2928, 1.442695
        %v3050 = vpow.pop %v3049
        %v3051 = vmul.f32 %v2929, 1.442695
        %v3052 = vpow.pop %v3051
        %v3053 = vmul.f32 %v2930, 1.442695
        %v3054 = vpow.pop %v3053
        %v3055 = vmul.f32 %v2931, 1.442695
        %v3056 = vpow.pop %v3055
        %v3057 = vmul.f32 %v2932, 1.442695
        %v3058 = vpow.pop %v3057
        %v3059 = vmul.f32 %v2933, 1.442695
        %v3060 = vpow.pop %v3059
        %v3061 = vmul.f32 %v2934, 1.442695
        %v3062 = vpow.pop %v3061
        %v3063 = vpack.c.bf16 %v2940, %v2936
        %v3064 = vpack.c.bf16 %v2942, %v2938
        %v3065 = vpack.c.bf16 %v2948, %v2944
        %v3066 = vpack.c.bf16 %v2950, %v2946
        %v3067 = vpack.c.bf16 %v2956, %v2952
        %v3068 = vpack.c.bf16 %v2958, %v2954
        %v3069 = vpack.c.bf16 %v2964, %v2960
        %v3070 = vpack.c.bf16 %v2966, %v2962
        %v3071 = vpack.c.bf16 %v2972, %v2968
        %v3072 = vpack.c.bf16 %v2974, %v2970
        %v3073 = vpack.c.bf16 %v2980, %v2976
        %v3074 = vpack.c.bf16 %v2982, %v2978
        %v3075 = vpack.c.bf16 %v2988, %v2984
        %v3076 = vpack.c.bf16 %v2990, %v2986
        %v3077 = vpack.c.bf16 %v2996, %v2992
        %v3078 = vpack.c.bf16 %v2998, %v2994
        %v3079 = vpack.c.bf16 %v3004, %v3000
        %v3080 = vpack.c.bf16 %v3006, %v3002
        %v3081 = vpack.c.bf16 %v3012, %v3008
        %v3082 = vpack.c.bf16 %v3014, %v3010
        %v3083 = vpack.c.bf16 %v3020, %v3016
        %v3084 = vpack.c.bf16 %v3022, %v3018
        %v3085 = vpack.c.bf16 %v3028, %v3024
        %v3086 = vpack.c.bf16 %v3030, %v3026
        %v3087 = vpack.c.bf16 %v3036, %v3032
        %v3088 = vpack.c.bf16 %v3038, %v3034
        %v3089 = vpack.c.bf16 %v3044, %v3040
        %v3090 = vpack.c.bf16 %v3046, %v3042
        %v3091 = vpack.c.bf16 %v3052, %v3048
        %v3092 = vpack.c.bf16 %v3054, %v3050
        %v3093 = vpack.c.bf16 %v3060, %v3056
        %v3094 = vpack.c.bf16 %v3062, %v3058
        %v3095 = vld [vmem:[%s6] sm:$0xf]
        %v3096 = vld [vmem:[%s6 + $0x4] sm:$0xf]
        %v3097 = vld [vmem:[%s6 + $0x8] sm:$0xf]
        %v3098 = vld [vmem:[%s6 + $0xc] sm:$0xf]
        %v3099 = vld [vmem:[%s6 + $0x10] sm:$0xf]
        %v3100 = vld [vmem:[%s6 + $0x14] sm:$0xf]
        %v3101 = vld [vmem:[%s6 + $0x18] sm:$0xf]
        %v3102 = vld [vmem:[%s6 + $0x1c] sm:$0xf]
        %v3103 = vld [vmem:[%s6 + $0x20] sm:$0x1]
        %v3104 = vld [vmem:[%s7] sm:$0xff]
        %v3105 = vld [vmem:[%s7 + $0x8] sm:$0xff]
        %v3106 = vld [vmem:[%s7 + $0x10] sm:$0xff]
        %v3107 = vld [vmem:[%s7 + $0x18] sm:$0xff]
        %v3108 = vld [vmem:[%s7 + $0x20] sm:$0xff]
        %v3109 = vld [vmem:[%s7 + $0x28] sm:$0xff]
        %v3110 = vld [vmem:[%s7 + $0x30] sm:$0xff]
        %v3111 = vld [vmem:[%s7 + $0x38] sm:$0xff]
        %v3112 = vld [vmem:[%s7 + $0x40] sm:$0x1]
        %3114 = vset.pattern.permute.xlu0 0
        %3115 = vperm.xlu0 %3114, %v3104
        %v3116 = vpop.permute.xlu0 %3115
        %3119 = vset.pattern.permute.xlu0 0
        %3120 = vperm.xlu0 %3119, %v3105
        %v3121 = vpop.permute.xlu0 %3120
        %3124 = vset.pattern.permute.xlu0 0
        %3125 = vperm.xlu0 %3124, %v3106
        %v3126 = vpop.permute.xlu0 %3125
        %3129 = vset.pattern.permute.xlu0 0
        %3130 = vperm.xlu0 %3129, %v3107
        %v3131 = vpop.permute.xlu0 %3130
        %3134 = vset.pattern.permute.xlu0 0
        %3135 = vperm.xlu0 %3134, %v3108
        %v3136 = vpop.permute.xlu0 %3135
        %3139 = vset.pattern.permute.xlu0 0
        %3140 = vperm.xlu0 %3139, %v3109
        %v3141 = vpop.permute.xlu0 %3140
        %3144 = vset.pattern.permute.xlu0 0
        %3145 = vperm.xlu0 %3144, %v3110
        %v3146 = vpop.permute.xlu0 %3145
        %3149 = vset.pattern.permute.xlu0 0
        %3150 = vperm.xlu0 %3149, %v3111
        %v3151 = vpop.permute.xlu0 %3150
        %3154 = vset.pattern.permute.xlu0 0
        %3155 = vperm.xlu0 %3154, %v3112
        %v3156 = vpop.permute.xlu0 %3155
        %v3167 = vunpack.c.l.b16 %v3095
        %v3168 = vunpack.c.l.b16 %v3096
        %v3169 = vunpack.c.l.b16 %v3097
        %v3170 = vunpack.c.l.b16 %v3098
        %v3171 = vunpack.c.l.b16 %v3099
        %v3172 = vunpack.c.l.b16 %v3100
        %v3173 = vunpack.c.l.b16 %v3101
        %v3174 = vunpack.c.l.b16 %v3102
        %v3175 = vunpack.c.l.b16 %v3103
        %v3176 = vpack.c.b16 %v3168, %v3167
        %v3177 = vpack.c.b16 %v3170, %v3169
        %v3178 = vpack.c.b16 %v3172, %v3171
        %v3179 = vpack.c.b16 %v3174, %v3173
        %v3180 = vpack.c.b16 %v3175, %v3175
        %v3182 = vsel %vm649, %v3176, 0
        %v3185 = vsel %vm649, %v3177, 0
        %v3188 = vsel %vm649, %v3178, 0
        %v3191 = vsel %vm649, %v3179, 0
        %v3194 = vsel %vm649, %v3180, 0
        %3196 = vmatprep.subr.bf16.mxu0 %v627
        %3197 = vmatpush1.bf16.msra.mxu0 %v626
        %3198 = vmatprep.subr.bf16.mxu0 %v629
        %3199 = vmatpush1.bf16.msra.mxu0 %v628
        %3200 = vmatprep.subr.bf16.mxu0 %v631
        %3201 = vmatpush1.bf16.msra.mxu0 %v630
        %3202 = vmatprep.subr.bf16.mxu0 %v633
        %3203 = vmatpush1.bf16.msra.mxu0 %v632
        %3204 = vmatprep.subr.bf16.mxu0 0
        %3205 = vmatpush1.bf16.msra.mxu0 0
        %3206 = vmatprep.subr.bf16.mxu0 0
        %3207 = vmatpush1.bf16.msra.mxu0 0
        %3208 = vmatprep.subr.bf16.mxu0 0
        %3209 = vmatpush1.bf16.msra.mxu0 0
        %3210 = vmatprep.subr.bf16.mxu0 0
        %3211 = vmatpush1.bf16.msra.mxu0 0
        %3212 = vmatprep.subr.bf16.mxu0 0
        %3213 = vmatpush1.bf16.msra.mxu0 0
        %3214 = vmatprep.subr.bf16.mxu0 0
        %3215 = vmatpush1.bf16.msra.mxu0 0
        %3216 = vmatprep.subr.bf16.mxu0 0
        %3217 = vmatpush1.bf16.msra.mxu0 0
        %3218 = vmatprep.subr.bf16.mxu0 0
        %3219 = vmatpush1.bf16.msra.mxu0 0
        %3220 = vmatprep.subr.bf16.mxu0 0
        %3221 = vmatpush1.bf16.msra.mxu0 0
        %3222 = vmatprep.subr.bf16.mxu0 0
        %3223 = vmatpush1.bf16.msra.mxu0 0
        %3224 = vmatprep.subr.bf16.mxu0 0
        %3225 = vmatpush1.bf16.msra.mxu0 0
        %3226 = vmatprep.subr.bf16.mxu0 0
        %3227 = vmatpush1.bf16.msra.mxu0 0
        %3228 = vmatprep.mubr.bf16.mxu0 0
        %3229 = vmatmul.mubr.bf16.gmra.mrb[0].mxu0 %v3182
        %v3230 = vpop.f32.mrb[0].mxu0
        %v3231 = vadd.f32 %v3116, %v3230
        %v3232 = vpop.f32.mrb[0].mxu0
        %v3233 = vadd.f32 %v3116, %v3232
        %v3234 = vpop.f32.mrb[0].mxu0
        %v3235 = vadd.f32 %v3121, %v3234
        %v3236 = vpop.f32.mrb[0].mxu0
        %v3237 = vadd.f32 %v3121, %v3236
        %3238 = vmatprep.mubr.bf16.mxu0 0
        %3239 = vmatmul.mubr.bf16.gmra.mrb[0].mxu0 %v3185
        %v3240 = vpop.f32.mrb[0].mxu0
        %v3241 = vadd.f32 %v3126, %v3240
        %v3242 = vpop.f32.mrb[0].mxu0
        %v3243 = vadd.f32 %v3126, %v3242
        %v3244 = vpop.f32.mrb[0].mxu0
        %v3245 = vadd.f32 %v3131, %v3244
        %v3246 = vpop.f32.mrb[0].mxu0
        %v3247 = vadd.f32 %v3131, %v3246
        %3248 = vmatprep.mubr.bf16.mxu0 0
        %3249 = vmatmul.mubr.bf16.gmra.mrb[0].mxu0 %v3188
        %v3250 = vpop.f32.mrb[0].mxu0
        %v3251 = vadd.f32 %v3136, %v3250
        %v3252 = vpop.f32.mrb[0].mxu0
        %v3253 = vadd.f32 %v3136, %v3252
        %v3254 = vpop.f32.mrb[0].mxu0
        %v3255 = vadd.f32 %v3141, %v3254
        %v3256 = vpop.f32.mrb[0].mxu0
        %v3257 = vadd.f32 %v3141, %v3256
        %3258 = vmatprep.mubr.bf16.mxu0 0
        %3259 = vmatmul.mubr.bf16.gmra.mrb[0].mxu0 %v3191
        %v3260 = vpop.f32.mrb[0].mxu0
        %v3261 = vadd.f32 %v3146, %v3260
        %v3262 = vpop.f32.mrb[0].mxu0
        %v3263 = vadd.f32 %v3146, %v3262
        %v3264 = vpop.f32.mrb[0].mxu0
        %v3265 = vadd.f32 %v3151, %v3264
        %v3266 = vpop.f32.mrb[0].mxu0
        %v3267 = vadd.f32 %v3151, %v3266
        %3268 = vmatprep.mubr.bf16.mxu0 0
        %3269 = vmatmul.mubr.bf16.gmra.mrb[0].mxu0 %v3194
        %v3270 = vpop.f32.mrb[0].mxu0
        %v3271 = vadd.f32 %v3156, %v3270
        %v3272 = vpop.f32.mrb[0].mxu0
        %v3273 = vadd.f32 %v3156, %v3272
        %v3274 = vpop.f32.mrb[0].mxu0
        %v3275 = vpop.f32.mrb[0].mxu0
        %3276 = vdwg.mxu0
        %v3277 = vpack.c.bf16 %v3235, %v3231
        %v3278 = vpack.c.bf16 %v3237, %v3233
        %v3279 = vpack.c.bf16 %v3245, %v3241
        %v3280 = vpack.c.bf16 %v3247, %v3243
        %v3281 = vpack.c.bf16 %v3255, %v3251
        %v3282 = vpack.c.bf16 %v3257, %v3253
        %v3283 = vpack.c.bf16 %v3265, %v3261
        %v3284 = vpack.c.bf16 %v3267, %v3263
        %v3285 = vpack.c.bf16 %v3271, %v3271
        %v3286 = vpack.c.bf16 %v3273, %v3273
        %3287 = vmatprep.subr.bf16.mxu0 %v3064
        %3288 = vmatpush1.bf16.msra.mxu0 %v3063
        %3289 = vmatprep.subr.bf16.mxu0 %v3066
        %3290 = vmatpush1.bf16.msra.mxu0 %v3065
        %3291 = vmatprep.subr.bf16.mxu0 %v3068
        %3292 = vmatpush1.bf16.msra.mxu0 %v3067
        %3293 = vmatprep.subr.bf16.mxu0 %v3070
        %3294 = vmatpush1.bf16.msra.mxu0 %v3069
        %3295 = vmatprep.subr.bf16.mxu0 %v3072
        %3296 = vmatpush1.bf16.msra.mxu0 %v3071
        %3297 = vmatprep.subr.bf16.mxu0 %v3074
        %3298 = vmatpush1.bf16.msra.mxu0 %v3073
        %3299 = vmatprep.subr.bf16.mxu0 %v3076
        %3300 = vmatpush1.bf16.msra.mxu0 %v3075
        %3301 = vmatprep.subr.bf16.mxu0 %v3078
        %3302 = vmatpush1.bf16.msra.mxu0 %v3077
        %3303 = vmatprep.subr.bf16.mxu0 %v3080
        %3304 = vmatpush1.bf16.msra.mxu0 %v3079
        %3305 = vmatprep.subr.bf16.mxu0 %v3082
        %3306 = vmatpush1.bf16.msra.mxu0 %v3081
        %3307 = vmatprep.subr.bf16.mxu0 %v3084
        %3308 = vmatpush1.bf16.msra.mxu0 %v3083
        %3309 = vmatprep.subr.bf16.mxu0 %v3086
        %3310 = vmatpush1.bf16.msra.mxu0 %v3085
        %3311 = vmatprep.subr.bf16.mxu0 %v3088
        %3312 = vmatpush1.bf16.msra.mxu0 %v3087
        %3313 = vmatprep.subr.bf16.mxu0 %v3090
        %3314 = vmatpush1.bf16.msra.mxu0 %v3089
        %3315 = vmatprep.subr.bf16.mxu0 %v3092
        %3316 = vmatpush1.bf16.msra.mxu0 %v3091
        %3317 = vmatprep.subr.bf16.mxu0 %v3094
        %3318 = vmatpush1.bf16.msra.mxu0 %v3093
        %3319 = vmatprep.mubr.bf16.mxu0 %v3278
        %3320 = vmatmul.mubr.bf16.gmra.mrb[0].mxu0 %v3277
        %v3321 = vpop.f32.mrb[0].mxu0
        %v3322 = vadd.f32 0.0, %v3321
        %v3323 = vpop.f32.mrb[0].mxu0
        %v3324 = vadd.f32 0.0, %v3323
        %v3325 = vpop.f32.mrb[0].mxu0
        %v3326 = vadd.f32 0.0, %v3325
        %v3327 = vpop.f32.mrb[0].mxu0
        %v3328 = vadd.f32 0.0, %v3327
        %3329 = vmatprep.mubr.bf16.mxu0 %v3280
        %3330 = vmatmul.mubr.bf16.gmra.mrb[0].mxu0 %v3279
        %v3331 = vpop.f32.mrb[0].mxu0
        %v3332 = vadd.f32 0.0, %v3331
        %v3333 = vpop.f32.mrb[0].mxu0
        %v3334 = vadd.f32 0.0, %v3333
        %v3335 = vpop.f32.mrb[0].mxu0
        %v3336 = vadd.f32 0.0, %v3335
        %v3337 = vpop.f32.mrb[0].mxu0
        %v3338 = vadd.f32 0.0, %v3337
        %3339 = vmatprep.mubr.bf16.mxu0 %v3282
        %3340 = vmatmul.mubr.bf16.gmra.mrb[0].mxu0 %v3281
        %v3341 = vpop.f32.mrb[0].mxu0
        %v3342 = vadd.f32 0.0, %v3341
        %v3343 = vpop.f32.mrb[0].mxu0
        %v3344 = vadd.f32 0.0, %v3343
        %v3345 = vpop.f32.mrb[0].mxu0
        %v3346 = vadd.f32 0.0, %v3345
        %v3347 = vpop.f32.mrb[0].mxu0
        %v3348 = vadd.f32 0.0, %v3347
        %3349 = vmatprep.mubr.bf16.mxu0 %v3284
        %3350 = vmatmul.mubr.bf16.gmra.mrb[0].mxu0 %v3283
        %v3351 = vpop.f32.mrb[0].mxu0
        %v3352 = vadd.f32 0.0, %v3351
        %v3353 = vpop.f32.mrb[0].mxu0
        %v3354 = vadd.f32 0.0, %v3353
        %v3355 = vpop.f32.mrb[0].mxu0
        %v3356 = vadd.f32 0.0, %v3355
        %v3357 = vpop.f32.mrb[0].mxu0
        %v3358 = vadd.f32 0.0, %v3357
        %3359 = vmatprep.mubr.bf16.mxu0 %v3286
        %3360 = vmatmul.mubr.bf16.gmra.mrb[0].mxu0 %v3285
        %v3361 = vpop.f32.mrb[0].mxu0
        %v3362 = vadd.f32 0.0, %v3361
        %v3363 = vpop.f32.mrb[0].mxu0
        %v3364 = vadd.f32 0.0, %v3363
        %v3365 = vpop.f32.mrb[0].mxu0
        %v3366 = vpop.f32.mrb[0].mxu0
        %3367 = vdwg.mxu0
        %v3368 = vrcp.pop %v3362
        %v3369 = vrcp.pop %v3364
        %v3370 = vstv %s750
        %v3371 = vmul.f32 %v3370, %v3368
        %v3372 = vmul.f32 %v3370, %v3369
        %v3373 = vlaneseq
        %v3374 = vshrl.u32 %v3373, 7
        %v3375 = vsub.s32 0, %v3374
        %v3376 = vrot.slane %v3371, %v3375
        %v3377 = vlaneseq
        %v3378 = vshrl.u32 %v3377, 7
        %v3379 = vsub.s32 0, %v3378
        %v3380 = vrot.slane %v3372, %v3379
        %v3381 = vmul.f32 %v3322, %v3376
        %v3382 = vmul.f32 %v3324, %v3380
        %v3383 = vmul.f32 %v3326, %v3376
        %v3384 = vmul.f32 %v3328, %v3380
        %v3385 = vmul.f32 %v3332, %v3376
        %v3386 = vmul.f32 %v3334, %v3380
        %v3387 = vmul.f32 %v3336, %v3376
        %v3388 = vmul.f32 %v3338, %v3380
        %v3389 = vmul.f32 %v3342, %v3376
        %v3390 = vmul.f32 %v3344, %v3380
        %v3391 = vmul.f32 %v3346, %v3376
        %v3392 = vmul.f32 %v3348, %v3380
        %v3393 = vmul.f32 %v3352, %v3376
        %v3394 = vmul.f32 %v3354, %v3380
        %v3395 = vmul.f32 %v3356, %v3376
        %v3396 = vmul.f32 %v3358, %v3380
        %v3397 = vadd.f32 %v3381, %v610
        %v3398 = vadd.f32 %v3382, %v611
        %v3399 = vadd.f32 %v3383, %v612
        %v3400 = vadd.f32 %v3384, %v613
        %v3401 = vadd.f32 %v3385, %v614
        %v3402 = vadd.f32 %v3386, %v615
        %v3403 = vadd.f32 %v3387, %v616
        %v3404 = vadd.f32 %v3388, %v617
        %v3405 = vadd.f32 %v3389, %v618
        %v3406 = vadd.f32 %v3390, %v619
        %v3407 = vadd.f32 %v3391, %v620
        %v3408 = vadd.f32 %v3392, %v621
        %v3409 = vadd.f32 %v3393, %v622
        %v3410 = vadd.f32 %v3394, %v623
        %v3411 = vadd.f32 %v3395, %v624
        %v3412 = vadd.f32 %v3396, %v625
        %3413 = vst [vmem:[%s582] sm:$0xff] %v3397
        %3414 = vst [vmem:[%s582 + $0x8] sm:$0xff] %v3398
        %3415 = vst [vmem:[%s582 + $0x10] sm:$0xff] %v3399
        %3416 = vst [vmem:[%s582 + $0x18] sm:$0xff] %v3400
        %3417 = vst [vmem:[%s582 + $0x20] sm:$0xff] %v3401
        %3418 = vst [vmem:[%s582 + $0x28] sm:$0xff] %v3402
        %3419 = vst [vmem:[%s582 + $0x30] sm:$0xff] %v3403
        %3420 = vst [vmem:[%s582 + $0x38] sm:$0xff] %v3404
        %3421 = vst [vmem:[%s582 + $0x40] sm:$0xff] %v3405
        %3422 = vst [vmem:[%s582 + $0x48] sm:$0xff] %v3406
        %3423 = vst [vmem:[%s582 + $0x50] sm:$0xff] %v3407
        %3424 = vst [vmem:[%s582 + $0x58] sm:$0xff] %v3408
        %3425 = vst [vmem:[%s582 + $0x60] sm:$0xff] %v3409
        %3426 = vst [vmem:[%s582 + $0x68] sm:$0xff] %v3410
        %3427 = vst [vmem:[%s582 + $0x70] sm:$0xff] %v3411
        %3428 = vst [vmem:[%s582 + $0x78] sm:$0xff] %v3412
        %s3429 = sand.u32 %s370, 1
        %s3430 = scalar_lea.sflag [#allocation4], %s3429
        %s3431 = sand.u32 %s370, 1
        %s3432 = smul.addr %s3431, 128
        %s3433 = scalar_lea.vmem [#allocation9], %s3432
        %s3434 = sand.u32 %s396, 1
        %s3435 = scalar_lea.sflag [#allocation11], %s3434
        %s3436 = sand.u32 %s396, 1
        %s3437 = smul.addr %s3436, 128
        %s3438 = scalar_lea.vmem [#allocation10], %s3437
        // Predicated region
        $region93: #{tpu_custom_call.1} parent=79 // pred_check
          %p3439 = pneg %p380
        $region94: #{tpu_custom_call.1} parent=79 // pred_check_branch
          %3441 = sbr.rel (%p3439) target = $region96
        $region95: #{tpu_custom_call.1} parent=79 // pred_region
          %s3443 = ssub.s32 2048, 2048
          %3444 = vsyncadd %s3430, %s3443
          %s3445 = smul.addr %s37, 16
          %s3446 = smul.addr %s3445, 128
          %s3447 = scalar_lea.hbm %s15, %s3446
          %s3448 = sshll.u32 %s3433, 4
          %s3449 = int_to_ptr.vmem [resolvable:$true] %s3448
          %3454 = dma.vmem_to_hbm [thread:$0]  %s3449, 2048, %s3447, %s3430, 256, 256, 16
        $region96: #{tpu_custom_call.1} parent=79 // pred_fallthru
          _
        // Predicated region
        $region97: #{tpu_custom_call.1} parent=79 // pred_check
          %p3455 = pneg %p406
        $region98: #{tpu_custom_call.1} parent=79 // pred_check_branch
          %3457 = sbr.rel (%p3455) target = $region100
        $region99: #{tpu_custom_call.1} parent=79 // pred_region
          %s3459 = ssub.s32 2048, 2048
          %3460 = vsyncadd %s3435, %s3459
          %s3461 = smul.addr %s37, 16
          %s3462 = smul.addr %s3461, 128
          %s3463 = scalar_lea.hbm %s16, %s3462
          %s3464 = sshll.u32 %s3438, 4
          %s3465 = int_to_ptr.vmem [resolvable:$true] %s3464
          %3470 = dma.vmem_to_hbm [thread:$0]  %s3465, 2048, %s3463, %s3435, 256, 256, 16
        $region100: #{tpu_custom_call.1} parent=79 // pred_fallthru
          _
      $region80: #{tpu_custom_call.1} parent=5 // pred_fallthru
        _
      %p3471 = scmp.le.s32.totalorder 2, %s32
      // Predicated region
      $region101: #{tpu_custom_call.1} parent=5 // pred_check
        %p3472 = pneg %p3471
      $region102: #{tpu_custom_call.1} parent=5 // pred_check_branch
        %3474 = sbr.rel (%p3472) target = $region104
      $region103: #{tpu_custom_call.1} parent=5 // pred_region
        %s3475 = ssub.s32 %s32, 2
        // Predicated region
        $region105: #{tpu_custom_call.1} parent=103 // pred_check
          %p3476 = pneg %p386
        $region106: #{tpu_custom_call.1} parent=103 // pred_check_branch
          %3478 = sbr.rel (%p3476) target = $region108
        $region107: #{tpu_custom_call.1} parent=103 // pred_region
          %s3479 = sand.u32 %s371, 1
          %s3480 = scalar_lea.sflag [#allocation4], %s3479
          %s3481 = sand.u32 %s371, 1
          %s3482 = smul.addr %s3481, 128
          %s3483 = scalar_lea.vmem [#allocation9], %s3482
          %3484 = dma.done %s3480, 2048
        $region108: #{tpu_custom_call.1} parent=103 // pred_fallthru
          _
        // Predicated region
        $region109: #{tpu_custom_call.1} parent=103 // pred_check
          %p3485 = pneg %p412
        $region110: #{tpu_custom_call.1} parent=103 // pred_check_branch
          %3487 = sbr.rel (%p3485) target = $region112
        $region111: #{tpu_custom_call.1} parent=103 // pred_region
          %s3488 = sand.u32 %s397, 1
          %s3489 = scalar_lea.sflag [#allocation11], %s3488
          %s3490 = sand.u32 %s397, 1
          %s3491 = smul.addr %s3490, 128
          %s3492 = scalar_lea.vmem [#allocation10], %s3491
          %3493 = dma.done %s3489, 2048
        $region112: #{tpu_custom_call.1} parent=103 // pred_fallthru
          _
      $region104: #{tpu_custom_call.1} parent=5 // pred_fallthru
        _
    $region6: #{tpu_custom_call.1} parent=1 // loop_footer
      %s36 = sadd.s32 1, %s32
    $region7: #{tpu_custom_call.1} parent=1 // loop_footer_branch
      %31 = sbr.rel target = $region3
    $region8: #{tpu_custom_call.1} parent=1 // loop_exit
      _
    %3494 = vsyncpa [#allocation3], 1
    %s3495 = scalar_lea.sflag [#allocation3], 1
    %3496 = vsyncpa %s3495, 1
    %3497 = vsyncpa [#allocation7], 1
    %3498 = vsyncpa [#allocation4], 1
    %s3499 = scalar_lea.sflag [#allocation4], 1
    %3500 = vsyncpa %s3499, 1
    %3501 = vsyncpa [#allocation11], 1
    %s3502 = scalar_lea.sflag [#allocation11], 1
    %3503 = vsyncpa %s3502, 1
    %3504 = vsyncpa [#allocation5], 1
    %s3505 = scalar_lea.sflag [#allocation5], 1
    %3506 = vsyncpa %s3505, 1

</llo_original>
